<compile_context>
chip_gen: v7x
topology: tpu7x:2x2x1
jax: 0.10.0
libtpu: 0.0.40
codegen_flags: <defaults>
</compile_context>

<pallas_src>
import math
import functools

import jax
import jax.numpy as jnp
from jax.experimental import pallas as pl
from jax.experimental.pallas import tpu as pltpu

_LN_EPS = 1e-5                      # torch LayerNorm default eps


# ------------------------------ kernel helpers ------------------------------

def _layernorm(x, g, b):
    """f32 LayerNorm over the last axis. g/b are (1, C)."""
    mean = jnp.mean(x, axis=-1, keepdims=True)
    var = jnp.mean((x - mean) ** 2, axis=-1, keepdims=True)
    return (x - mean) * jax.lax.rsqrt(var + _LN_EPS) * g + b


# ------------------------------ fused kernel --------------------------------

def _encoder_kernel(*refs, num_conv, heads, kernel_size, has_morph):
    it = iter(refs)
    x_ref = next(it)
    pe_ref = next(it)
    m_ref = next(it)
    conv_refs = [tuple(next(it) for _ in range(5)) for _ in range(num_conv)]
    a_g, a_b, wqkv_ref, wo_ref = (next(it) for _ in range(4))
    f_g, f_b, w1_ref, b1_ref, w2_ref, b2_ref = (next(it) for _ in range(6))
    wm_ref = bm_ref = None
    if has_morph:
        wm_ref = next(it)
        bm_ref = next(it)
    o_ref = next(it)
    scr_ref = next(it)                                    # (Bt, L, C) f32 VMEM

    Bt, L, C = x_ref.shape
    rows = Bt * L
    bf = jnp.bfloat16

    # ---- positional encodings, then work on a (Bt*L, C) row slab -----------
    x = (x_ref[...] + pe_ref[...]).reshape(rows, C)       # f32 residual stream

    # ---- depthwise-separable conv sublayers ---------------------------------
    pad = kernel_size // 2
    row = jax.lax.broadcasted_iota(jnp.int32, (rows, 1), 0)
    row_in_seq = row % L                                   # position within a sequence
    for (g_ref, b_ref, wdw_ref, wpw_ref, bpw_ref) in conv_refs:
        xn = _layernorm(x, g_ref[...], b_ref[...])         # f32 stats
        wdw = wdw_ref[...]                                  # (K, C) f32
        acc = jnp.zeros_like(xn)
        for k in range(kernel_size):                        # static tap unroll
            d = k - pad
            if d == 0:
                shifted = xn
            else:
                # roll on the flattened slab; rows whose shifted source crosses
                # a sequence boundary are zeroed, so this equals per-sequence
                # zero padding (identical to Conv1d padding=K//2).
                shifted = pltpu.roll(xn, (-d) % rows, axis=0)   # XLU rotate
                valid = jnp.logical_and(row_in_seq + d >= 0, row_in_seq + d < L)
                shifted = jnp.where(valid, shifted, 0.0)
            acc = acc + shifted * wdw[k:k + 1, :]
        y = jnp.dot(acc.astype(bf), wpw_ref[...],
                    preferred_element_type=jnp.float32) + bpw_ref[...]
        x = x + jnp.maximum(y, 0.0)                          # fused residual

    # ---- multi-head self-attention sublayer ----------------------------------
    D = C // heads
    xn = _layernorm(x, a_g[...], a_b[...]).astype(bf)
    qkv = jnp.dot(xn, wqkv_ref[...],                         # fused QKV, M = Bt*L
                  preferred_element_type=jnp.float32).reshape(Bt, L, 3 * C)
    q = qkv[:, :, 0 * C:1 * C] * (1.0 / math.sqrt(D))        # fold 1/sqrt(d_k) into q
    kk = qkv[:, :, 1 * C:2 * C]
    v = qkv[:, :, 2 * C:3 * C]
    # additive key-padding bias, computed ONCE (hoisted out of the head loop)
    mbias = jnp.where(m_ref[...] == 0, jnp.float32(-1e9), jnp.float32(0.0))

    # TODO(synk): for long sequences switch to a KV-tiled flash-style softmax so
    # the (L, L) logits never fully materialize (matters on v7x's 64 MiB VMEM).
    for h in range(heads):                                    # heads static-unrolled
        qh = q[:, :, h * D:(h + 1) * D].astype(bf)
        kh = kk[:, :, h * D:(h + 1) * D].astype(bf)
        vh = v[:, :, h * D:(h + 1) * D].astype(bf)
        logits = jnp.einsum('bqd,bkd->bqk', qh, kh,
                            preferred_element_type=jnp.float32) + mbias
        mx = jnp.max(logits, axis=-1, keepdims=True)          # f32 softmax stats
        p = jnp.exp(logits - mx)                              # EUP
        p = p * pl.reciprocal(jnp.sum(p, axis=-1, keepdims=True), approx=True)
        oh = jnp.einsum('bqk,bkd->bqd', p.astype(bf), vh,
                        preferred_element_type=jnp.float32)
        scr_ref[:, :, h * D:(h + 1) * D] = oh                 # scratch, no concat
    o = jnp.dot(scr_ref[...].reshape(rows, C).astype(bf), wo_ref[...],
                preferred_element_type=jnp.float32)
    x = x + o                                                  # fused residual

    # ---- feed-forward sublayer (+ optional morph residual) ------------------
    xn = _layernorm(x, f_g[...], f_b[...]).astype(bf)
    hmid = jnp.dot(xn, w1_ref[...], preferred_element_type=jnp.float32) + b1_ref[...]
    hmid = jnp.maximum(hmid, 0.0)
    y = jnp.dot(hmid.astype(bf), w2_ref[...],
                preferred_element_type=jnp.float32) + b2_ref[...]
    if has_morph:
        res = jnp.dot(x.astype(bf), wm_ref[...],
                      preferred_element_type=jnp.float32) + bm_ref[...]
    else:
        res = x
    Cout = o_ref.shape[-1]
    o_ref[...] = (res + y).reshape(Bt, L, Cout)


# --------------------------- tiling / VMEM heuristics ------------------------

def _vmem_limit_bytes():
    """~75% of this chip's VMEM (128 MiB v5e/v6e -> 96 MiB, 64 MiB v7x -> 48 MiB)."""
    try:
        cap = getattr(pltpu.get_tpu_info(), "vmem_capacity_bytes", None)
        if cap:
            return int(min(cap * 3 // 4, 100 * 1024 * 1024))
    except Exception:
        pass
    return 48 * 1024 * 1024


def _fused_vmem_estimate(bt, L, C, Cout, inter, K, num_conv, has_morph):
    rows = bt * L
    f32, b16 = 4, 2
    weights = (num_conv * (K * C * f32 + C * C * b16 + 3 * C * f32)
               + (C * 3 * C * b16 + C * C * b16 + 2 * C * f32)
               + (C * inter * b16 + inter * Cout * b16
                  + (inter + Cout + 2 * C) * f32)
               + ((C * Cout * b16 + Cout * f32) if has_morph else 0))
    io = 2 * rows * C * f32 + 2 * rows * Cout * f32 + 2 * bt * L * f32
    work = rows * (8 * C + inter + Cout) * f32          # residual/LN/qkv/scratch/FFN
    attn = 3 * bt * L * L * f32                          # one head's logits/probs
    return 2 * weights + io + work + attn


def _choose_batch_tile(B, L, C, Cout, inter, K, num_conv, has_morph, budget):
    """Largest divisor of B whose fused working set fits ~80% of the VMEM budget
    and whose row count stays near the MXU sweet spot; prefer a grid of >= 2
    (both v7x TensorCores) when it does not starve the MXU."""
    fits = [bt for bt in range(1, B + 1) if B % bt == 0 and
            _fused_vmem_estimate(bt, L, C, Cout, inter, K, num_conv,
                                 has_morph) <= int(budget * 0.8)]
    if not fits:
        return 1
    small = [bt for bt in fits if bt * L <= 1024]
    best = max(small) if small else min(fits)
    if B // best < 2 <= B:
        alt = [bt for bt in fits if B // bt >= 2 and bt * L >= 256]
        if alt:
            best = max(alt)
    return best


def _const_spec(shape):
    """Block == full array, same block every grid step (stays VMEM-resident)."""
    return pl.BlockSpec(shape, lambda i: (0,) * len(shape))


# -------------------------------- model glue --------------------------------

def positional_encoding(L, d):
    pos = jnp.arange(L, dtype=jnp.float32)[:, None]
    div = jnp.exp(jnp.arange(0.0, d, 2.0, dtype=jnp.float32) / d
                  * math.log(10000.0))
    pe = jnp.zeros((L, d), jnp.float32)
    pe = pe.at[:, 0::2].set(jnp.sin(pos / div))
    pe = pe.at[:, 1::2].set(jnp.cos(pos / div))
    return pe


def init_params(key, input_size, output_size, inter_size, num_conv, kernel=7):
    C = input_size
    keys = iter(jax.random.split(key, 16 + 3 * num_conv))
    s = 0.1
    p = {}
    p['conv'] = [dict(
        wdw=s * jax.random.normal(next(keys), (kernel, C), jnp.float32),
        wpw=s * jax.random.normal(next(keys), (C, C), jnp.float32),
        bpw=jnp.zeros((1, C), jnp.float32),
    ) for _ in range(num_conv)]
    n_sub = num_conv + 2
    p['ln_g'] = [jnp.ones((1, C), jnp.float32) for _ in range(n_sub)]
    p['ln_b'] = [jnp.zeros((1, C), jnp.float32) for _ in range(n_sub)]
    p['wq'] = s * jax.random.normal(next(keys), (C, C), jnp.float32)
    p['wk'] = s * jax.random.normal(next(keys), (C, C), jnp.float32)
    p['wv'] = s * jax.random.normal(next(keys), (C, C), jnp.float32)
    p['wo'] = s * jax.random.normal(next(keys), (C, C), jnp.float32)
    p['w1'] = s * jax.random.normal(next(keys), (C, inter_size), jnp.float32)
    p['b1'] = jnp.zeros((1, inter_size), jnp.float32)
    p['w2'] = s * jax.random.normal(next(keys), (inter_size, output_size), jnp.float32)
    p['b2'] = jnp.zeros((1, output_size), jnp.float32)
    if input_size != output_size:                       # morph layer
        p['wm'] = s * jax.random.normal(next(keys), (C, output_size), jnp.float32)
        p['bm'] = jnp.zeros((1, output_size), jnp.float32)
    return p


def prepare_params(params):
    """One-time weight prep (off the hot path): bf16 casts + fused QKV concat."""
    bf = jnp.bfloat16
    prep = {
        'conv': [dict(wdw=cp['wdw'], wpw=cp['wpw'].astype(bf), bpw=cp['bpw'])
                 for cp in params['conv']],
        'ln_g': list(params['ln_g']),
        'ln_b': list(params['ln_b']),
        'wqkv': jnp.concatenate([params['wq'], params['wk'], params['wv']],
                                axis=1).astype(bf),
        'wo': params['wo'].astype(bf),
        'w1': params['w1'].astype(bf), 'b1': params['b1'],
        'w2': params['w2'].astype(bf), 'b2': params['b2'],
    }
    if 'wm' in params:
        prep['wm'] = params['wm'].astype(bf)
        prep['bm'] = params['bm']
    return prep


@functools.partial(jax.jit, static_argnames=('heads',))
def transformer_encoder(prepared, x, masks, heads):
    """x: (B, L, C) float32 ; masks: (B, L) int (1 = token, 0 = pad)."""
    B, L, C = x.shape
    p = prepared
    num_conv = len(p['conv'])
    K = p['conv'][0]['wdw'].shape[0] if num_conv else 7
    inter = p['w1'].shape[1]
    Cout = p['w2'].shape[1]
    has_morph = 'wm' in p

    budget = _vmem_limit_bytes()
    Bt = _choose_batch_tile(B, L, C, Cout, inter, K, num_conv, has_morph, budget)
    grid = (B // Bt,)

    pe = positional_encoding(L, C)
    mask3 = masks[:, None, :].astype(jnp.int32)          # make_mask: (B, 1, L)

    args, specs = [], []

    def add(arr, spec):
        args.append(arr)
        specs.append(spec)

    add(x, pl.BlockSpec((Bt, L, C), lambda i: (i, 0, 0)))
    add(pe, _const_spec((L, C)))
    add(mask3, pl.BlockSpec((Bt, 1, L), lambda i: (i, 0, 0)))
    for i, cp in enumerate(p['conv']):
        add(p['ln_g'][i], _const_spec((1, C)))
        add(p['ln_b'][i], _const_spec((1, C)))
        add(cp['wdw'], _const_spec((K, C)))
        add(cp['wpw'], _const_spec((C, C)))
        add(cp['bpw'], _const_spec((1, C)))
    ia = num_conv
    add(p['ln_g'][ia], _const_spec((1, C)))
    add(p['ln_b'][ia], _const_spec((1, C)))
    add(p['wqkv'], _const_spec((C, 3 * C)))
    add(p['wo'], _const_spec((C, C)))
    iff = num_conv + 1
    add(p['ln_g'][iff], _const_spec((1, C)))
    add(p['ln_b'][iff], _const_spec((1, C)))
    add(p['w1'], _const_spec((C, inter)))
    add(p['b1'], _const_spec((1, inter)))
    add(p['w2'], _const_spec((inter, Cout)))
    add(p['b2'], _const_spec((1, Cout)))
    if has_morph:
        add(p['wm'], _const_spec((C, Cout)))
        add(p['bm'], _const_spec((1, Cout)))

    kernel = functools.partial(_encoder_kernel, num_conv=num_conv, heads=heads,
                               kernel_size=K, has_morph=has_morph)
    # NOTE: with toy channel sizes (C=Cout=32 < 128) the final store is a
    # masked partial store; keep C/Cout multiples of 128 for lane-dense stores.
    return pl.pallas_call(
        kernel,
        out_shape=jax.ShapeDtypeStruct((B, L, Cout), jnp.float32),
        grid_spec=pltpu.PrefetchScalarGridSpec(
            num_scalar_prefetch=0,
            grid=grid,
            in_specs=specs,
            out_specs=pl.BlockSpec((Bt, L, Cout), lambda i: (i, 0, 0)),
            scratch_shapes=[pltpu.VMEM((Bt, L, C), jnp.float32)]),
        compiler_params=pltpu.CompilerParams(
            dimension_semantics=("parallel",),
            vmem_limit_bytes=budget),
    )(*args)


# ----------------------------------- main -----------------------------------

if __name__ == "__main__":
    heads, input_size, output_size, inter_size, num_conv = 4, 32, 32, 64, 2
    B, L = 2, 8

    key = jax.random.PRNGKey(0)
    kp, kx = jax.random.split(key)
    params = init_params(kp, input_size, output_size, inter_size, num_conv)
    prepared = prepare_params(params)
    x = jax.random.normal(kx, (B, L, input_size), jnp.float32)

    lengths = jnp.array([8, 5], dtype=jnp.int32)
    masks = (jnp.arange(L)[None, :] < lengths[:, None]).astype(jnp.int32)

    out = transformer_encoder(prepared, x, masks, heads=heads)
    jax.block_until_ready(out)
    assert out.shape == (B, L, output_size) and out.dtype == jnp.float32
    assert bool(jnp.all(jnp.isfinite(out)))
    print("KERNEL_OK")
</pallas_src>

<mosaic_0001>
module attributes {stable_mosaic.version = 11 : i64} {
  func.func @_encoder_kernel(%arg0: i32, %arg1: memref<2x8x32xf32, #tpu.memory_space<vmem>>, %arg2: memref<8x32xf32, #tpu.memory_space<vmem>>, %arg3: memref<2x1x8xi32, #tpu.memory_space<vmem>>, %arg4: memref<1x32xf32, #tpu.memory_space<vmem>>, %arg5: memref<1x32xf32, #tpu.memory_space<vmem>>, %arg6: memref<7x32xf32, #tpu.memory_space<vmem>>, %arg7: memref<32x32xbf16, #tpu.memory_space<vmem>>, %arg8: memref<1x32xf32, #tpu.memory_space<vmem>>, %arg9: memref<1x32xf32, #tpu.memory_space<vmem>>, %arg10: memref<1x32xf32, #tpu.memory_space<vmem>>, %arg11: memref<7x32xf32, #tpu.memory_space<vmem>>, %arg12: memref<32x32xbf16, #tpu.memory_space<vmem>>, %arg13: memref<1x32xf32, #tpu.memory_space<vmem>>, %arg14: memref<1x32xf32, #tpu.memory_space<vmem>>, %arg15: memref<1x32xf32, #tpu.memory_space<vmem>>, %arg16: memref<32x96xbf16, #tpu.memory_space<vmem>>, %arg17: memref<32x32xbf16, #tpu.memory_space<vmem>>, %arg18: memref<1x32xf32, #tpu.memory_space<vmem>>, %arg19: memref<1x32xf32, #tpu.memory_space<vmem>>, %arg20: memref<32x64xbf16, #tpu.memory_space<vmem>>, %arg21: memref<1x64xf32, #tpu.memory_space<vmem>>, %arg22: memref<64x32xbf16, #tpu.memory_space<vmem>>, %arg23: memref<1x32xf32, #tpu.memory_space<vmem>>, %arg24: memref<2x8x32xf32, #tpu.memory_space<vmem>>, %arg25: memref<2x8x32xf32, #tpu.memory_space<vmem>>) attributes {dimension_semantics = [#tpu.dimension_semantics<parallel>], iteration_bounds = array<i64: 1>, scalar_prefetch = 0 : i64, scratch_operands = 1 : i64, tpu.core_type = #tpu.core_type<tc>, window_params = [{transform_indices = @transform_0, window_bounds = array<i64: 2, 8, 32>}, {pipeline_mode = #tpu.pipeline_mode<synchronous>, transform_indices = @transform_1, window_bounds = array<i64: 8, 32>}, {transform_indices = @transform_2, window_bounds = array<i64: 2, 1, 8>}, {pipeline_mode = #tpu.pipeline_mode<synchronous>, transform_indices = @transform_3, window_bounds = array<i64: 1, 32>}, {pipeline_mode = #tpu.pipeline_mode<synchronous>, transform_indices = @transform_4, window_bounds = array<i64: 1, 32>}, {pipeline_mode = #tpu.pipeline_mode<synchronous>, transform_indices = @transform_5, window_bounds = array<i64: 7, 32>}, {pipeline_mode = #tpu.pipeline_mode<synchronous>, transform_indices = @transform_6, window_bounds = array<i64: 32, 32>}, {pipeline_mode = #tpu.pipeline_mode<synchronous>, transform_indices = @transform_7, window_bounds = array<i64: 1, 32>}, {pipeline_mode = #tpu.pipeline_mode<synchronous>, transform_indices = @transform_8, window_bounds = array<i64: 1, 32>}, {pipeline_mode = #tpu.pipeline_mode<synchronous>, transform_indices = @transform_9, window_bounds = array<i64: 1, 32>}, {pipeline_mode = #tpu.pipeline_mode<synchronous>, transform_indices = @transform_10, window_bounds = array<i64: 7, 32>}, {pipeline_mode = #tpu.pipeline_mode<synchronous>, transform_indices = @transform_11, window_bounds = array<i64: 32, 32>}, {pipeline_mode = #tpu.pipeline_mode<synchronous>, transform_indices = @transform_12, window_bounds = array<i64: 1, 32>}, {pipeline_mode = #tpu.pipeline_mode<synchronous>, transform_indices = @transform_13, window_bounds = array<i64: 1, 32>}, {pipeline_mode = #tpu.pipeline_mode<synchronous>, transform_indices = @transform_14, window_bounds = array<i64: 1, 32>}, {pipeline_mode = #tpu.pipeline_mode<synchronous>, transform_indices = @transform_15, window_bounds = array<i64: 32, 96>}, {pipeline_mode = #tpu.pipeline_mode<synchronous>, transform_indices = @transform_16, window_bounds = array<i64: 32, 32>}, {pipeline_mode = #tpu.pipeline_mode<synchronous>, transform_indices = @transform_17, window_bounds = array<i64: 1, 32>}, {pipeline_mode = #tpu.pipeline_mode<synchronous>, transform_indices = @transform_18, window_bounds = array<i64: 1, 32>}, {pipeline_mode = #tpu.pipeline_mode<synchronous>, transform_indices = @transform_19, window_bounds = array<i64: 32, 64>}, {pipeline_mode = #tpu.pipeline_mode<synchronous>, transform_indices = @transform_20, window_bounds = array<i64: 1, 64>}, {pipeline_mode = #tpu.pipeline_mode<synchronous>, transform_indices = @transform_21, window_bounds = array<i64: 64, 32>}, {pipeline_mode = #tpu.pipeline_mode<synchronous>, transform_indices = @transform_22, window_bounds = array<i64: 1, 32>}, {transform_indices = @transform_23, window_bounds = array<i64: 2, 8, 32>}]} {
    %c0 = arith.constant 0 : index
    %c0_0 = arith.constant 0 : index
    %c0_1 = arith.constant 0 : index
    %0 = vector.load %arg1[%c0, %c0_0, %c0_1] : memref<2x8x32xf32, #tpu.memory_space<vmem>>, vector<2x8x32xf32>
    %c0_2 = arith.constant 0 : index
    %c0_3 = arith.constant 0 : index
    %1 = vector.load %arg2[%c0_2, %c0_3] : memref<8x32xf32, #tpu.memory_space<vmem>>, vector<8x32xf32>
    %2 = vector.shape_cast %1 : vector<8x32xf32> to vector<1x8x32xf32>
    %3 = vector.broadcast %2 : vector<1x8x32xf32> to vector<2x8x32xf32>
    %4 = arith.addf %0, %3 : vector<2x8x32xf32>
    %5 = vector.shape_cast %4 : vector<2x8x32xf32> to vector<16x32xf32>
    %6 = tpu.iota {dimensions = array<i32: 0>} : vector<16x1xi32>
    %c8_i32 = arith.constant 8 : i32
    %c0_i32 = arith.constant 0 : i32
    %7 = arith.cmpi eq, %c8_i32, %c0_i32 : i32
    %c1_i32 = arith.constant 1 : i32
    %8 = arith.select %7, %c1_i32, %c8_i32 : i32
    %9 = vector.broadcast %8 : i32 to vector<16x1xi32>
    %10 = arith.remsi %6, %9 : vector<16x1xi32>
    %c0_i32_4 = arith.constant 0 : i32
    %11 = vector.broadcast %c0_i32_4 : i32 to vector<16x1xi32>
    %12 = arith.cmpi ne, %10, %11 : vector<16x1xi32>
    %c0_i32_5 = arith.constant 0 : i32
    %13 = vector.broadcast %c0_i32_5 : i32 to vector<16x1xi32>
    %14 = arith.cmpi slt, %10, %13 : vector<16x1xi32>
    %c0_i32_6 = arith.constant 0 : i32
    %15 = arith.cmpi slt, %8, %c0_i32_6 : i32
    %16 = vector.broadcast %15 : i1 to vector<16x1xi1>
    %17 = vector.broadcast %16 : vector<16x1xi1> to vector<16x1xi1>
    %18 = arith.xori %14, %17 : vector<16x1xi1>
    %19 = arith.andi %18, %12 : vector<16x1xi1>
    %20 = vector.broadcast %8 : i32 to vector<16x1xi32>
    %21 = arith.addi %10, %20 : vector<16x1xi32>
    %22 = arith.select %19, %21, %10 : vector<16x1xi1>, vector<16x1xi32>
    %c0_7 = arith.constant 0 : index
    %c0_8 = arith.constant 0 : index
    %23 = vector.load %arg4[%c0_7, %c0_8] : memref<1x32xf32, #tpu.memory_space<vmem>>, vector<1x32xf32>
    %c0_9 = arith.constant 0 : index
    %c0_10 = arith.constant 0 : index
    %24 = vector.load %arg5[%c0_9, %c0_10] : memref<1x32xf32, #tpu.memory_space<vmem>>, vector<1x32xf32>
    %cst = arith.constant dense<0.000000e+00> : vector<16xf32>
    %25 = vector.multi_reduction <add>, %5, %cst [1] : vector<16x32xf32> to vector<16xf32>
    %26 = vector.shape_cast %25 : vector<16xf32> to vector<16x1xf32>
    %cst_11 = arith.constant 3.200000e+01 : f32
    %27 = vector.broadcast %cst_11 : f32 to vector<16x1xf32>
    %28 = arith.divf %26, %27 : vector<16x1xf32>
    %29 = vector.broadcast %28 : vector<16x1xf32> to vector<16x32xf32>
    %30 = arith.subf %5, %29 : vector<16x32xf32>
    %31 = arith.mulf %30, %30 : vector<16x32xf32>
    %cst_12 = arith.constant dense<0.000000e+00> : vector<16xf32>
    %32 = vector.multi_reduction <add>, %31, %cst_12 [1] : vector<16x32xf32> to vector<16xf32>
    %33 = vector.shape_cast %32 : vector<16xf32> to vector<16x1xf32>
    %cst_13 = arith.constant 3.200000e+01 : f32
    %34 = vector.broadcast %cst_13 : f32 to vector<16x1xf32>
    %35 = arith.divf %33, %34 : vector<16x1xf32>
    %36 = vector.broadcast %28 : vector<16x1xf32> to vector<16x32xf32>
    %37 = arith.subf %5, %36 : vector<16x32xf32>
    %cst_14 = arith.constant 9.99999974E-6 : f32
    %38 = vector.broadcast %cst_14 : f32 to vector<16x1xf32>
    %39 = arith.addf %35, %38 : vector<16x1xf32>
    %40 = math.rsqrt %39 : vector<16x1xf32>
    %41 = vector.broadcast %40 : vector<16x1xf32> to vector<16x32xf32>
    %42 = arith.mulf %37, %41 : vector<16x32xf32>
    %43 = vector.broadcast %23 : vector<1x32xf32> to vector<16x32xf32>
    %44 = arith.mulf %42, %43 : vector<16x32xf32>
    %45 = vector.broadcast %24 : vector<1x32xf32> to vector<16x32xf32>
    %46 = arith.addf %44, %45 : vector<16x32xf32>
    %c0_15 = arith.constant 0 : index
    %c0_16 = arith.constant 0 : index
    %47 = vector.load %arg6[%c0_15, %c0_16] : memref<7x32xf32, #tpu.memory_space<vmem>>, vector<7x32xf32>
    %cst_17 = arith.constant 0.000000e+00 : f32
    %48 = vector.broadcast %cst_17 : f32 to vector<16x32xf32>
    %c3_i32 = arith.constant 3 : i32
    %49 = tpu.dynamic_rotate %46 by %c3_i32 dim 0 : vector<16x32xf32>, i32 -> vector<16x32xf32>
    %c-3_i32 = arith.constant -3 : i32
    %50 = vector.broadcast %c-3_i32 : i32 to vector<16x1xi32>
    %51 = arith.addi %22, %50 : vector<16x1xi32>
    %c0_i32_18 = arith.constant 0 : i32
    %52 = vector.broadcast %c0_i32_18 : i32 to vector<16x1xi32>
    %53 = arith.cmpi sge, %51, %52 : vector<16x1xi32>
    %c-3_i32_19 = arith.constant -3 : i32
    %54 = vector.broadcast %c-3_i32_19 : i32 to vector<16x1xi32>
    %55 = arith.addi %22, %54 : vector<16x1xi32>
    %c8_i32_20 = arith.constant 8 : i32
    %56 = vector.broadcast %c8_i32_20 : i32 to vector<16x1xi32>
    %57 = arith.cmpi slt, %55, %56 : vector<16x1xi32>
    %58 = arith.andi %53, %57 : vector<16x1xi1>
    %cst_21 = arith.constant 0.000000e+00 : f32
    %59 = vector.shape_cast %58 : vector<16x1xi1> to vector<16x1xi1>
    %60 = vector.broadcast %59 : vector<16x1xi1> to vector<16x32xi1>
    %61 = vector.broadcast %cst_21 : f32 to vector<16x32xf32>
    %62 = arith.select %60, %49, %61 : vector<16x32xi1>, vector<16x32xf32>
    %63 = vector.extract_strided_slice %47 {offsets = [0, 0], sizes = [1, 32], strides = [1, 1]} : vector<7x32xf32> to vector<1x32xf32>
    %64 = vector.broadcast %63 : vector<1x32xf32> to vector<16x32xf32>
    %65 = arith.mulf %62, %64 : vector<16x32xf32>
    %66 = arith.addf %48, %65 : vector<16x32xf32>
    %c2_i32 = arith.constant 2 : i32
    %67 = tpu.dynamic_rotate %46 by %c2_i32 dim 0 : vector<16x32xf32>, i32 -> vector<16x32xf32>
    %c-2_i32 = arith.constant -2 : i32
    %68 = vector.broadcast %c-2_i32 : i32 to vector<16x1xi32>
    %69 = arith.addi %22, %68 : vector<16x1xi32>
    %c0_i32_22 = arith.constant 0 : i32
    %70 = vector.broadcast %c0_i32_22 : i32 to vector<16x1xi32>
    %71 = arith.cmpi sge, %69, %70 : vector<16x1xi32>
    %c-2_i32_23 = arith.constant -2 : i32
    %72 = vector.broadcast %c-2_i32_23 : i32 to vector<16x1xi32>
    %73 = arith.addi %22, %72 : vector<16x1xi32>
    %c8_i32_24 = arith.constant 8 : i32
    %74 = vector.broadcast %c8_i32_24 : i32 to vector<16x1xi32>
    %75 = arith.cmpi slt, %73, %74 : vector<16x1xi32>
    %76 = arith.andi %71, %75 : vector<16x1xi1>
    %cst_25 = arith.constant 0.000000e+00 : f32
    %77 = vector.shape_cast %76 : vector<16x1xi1> to vector<16x1xi1>
    %78 = vector.broadcast %77 : vector<16x1xi1> to vector<16x32xi1>
    %79 = vector.broadcast %cst_25 : f32 to vector<16x32xf32>
    %80 = arith.select %78, %67, %79 : vector<16x32xi1>, vector<16x32xf32>
    %81 = vector.extract_strided_slice %47 {offsets = [1, 0], sizes = [1, 32], strides = [1, 1]} : vector<7x32xf32> to vector<1x32xf32>
    %82 = vector.broadcast %81 : vector<1x32xf32> to vector<16x32xf32>
    %83 = arith.mulf %80, %82 : vector<16x32xf32>
    %84 = arith.addf %66, %83 : vector<16x32xf32>
    %c1_i32_26 = arith.constant 1 : i32
    %85 = tpu.dynamic_rotate %46 by %c1_i32_26 dim 0 : vector<16x32xf32>, i32 -> vector<16x32xf32>
    %c-1_i32 = arith.constant -1 : i32
    %86 = vector.broadcast %c-1_i32 : i32 to vector<16x1xi32>
    %87 = arith.addi %22, %86 : vector<16x1xi32>
    %c0_i32_27 = arith.constant 0 : i32
    %88 = vector.broadcast %c0_i32_27 : i32 to vector<16x1xi32>
    %89 = arith.cmpi sge, %87, %88 : vector<16x1xi32>
    %c-1_i32_28 = arith.constant -1 : i32
    %90 = vector.broadcast %c-1_i32_28 : i32 to vector<16x1xi32>
    %91 = arith.addi %22, %90 : vector<16x1xi32>
    %c8_i32_29 = arith.constant 8 : i32
    %92 = vector.broadcast %c8_i32_29 : i32 to vector<16x1xi32>
    %93 = arith.cmpi slt, %91, %92 : vector<16x1xi32>
    %94 = arith.andi %89, %93 : vector<16x1xi1>
    %cst_30 = arith.constant 0.000000e+00 : f32
    %95 = vector.shape_cast %94 : vector<16x1xi1> to vector<16x1xi1>
    %96 = vector.broadcast %95 : vector<16x1xi1> to vector<16x32xi1>
    %97 = vector.broadcast %cst_30 : f32 to vector<16x32xf32>
    %98 = arith.select %96, %85, %97 : vector<16x32xi1>, vector<16x32xf32>
    %99 = vector.extract_strided_slice %47 {offsets = [2, 0], sizes = [1, 32], strides = [1, 1]} : vector<7x32xf32> to vector<1x32xf32>
    %100 = vector.broadcast %99 : vector<1x32xf32> to vector<16x32xf32>
    %101 = arith.mulf %98, %100 : vector<16x32xf32>
    %102 = arith.addf %84, %101 : vector<16x32xf32>
    %103 = vector.extract_strided_slice %47 {offsets = [3, 0], sizes = [1, 32], strides = [1, 1]} : vector<7x32xf32> to vector<1x32xf32>
    %104 = vector.broadcast %103 : vector<1x32xf32> to vector<16x32xf32>
    %105 = arith.mulf %46, %104 : vector<16x32xf32>
    %106 = arith.addf %102, %105 : vector<16x32xf32>
    %c15_i32 = arith.constant 15 : i32
    %107 = tpu.dynamic_rotate %46 by %c15_i32 dim 0 : vector<16x32xf32>, i32 -> vector<16x32xf32>
    %c1_i32_31 = arith.constant 1 : i32
    %108 = vector.broadcast %c1_i32_31 : i32 to vector<16x1xi32>
    %109 = arith.addi %22, %108 : vector<16x1xi32>
    %c0_i32_32 = arith.constant 0 : i32
    %110 = vector.broadcast %c0_i32_32 : i32 to vector<16x1xi32>
    %111 = arith.cmpi sge, %109, %110 : vector<16x1xi32>
    %c1_i32_33 = arith.constant 1 : i32
    %112 = vector.broadcast %c1_i32_33 : i32 to vector<16x1xi32>
    %113 = arith.addi %22, %112 : vector<16x1xi32>
    %c8_i32_34 = arith.constant 8 : i32
    %114 = vector.broadcast %c8_i32_34 : i32 to vector<16x1xi32>
    %115 = arith.cmpi slt, %113, %114 : vector<16x1xi32>
    %116 = arith.andi %111, %115 : vector<16x1xi1>
    %cst_35 = arith.constant 0.000000e+00 : f32
    %117 = vector.shape_cast %116 : vector<16x1xi1> to vector<16x1xi1>
    %118 = vector.broadcast %117 : vector<16x1xi1> to vector<16x32xi1>
    %119 = vector.broadcast %cst_35 : f32 to vector<16x32xf32>
    %120 = arith.select %118, %107, %119 : vector<16x32xi1>, vector<16x32xf32>
    %121 = vector.extract_strided_slice %47 {offsets = [4, 0], sizes = [1, 32], strides = [1, 1]} : vector<7x32xf32> to vector<1x32xf32>
    %122 = vector.broadcast %121 : vector<1x32xf32> to vector<16x32xf32>
    %123 = arith.mulf %120, %122 : vector<16x32xf32>
    %124 = arith.addf %106, %123 : vector<16x32xf32>
    %c14_i32 = arith.constant 14 : i32
    %125 = tpu.dynamic_rotate %46 by %c14_i32 dim 0 : vector<16x32xf32>, i32 -> vector<16x32xf32>
    %c2_i32_36 = arith.constant 2 : i32
    %126 = vector.broadcast %c2_i32_36 : i32 to vector<16x1xi32>
    %127 = arith.addi %22, %126 : vector<16x1xi32>
    %c0_i32_37 = arith.constant 0 : i32
    %128 = vector.broadcast %c0_i32_37 : i32 to vector<16x1xi32>
    %129 = arith.cmpi sge, %127, %128 : vector<16x1xi32>
    %c2_i32_38 = arith.constant 2 : i32
    %130 = vector.broadcast %c2_i32_38 : i32 to vector<16x1xi32>
    %131 = arith.addi %22, %130 : vector<16x1xi32>
    %c8_i32_39 = arith.constant 8 : i32
    %132 = vector.broadcast %c8_i32_39 : i32 to vector<16x1xi32>
    %133 = arith.cmpi slt, %131, %132 : vector<16x1xi32>
    %134 = arith.andi %129, %133 : vector<16x1xi1>
    %cst_40 = arith.constant 0.000000e+00 : f32
    %135 = vector.shape_cast %134 : vector<16x1xi1> to vector<16x1xi1>
    %136 = vector.broadcast %135 : vector<16x1xi1> to vector<16x32xi1>
    %137 = vector.broadcast %cst_40 : f32 to vector<16x32xf32>
    %138 = arith.select %136, %125, %137 : vector<16x32xi1>, vector<16x32xf32>
    %139 = vector.extract_strided_slice %47 {offsets = [5, 0], sizes = [1, 32], strides = [1, 1]} : vector<7x32xf32> to vector<1x32xf32>
    %140 = vector.broadcast %139 : vector<1x32xf32> to vector<16x32xf32>
    %141 = arith.mulf %138, %140 : vector<16x32xf32>
    %142 = arith.addf %124, %141 : vector<16x32xf32>
    %c13_i32 = arith.constant 13 : i32
    %143 = tpu.dynamic_rotate %46 by %c13_i32 dim 0 : vector<16x32xf32>, i32 -> vector<16x32xf32>
    %c3_i32_41 = arith.constant 3 : i32
    %144 = vector.broadcast %c3_i32_41 : i32 to vector<16x1xi32>
    %145 = arith.addi %22, %144 : vector<16x1xi32>
    %c0_i32_42 = arith.constant 0 : i32
    %146 = vector.broadcast %c0_i32_42 : i32 to vector<16x1xi32>
    %147 = arith.cmpi sge, %145, %146 : vector<16x1xi32>
    %c3_i32_43 = arith.constant 3 : i32
    %148 = vector.broadcast %c3_i32_43 : i32 to vector<16x1xi32>
    %149 = arith.addi %22, %148 : vector<16x1xi32>
    %c8_i32_44 = arith.constant 8 : i32
    %150 = vector.broadcast %c8_i32_44 : i32 to vector<16x1xi32>
    %151 = arith.cmpi slt, %149, %150 : vector<16x1xi32>
    %152 = arith.andi %147, %151 : vector<16x1xi1>
    %cst_45 = arith.constant 0.000000e+00 : f32
    %153 = vector.shape_cast %152 : vector<16x1xi1> to vector<16x1xi1>
    %154 = vector.broadcast %153 : vector<16x1xi1> to vector<16x32xi1>
    %155 = vector.broadcast %cst_45 : f32 to vector<16x32xf32>
    %156 = arith.select %154, %143, %155 : vector<16x32xi1>, vector<16x32xf32>
    %157 = vector.extract_strided_slice %47 {offsets = [6, 0], sizes = [1, 32], strides = [1, 1]} : vector<7x32xf32> to vector<1x32xf32>
    %158 = vector.broadcast %157 : vector<1x32xf32> to vector<16x32xf32>
    %159 = arith.mulf %156, %158 : vector<16x32xf32>
    %160 = arith.addf %142, %159 : vector<16x32xf32>
    %161 = arith.truncf %160 : vector<16x32xf32> to vector<16x32xbf16>
    %c0_46 = arith.constant 0 : index
    %c0_47 = arith.constant 0 : index
    %162 = vector.load %arg7[%c0_46, %c0_47] : memref<32x32xbf16, #tpu.memory_space<vmem>>, vector<32x32xbf16>
    %cst_48 = arith.constant dense<0.000000e+00> : vector<16x32xf32>
    %163 = tpu.matmul %161, %162, %cst_48 {dimension_numbers = #tpu.dot_dimension_numbers<[1], [0], [0], [1], [0, 0, 1, 1], [], []>} : vector<16x32xbf16>, vector<32x32xbf16>, vector<16x32xf32> -> vector<16x32xf32>
    %c0_49 = arith.constant 0 : index
    %c0_50 = arith.constant 0 : index
    %164 = vector.load %arg8[%c0_49, %c0_50] : memref<1x32xf32, #tpu.memory_space<vmem>>, vector<1x32xf32>
    %165 = vector.broadcast %164 : vector<1x32xf32> to vector<16x32xf32>
    %166 = arith.addf %163, %165 : vector<16x32xf32>
    %cst_51 = arith.constant 0.000000e+00 : f32
    %167 = vector.broadcast %cst_51 : f32 to vector<16x32xf32>
    %168 = arith.maximumf %166, %167 : vector<16x32xf32>
    %169 = arith.addf %5, %168 : vector<16x32xf32>
    %c0_52 = arith.constant 0 : index
    %c0_53 = arith.constant 0 : index
    %170 = vector.load %arg9[%c0_52, %c0_53] : memref<1x32xf32, #tpu.memory_space<vmem>>, vector<1x32xf32>
    %c0_54 = arith.constant 0 : index
    %c0_55 = arith.constant 0 : index
    %171 = vector.load %arg10[%c0_54, %c0_55] : memref<1x32xf32, #tpu.memory_space<vmem>>, vector<1x32xf32>
    %cst_56 = arith.constant dense<0.000000e+00> : vector<16xf32>
    %172 = vector.multi_reduction <add>, %169, %cst_56 [1] : vector<16x32xf32> to vector<16xf32>
    %173 = vector.shape_cast %172 : vector<16xf32> to vector<16x1xf32>
    %cst_57 = arith.constant 3.200000e+01 : f32
    %174 = vector.broadcast %cst_57 : f32 to vector<16x1xf32>
    %175 = arith.divf %173, %174 : vector<16x1xf32>
    %176 = vector.broadcast %175 : vector<16x1xf32> to vector<16x32xf32>
    %177 = arith.subf %169, %176 : vector<16x32xf32>
    %178 = arith.mulf %177, %177 : vector<16x32xf32>
    %cst_58 = arith.constant dense<0.000000e+00> : vector<16xf32>
    %179 = vector.multi_reduction <add>, %178, %cst_58 [1] : vector<16x32xf32> to vector<16xf32>
    %180 = vector.shape_cast %179 : vector<16xf32> to vector<16x1xf32>
    %cst_59 = arith.constant 3.200000e+01 : f32
    %181 = vector.broadcast %cst_59 : f32 to vector<16x1xf32>
    %182 = arith.divf %180, %181 : vector<16x1xf32>
    %183 = vector.broadcast %175 : vector<16x1xf32> to vector<16x32xf32>
    %184 = arith.subf %169, %183 : vector<16x32xf32>
    %cst_60 = arith.constant 9.99999974E-6 : f32
    %185 = vector.broadcast %cst_60 : f32 to vector<16x1xf32>
    %186 = arith.addf %182, %185 : vector<16x1xf32>
    %187 = math.rsqrt %186 : vector<16x1xf32>
    %188 = vector.broadcast %187 : vector<16x1xf32> to vector<16x32xf32>
    %189 = arith.mulf %184, %188 : vector<16x32xf32>
    %190 = vector.broadcast %170 : vector<1x32xf32> to vector<16x32xf32>
    %191 = arith.mulf %189, %190 : vector<16x32xf32>
    %192 = vector.broadcast %171 : vector<1x32xf32> to vector<16x32xf32>
    %193 = arith.addf %191, %192 : vector<16x32xf32>
    %c0_61 = arith.constant 0 : index
    %c0_62 = arith.constant 0 : index
    %194 = vector.load %arg11[%c0_61, %c0_62] : memref<7x32xf32, #tpu.memory_space<vmem>>, vector<7x32xf32>
    %cst_63 = arith.constant 0.000000e+00 : f32
    %195 = vector.broadcast %cst_63 : f32 to vector<16x32xf32>
    %c3_i32_64 = arith.constant 3 : i32
    %196 = tpu.dynamic_rotate %193 by %c3_i32_64 dim 0 : vector<16x32xf32>, i32 -> vector<16x32xf32>
    %c-3_i32_65 = arith.constant -3 : i32
    %197 = vector.broadcast %c-3_i32_65 : i32 to vector<16x1xi32>
    %198 = arith.addi %22, %197 : vector<16x1xi32>
    %c0_i32_66 = arith.constant 0 : i32
    %199 = vector.broadcast %c0_i32_66 : i32 to vector<16x1xi32>
    %200 = arith.cmpi sge, %198, %199 : vector<16x1xi32>
    %c-3_i32_67 = arith.constant -3 : i32
    %201 = vector.broadcast %c-3_i32_67 : i32 to vector<16x1xi32>
    %202 = arith.addi %22, %201 : vector<16x1xi32>
    %c8_i32_68 = arith.constant 8 : i32
    %203 = vector.broadcast %c8_i32_68 : i32 to vector<16x1xi32>
    %204 = arith.cmpi slt, %202, %203 : vector<16x1xi32>
    %205 = arith.andi %200, %204 : vector<16x1xi1>
    %cst_69 = arith.constant 0.000000e+00 : f32
    %206 = vector.shape_cast %205 : vector<16x1xi1> to vector<16x1xi1>
    %207 = vector.broadcast %206 : vector<16x1xi1> to vector<16x32xi1>
    %208 = vector.broadcast %cst_69 : f32 to vector<16x32xf32>
    %209 = arith.select %207, %196, %208 : vector<16x32xi1>, vector<16x32xf32>
    %210 = vector.extract_strided_slice %194 {offsets = [0, 0], sizes = [1, 32], strides = [1, 1]} : vector<7x32xf32> to vector<1x32xf32>
    %211 = vector.broadcast %210 : vector<1x32xf32> to vector<16x32xf32>
    %212 = arith.mulf %209, %211 : vector<16x32xf32>
    %213 = arith.addf %195, %212 : vector<16x32xf32>
    %c2_i32_70 = arith.constant 2 : i32
    %214 = tpu.dynamic_rotate %193 by %c2_i32_70 dim 0 : vector<16x32xf32>, i32 -> vector<16x32xf32>
    %c-2_i32_71 = arith.constant -2 : i32
    %215 = vector.broadcast %c-2_i32_71 : i32 to vector<16x1xi32>
    %216 = arith.addi %22, %215 : vector<16x1xi32>
    %c0_i32_72 = arith.constant 0 : i32
    %217 = vector.broadcast %c0_i32_72 : i32 to vector<16x1xi32>
    %218 = arith.cmpi sge, %216, %217 : vector<16x1xi32>
    %c-2_i32_73 = arith.constant -2 : i32
    %219 = vector.broadcast %c-2_i32_73 : i32 to vector<16x1xi32>
    %220 = arith.addi %22, %219 : vector<16x1xi32>
    %c8_i32_74 = arith.constant 8 : i32
    %221 = vector.broadcast %c8_i32_74 : i32 to vector<16x1xi32>
    %222 = arith.cmpi slt, %220, %221 : vector<16x1xi32>
    %223 = arith.andi %218, %222 : vector<16x1xi1>
    %cst_75 = arith.constant 0.000000e+00 : f32
    %224 = vector.shape_cast %223 : vector<16x1xi1> to vector<16x1xi1>
    %225 = vector.broadcast %224 : vector<16x1xi1> to vector<16x32xi1>
    %226 = vector.broadcast %cst_75 : f32 to vector<16x32xf32>
    %227 = arith.select %225, %214, %226 : vector<16x32xi1>, vector<16x32xf32>
    %228 = vector.extract_strided_slice %194 {offsets = [1, 0], sizes = [1, 32], strides = [1, 1]} : vector<7x32xf32> to vector<1x32xf32>
    %229 = vector.broadcast %228 : vector<1x32xf32> to vector<16x32xf32>
    %230 = arith.mulf %227, %229 : vector<16x32xf32>
    %231 = arith.addf %213, %230 : vector<16x32xf32>
    %c1_i32_76 = arith.constant 1 : i32
    %232 = tpu.dynamic_rotate %193 by %c1_i32_76 dim 0 : vector<16x32xf32>, i32 -> vector<16x32xf32>
    %c-1_i32_77 = arith.constant -1 : i32
    %233 = vector.broadcast %c-1_i32_77 : i32 to vector<16x1xi32>
    %234 = arith.addi %22, %233 : vector<16x1xi32>
    %c0_i32_78 = arith.constant 0 : i32
    %235 = vector.broadcast %c0_i32_78 : i32 to vector<16x1xi32>
    %236 = arith.cmpi sge, %234, %235 : vector<16x1xi32>
    %c-1_i32_79 = arith.constant -1 : i32
    %237 = vector.broadcast %c-1_i32_79 : i32 to vector<16x1xi32>
    %238 = arith.addi %22, %237 : vector<16x1xi32>
    %c8_i32_80 = arith.constant 8 : i32
    %239 = vector.broadcast %c8_i32_80 : i32 to vector<16x1xi32>
    %240 = arith.cmpi slt, %238, %239 : vector<16x1xi32>
    %241 = arith.andi %236, %240 : vector<16x1xi1>
    %cst_81 = arith.constant 0.000000e+00 : f32
    %242 = vector.shape_cast %241 : vector<16x1xi1> to vector<16x1xi1>
    %243 = vector.broadcast %242 : vector<16x1xi1> to vector<16x32xi1>
    %244 = vector.broadcast %cst_81 : f32 to vector<16x32xf32>
    %245 = arith.select %243, %232, %244 : vector<16x32xi1>, vector<16x32xf32>
    %246 = vector.extract_strided_slice %194 {offsets = [2, 0], sizes = [1, 32], strides = [1, 1]} : vector<7x32xf32> to vector<1x32xf32>
    %247 = vector.broadcast %246 : vector<1x32xf32> to vector<16x32xf32>
    %248 = arith.mulf %245, %247 : vector<16x32xf32>
    %249 = arith.addf %231, %248 : vector<16x32xf32>
    %250 = vector.extract_strided_slice %194 {offsets = [3, 0], sizes = [1, 32], strides = [1, 1]} : vector<7x32xf32> to vector<1x32xf32>
    %251 = vector.broadcast %250 : vector<1x32xf32> to vector<16x32xf32>
    %252 = arith.mulf %193, %251 : vector<16x32xf32>
    %253 = arith.addf %249, %252 : vector<16x32xf32>
    %c15_i32_82 = arith.constant 15 : i32
    %254 = tpu.dynamic_rotate %193 by %c15_i32_82 dim 0 : vector<16x32xf32>, i32 -> vector<16x32xf32>
    %c1_i32_83 = arith.constant 1 : i32
    %255 = vector.broadcast %c1_i32_83 : i32 to vector<16x1xi32>
    %256 = arith.addi %22, %255 : vector<16x1xi32>
    %c0_i32_84 = arith.constant 0 : i32
    %257 = vector.broadcast %c0_i32_84 : i32 to vector<16x1xi32>
    %258 = arith.cmpi sge, %256, %257 : vector<16x1xi32>
    %c1_i32_85 = arith.constant 1 : i32
    %259 = vector.broadcast %c1_i32_85 : i32 to vector<16x1xi32>
    %260 = arith.addi %22, %259 : vector<16x1xi32>
    %c8_i32_86 = arith.constant 8 : i32
    %261 = vector.broadcast %c8_i32_86 : i32 to vector<16x1xi32>
    %262 = arith.cmpi slt, %260, %261 : vector<16x1xi32>
    %263 = arith.andi %258, %262 : vector<16x1xi1>
    %cst_87 = arith.constant 0.000000e+00 : f32
    %264 = vector.shape_cast %263 : vector<16x1xi1> to vector<16x1xi1>
    %265 = vector.broadcast %264 : vector<16x1xi1> to vector<16x32xi1>
    %266 = vector.broadcast %cst_87 : f32 to vector<16x32xf32>
    %267 = arith.select %265, %254, %266 : vector<16x32xi1>, vector<16x32xf32>
    %268 = vector.extract_strided_slice %194 {offsets = [4, 0], sizes = [1, 32], strides = [1, 1]} : vector<7x32xf32> to vector<1x32xf32>
    %269 = vector.broadcast %268 : vector<1x32xf32> to vector<16x32xf32>
    %270 = arith.mulf %267, %269 : vector<16x32xf32>
    %271 = arith.addf %253, %270 : vector<16x32xf32>
    %c14_i32_88 = arith.constant 14 : i32
    %272 = tpu.dynamic_rotate %193 by %c14_i32_88 dim 0 : vector<16x32xf32>, i32 -> vector<16x32xf32>
    %c2_i32_89 = arith.constant 2 : i32
    %273 = vector.broadcast %c2_i32_89 : i32 to vector<16x1xi32>
    %274 = arith.addi %22, %273 : vector<16x1xi32>
    %c0_i32_90 = arith.constant 0 : i32
    %275 = vector.broadcast %c0_i32_90 : i32 to vector<16x1xi32>
    %276 = arith.cmpi sge, %274, %275 : vector<16x1xi32>
    %c2_i32_91 = arith.constant 2 : i32
    %277 = vector.broadcast %c2_i32_91 : i32 to vector<16x1xi32>
    %278 = arith.addi %22, %277 : vector<16x1xi32>
    %c8_i32_92 = arith.constant 8 : i32
    %279 = vector.broadcast %c8_i32_92 : i32 to vector<16x1xi32>
    %280 = arith.cmpi slt, %278, %279 : vector<16x1xi32>
    %281 = arith.andi %276, %280 : vector<16x1xi1>
    %cst_93 = arith.constant 0.000000e+00 : f32
    %282 = vector.shape_cast %281 : vector<16x1xi1> to vector<16x1xi1>
    %283 = vector.broadcast %282 : vector<16x1xi1> to vector<16x32xi1>
    %284 = vector.broadcast %cst_93 : f32 to vector<16x32xf32>
    %285 = arith.select %283, %272, %284 : vector<16x32xi1>, vector<16x32xf32>
    %286 = vector.extract_strided_slice %194 {offsets = [5, 0], sizes = [1, 32], strides = [1, 1]} : vector<7x32xf32> to vector<1x32xf32>
    %287 = vector.broadcast %286 : vector<1x32xf32> to vector<16x32xf32>
    %288 = arith.mulf %285, %287 : vector<16x32xf32>
    %289 = arith.addf %271, %288 : vector<16x32xf32>
    %c13_i32_94 = arith.constant 13 : i32
    %290 = tpu.dynamic_rotate %193 by %c13_i32_94 dim 0 : vector<16x32xf32>, i32 -> vector<16x32xf32>
    %c3_i32_95 = arith.constant 3 : i32
    %291 = vector.broadcast %c3_i32_95 : i32 to vector<16x1xi32>
    %292 = arith.addi %22, %291 : vector<16x1xi32>
    %c0_i32_96 = arith.constant 0 : i32
    %293 = vector.broadcast %c0_i32_96 : i32 to vector<16x1xi32>
    %294 = arith.cmpi sge, %292, %293 : vector<16x1xi32>
    %c3_i32_97 = arith.constant 3 : i32
    %295 = vector.broadcast %c3_i32_97 : i32 to vector<16x1xi32>
    %296 = arith.addi %22, %295 : vector<16x1xi32>
    %c8_i32_98 = arith.constant 8 : i32
    %297 = vector.broadcast %c8_i32_98 : i32 to vector<16x1xi32>
    %298 = arith.cmpi slt, %296, %297 : vector<16x1xi32>
    %299 = arith.andi %294, %298 : vector<16x1xi1>
    %cst_99 = arith.constant 0.000000e+00 : f32
    %300 = vector.shape_cast %299 : vector<16x1xi1> to vector<16x1xi1>
    %301 = vector.broadcast %300 : vector<16x1xi1> to vector<16x32xi1>
    %302 = vector.broadcast %cst_99 : f32 to vector<16x32xf32>
    %303 = arith.select %301, %290, %302 : vector<16x32xi1>, vector<16x32xf32>
    %304 = vector.extract_strided_slice %194 {offsets = [6, 0], sizes = [1, 32], strides = [1, 1]} : vector<7x32xf32> to vector<1x32xf32>
    %305 = vector.broadcast %304 : vector<1x32xf32> to vector<16x32xf32>
    %306 = arith.mulf %303, %305 : vector<16x32xf32>
    %307 = arith.addf %289, %306 : vector<16x32xf32>
    %308 = arith.truncf %307 : vector<16x32xf32> to vector<16x32xbf16>
    %c0_100 = arith.constant 0 : index
    %c0_101 = arith.constant 0 : index
    %309 = vector.load %arg12[%c0_100, %c0_101] : memref<32x32xbf16, #tpu.memory_space<vmem>>, vector<32x32xbf16>
    %cst_102 = arith.constant dense<0.000000e+00> : vector<16x32xf32>
    %310 = tpu.matmul %308, %309, %cst_102 {dimension_numbers = #tpu.dot_dimension_numbers<[1], [0], [0], [1], [0, 0, 1, 1], [], []>} : vector<16x32xbf16>, vector<32x32xbf16>, vector<16x32xf32> -> vector<16x32xf32>
    %c0_103 = arith.constant 0 : index
    %c0_104 = arith.constant 0 : index
    %311 = vector.load %arg13[%c0_103, %c0_104] : memref<1x32xf32, #tpu.memory_space<vmem>>, vector<1x32xf32>
    %312 = vector.broadcast %311 : vector<1x32xf32> to vector<16x32xf32>
    %313 = arith.addf %310, %312 : vector<16x32xf32>
    %cst_105 = arith.constant 0.000000e+00 : f32
    %314 = vector.broadcast %cst_105 : f32 to vector<16x32xf32>
    %315 = arith.maximumf %313, %314 : vector<16x32xf32>
    %316 = arith.addf %169, %315 : vector<16x32xf32>
    %c0_106 = arith.constant 0 : index
    %c0_107 = arith.constant 0 : index
    %317 = vector.load %arg14[%c0_106, %c0_107] : memref<1x32xf32, #tpu.memory_space<vmem>>, vector<1x32xf32>
    %c0_108 = arith.constant 0 : index
    %c0_109 = arith.constant 0 : index
    %318 = vector.load %arg15[%c0_108, %c0_109] : memref<1x32xf32, #tpu.memory_space<vmem>>, vector<1x32xf32>
    %cst_110 = arith.constant dense<0.000000e+00> : vector<16xf32>
    %319 = vector.multi_reduction <add>, %316, %cst_110 [1] : vector<16x32xf32> to vector<16xf32>
    %320 = vector.shape_cast %319 : vector<16xf32> to vector<16x1xf32>
    %cst_111 = arith.constant 3.200000e+01 : f32
    %321 = vector.broadcast %cst_111 : f32 to vector<16x1xf32>
    %322 = arith.divf %320, %321 : vector<16x1xf32>
    %323 = vector.broadcast %322 : vector<16x1xf32> to vector<16x32xf32>
    %324 = arith.subf %316, %323 : vector<16x32xf32>
    %325 = arith.mulf %324, %324 : vector<16x32xf32>
    %cst_112 = arith.constant dense<0.000000e+00> : vector<16xf32>
    %326 = vector.multi_reduction <add>, %325, %cst_112 [1] : vector<16x32xf32> to vector<16xf32>
    %327 = vector.shape_cast %326 : vector<16xf32> to vector<16x1xf32>
    %cst_113 = arith.constant 3.200000e+01 : f32
    %328 = vector.broadcast %cst_113 : f32 to vector<16x1xf32>
    %329 = arith.divf %327, %328 : vector<16x1xf32>
    %330 = vector.broadcast %322 : vector<16x1xf32> to vector<16x32xf32>
    %331 = arith.subf %316, %330 : vector<16x32xf32>
    %cst_114 = arith.constant 9.99999974E-6 : f32
    %332 = vector.broadcast %cst_114 : f32 to vector<16x1xf32>
    %333 = arith.addf %329, %332 : vector<16x1xf32>
    %334 = math.rsqrt %333 : vector<16x1xf32>
    %335 = vector.broadcast %334 : vector<16x1xf32> to vector<16x32xf32>
    %336 = arith.mulf %331, %335 : vector<16x32xf32>
    %337 = vector.broadcast %317 : vector<1x32xf32> to vector<16x32xf32>
    %338 = arith.mulf %336, %337 : vector<16x32xf32>
    %339 = vector.broadcast %318 : vector<1x32xf32> to vector<16x32xf32>
    %340 = arith.addf %338, %339 : vector<16x32xf32>
    %341 = arith.truncf %340 : vector<16x32xf32> to vector<16x32xbf16>
    %c0_115 = arith.constant 0 : index
    %c0_116 = arith.constant 0 : index
    %342 = vector.load %arg16[%c0_115, %c0_116] : memref<32x96xbf16, #tpu.memory_space<vmem>>, vector<32x96xbf16>
    %cst_117 = arith.constant dense<0.000000e+00> : vector<16x96xf32>
    %343 = tpu.matmul %341, %342, %cst_117 {dimension_numbers = #tpu.dot_dimension_numbers<[1], [0], [0], [1], [0, 0, 1, 1], [], []>} : vector<16x32xbf16>, vector<32x96xbf16>, vector<16x96xf32> -> vector<16x96xf32>
    %344 = vector.shape_cast %343 : vector<16x96xf32> to vector<2x8x96xf32>
    %345 = vector.extract_strided_slice %344 {offsets = [0, 0, 0], sizes = [2, 8, 32], strides = [1, 1, 1]} : vector<2x8x96xf32> to vector<2x8x32xf32>
    %cst_118 = arith.constant 0.353553385 : f32
    %346 = vector.broadcast %cst_118 : f32 to vector<2x8x32xf32>
    %347 = arith.mulf %345, %346 : vector<2x8x32xf32>
    %348 = vector.extract_strided_slice %344 {offsets = [0, 0, 32], sizes = [2, 8, 32], strides = [1, 1, 1]} : vector<2x8x96xf32> to vector<2x8x32xf32>
    %349 = vector.extract_strided_slice %344 {offsets = [0, 0, 64], sizes = [2, 8, 32], strides = [1, 1, 1]} : vector<2x8x96xf32> to vector<2x8x32xf32>
    %c0_119 = arith.constant 0 : index
    %c0_120 = arith.constant 0 : index
    %c0_121 = arith.constant 0 : index
    %350 = vector.load %arg3[%c0_119, %c0_120, %c0_121] : memref<2x1x8xi32, #tpu.memory_space<vmem>>, vector<2x1x8xi32>
    %c0_i32_122 = arith.constant 0 : i32
    %351 = vector.broadcast %c0_i32_122 : i32 to vector<2x1x8xi32>
    %352 = arith.cmpi eq, %350, %351 : vector<2x1x8xi32>
    %cst_123 = arith.constant -1.000000e+09 : f32
    %cst_124 = arith.constant 0.000000e+00 : f32
    %353 = vector.broadcast %cst_123 : f32 to vector<2x1x8xf32>
    %354 = vector.broadcast %cst_124 : f32 to vector<2x1x8xf32>
    %355 = arith.select %352, %353, %354 : vector<2x1x8xi1>, vector<2x1x8xf32>
    %356 = vector.extract_strided_slice %347 {offsets = [0, 0, 0], sizes = [2, 8, 8], strides = [1, 1, 1]} : vector<2x8x32xf32> to vector<2x8x8xf32>
    %357 = arith.truncf %356 : vector<2x8x8xf32> to vector<2x8x8xbf16>
    %358 = vector.extract_strided_slice %348 {offsets = [0, 0, 0], sizes = [2, 8, 8], strides = [1, 1, 1]} : vector<2x8x32xf32> to vector<2x8x8xf32>
    %359 = arith.truncf %358 : vector<2x8x8xf32> to vector<2x8x8xbf16>
    %360 = vector.extract_strided_slice %349 {offsets = [0, 0, 0], sizes = [2, 8, 8], strides = [1, 1, 1]} : vector<2x8x32xf32> to vector<2x8x8xf32>
    %361 = arith.truncf %360 : vector<2x8x8xf32> to vector<2x8x8xbf16>
    "tpu.trace_start"() <{level = 10 : i32, message = "bqd,bkd->bqk"}> : () -> ()
    %cst_125 = arith.constant dense<0.000000e+00> : vector<2x8x8xf32>
    %362 = tpu.matmul %357, %359, %cst_125 {dimension_numbers = #tpu.dot_dimension_numbers<[2], [2], [1], [1], [0, 0, 0, 1, 1, 1], [0], [0]>} : vector<2x8x8xbf16>, vector<2x8x8xbf16>, vector<2x8x8xf32> -> vector<2x8x8xf32>
    "tpu.trace_stop"() : () -> ()
    %363 = vector.broadcast %355 : vector<2x1x8xf32> to vector<2x8x8xf32>
    %364 = arith.addf %362, %363 : vector<2x8x8xf32>
    %cst_126 = arith.constant dense<0xFF800000> : vector<2x8xf32>
    %365 = vector.multi_reduction <maximumf>, %364, %cst_126 [2] : vector<2x8x8xf32> to vector<2x8xf32>
    %366 = vector.shape_cast %365 : vector<2x8xf32> to vector<2x8x1xf32>
    %367 = vector.broadcast %366 : vector<2x8x1xf32> to vector<2x8x8xf32>
    %368 = arith.subf %364, %367 : vector<2x8x8xf32>
    %369 = math.exp %368 : vector<2x8x8xf32>
    %cst_127 = arith.constant dense<0.000000e+00> : vector<2x8xf32>
    %370 = vector.multi_reduction <add>, %369, %cst_127 [2] : vector<2x8x8xf32> to vector<2x8xf32>
    %371 = vector.shape_cast %370 : vector<2x8xf32> to vector<2x8x1xf32>
    %372 = tpu.reciprocal %371 {approx = true} : vector<2x8x1xf32> -> vector<2x8x1xf32>
    %373 = vector.broadcast %372 : vector<2x8x1xf32> to vector<2x8x8xf32>
    %374 = arith.mulf %369, %373 : vector<2x8x8xf32>
    %375 = arith.truncf %374 : vector<2x8x8xf32> to vector<2x8x8xbf16>
    "tpu.trace_start"() <{level = 10 : i32, message = "bqk,bkd->bqd"}> : () -> ()
    %cst_128 = arith.constant dense<0.000000e+00> : vector<2x8x8xf32>
    %376 = tpu.matmul %375, %361, %cst_128 {dimension_numbers = #tpu.dot_dimension_numbers<[2], [1], [1], [2], [0, 0, 0, 1, 1, 2], [0], [0]>} : vector<2x8x8xbf16>, vector<2x8x8xbf16>, vector<2x8x8xf32> -> vector<2x8x8xf32>
    "tpu.trace_stop"() : () -> ()
    %c0_129 = arith.constant 0 : index
    %c0_130 = arith.constant 0 : index
    %c0_131 = arith.constant 0 : index
    %377 = vector.load %arg25[%c0_129, %c0_130, %c0_131] : memref<2x8x32xf32, #tpu.memory_space<vmem>>, vector<2x8x8xf32>
    tpu.vector_store %arg25[%c0_129, %c0_130, %c0_131], %376 {strides = array<i32>} : memref<2x8x32xf32, #tpu.memory_space<vmem>>, vector<2x8x8xf32>,
    %378 = vector.extract_strided_slice %347 {offsets = [0, 0, 8], sizes = [2, 8, 8], strides = [1, 1, 1]} : vector<2x8x32xf32> to vector<2x8x8xf32>
    %379 = arith.truncf %378 : vector<2x8x8xf32> to vector<2x8x8xbf16>
    %380 = vector.extract_strided_slice %348 {offsets = [0, 0, 8], sizes = [2, 8, 8], strides = [1, 1, 1]} : vector<2x8x32xf32> to vector<2x8x8xf32>
    %381 = arith.truncf %380 : vector<2x8x8xf32> to vector<2x8x8xbf16>
    %382 = vector.extract_strided_slice %349 {offsets = [0, 0, 8], sizes = [2, 8, 8], strides = [1, 1, 1]} : vector<2x8x32xf32> to vector<2x8x8xf32>
    %383 = arith.truncf %382 : vector<2x8x8xf32> to vector<2x8x8xbf16>
    "tpu.trace_start"() <{level = 10 : i32, message = "bqd,bkd->bqk"}> : () -> ()
    %cst_132 = arith.constant dense<0.000000e+00> : vector<2x8x8xf32>
    %384 = tpu.matmul %379, %381, %cst_132 {dimension_numbers = #tpu.dot_dimension_numbers<[2], [2], [1], [1], [0, 0, 0, 1, 1, 1], [0], [0]>} : vector<2x8x8xbf16>, vector<2x8x8xbf16>, vector<2x8x8xf32> -> vector<2x8x8xf32>
    "tpu.trace_stop"() : () -> ()
    %385 = vector.broadcast %355 : vector<2x1x8xf32> to vector<2x8x8xf32>
    %386 = arith.addf %384, %385 : vector<2x8x8xf32>
    %cst_133 = arith.constant dense<0xFF800000> : vector<2x8xf32>
    %387 = vector.multi_reduction <maximumf>, %386, %cst_133 [2] : vector<2x8x8xf32> to vector<2x8xf32>
    %388 = vector.shape_cast %387 : vector<2x8xf32> to vector<2x8x1xf32>
    %389 = vector.broadcast %388 : vector<2x8x1xf32> to vector<2x8x8xf32>
    %390 = arith.subf %386, %389 : vector<2x8x8xf32>
    %391 = math.exp %390 : vector<2x8x8xf32>
    %cst_134 = arith.constant dense<0.000000e+00> : vector<2x8xf32>
    %392 = vector.multi_reduction <add>, %391, %cst_134 [2] : vector<2x8x8xf32> to vector<2x8xf32>
    %393 = vector.shape_cast %392 : vector<2x8xf32> to vector<2x8x1xf32>
    %394 = tpu.reciprocal %393 {approx = true} : vector<2x8x1xf32> -> vector<2x8x1xf32>
    %395 = vector.broadcast %394 : vector<2x8x1xf32> to vector<2x8x8xf32>
    %396 = arith.mulf %391, %395 : vector<2x8x8xf32>
    %397 = arith.truncf %396 : vector<2x8x8xf32> to vector<2x8x8xbf16>
    "tpu.trace_start"() <{level = 10 : i32, message = "bqk,bkd->bqd"}> : () -> ()
    %cst_135 = arith.constant dense<0.000000e+00> : vector<2x8x8xf32>
    %398 = tpu.matmul %397, %383, %cst_135 {dimension_numbers = #tpu.dot_dimension_numbers<[2], [1], [1], [2], [0, 0, 0, 1, 1, 2], [0], [0]>} : vector<2x8x8xbf16>, vector<2x8x8xbf16>, vector<2x8x8xf32> -> vector<2x8x8xf32>
    "tpu.trace_stop"() : () -> ()
    %c0_136 = arith.constant 0 : index
    %c0_137 = arith.constant 0 : index
    %c8 = arith.constant 8 : index
    %399 = vector.load %arg25[%c0_136, %c0_137, %c8] : memref<2x8x32xf32, #tpu.memory_space<vmem>>, vector<2x8x8xf32>
    tpu.vector_store %arg25[%c0_136, %c0_137, %c8], %398 {strides = array<i32>} : memref<2x8x32xf32, #tpu.memory_space<vmem>>, vector<2x8x8xf32>,
    %400 = vector.extract_strided_slice %347 {offsets = [0, 0, 16], sizes = [2, 8, 8], strides = [1, 1, 1]} : vector<2x8x32xf32> to vector<2x8x8xf32>
    %401 = arith.truncf %400 : vector<2x8x8xf32> to vector<2x8x8xbf16>
    %402 = vector.extract_strided_slice %348 {offsets = [0, 0, 16], sizes = [2, 8, 8], strides = [1, 1, 1]} : vector<2x8x32xf32> to vector<2x8x8xf32>
    %403 = arith.truncf %402 : vector<2x8x8xf32> to vector<2x8x8xbf16>
    %404 = vector.extract_strided_slice %349 {offsets = [0, 0, 16], sizes = [2, 8, 8], strides = [1, 1, 1]} : vector<2x8x32xf32> to vector<2x8x8xf32>
    %405 = arith.truncf %404 : vector<2x8x8xf32> to vector<2x8x8xbf16>
    "tpu.trace_start"() <{level = 10 : i32, message = "bqd,bkd->bqk"}> : () -> ()
    %cst_138 = arith.constant dense<0.000000e+00> : vector<2x8x8xf32>
    %406 = tpu.matmul %401, %403, %cst_138 {dimension_numbers = #tpu.dot_dimension_numbers<[2], [2], [1], [1], [0, 0, 0, 1, 1, 1], [0], [0]>} : vector<2x8x8xbf16>, vector<2x8x8xbf16>, vector<2x8x8xf32> -> vector<2x8x8xf32>
    "tpu.trace_stop"() : () -> ()
    %407 = vector.broadcast %355 : vector<2x1x8xf32> to vector<2x8x8xf32>
    %408 = arith.addf %406, %407 : vector<2x8x8xf32>
    %cst_139 = arith.constant dense<0xFF800000> : vector<2x8xf32>
    %409 = vector.multi_reduction <maximumf>, %408, %cst_139 [2] : vector<2x8x8xf32> to vector<2x8xf32>
    %410 = vector.shape_cast %409 : vector<2x8xf32> to vector<2x8x1xf32>
    %411 = vector.broadcast %410 : vector<2x8x1xf32> to vector<2x8x8xf32>
    %412 = arith.subf %408, %411 : vector<2x8x8xf32>
    %413 = math.exp %412 : vector<2x8x8xf32>
    %cst_140 = arith.constant dense<0.000000e+00> : vector<2x8xf32>
    %414 = vector.multi_reduction <add>, %413, %cst_140 [2] : vector<2x8x8xf32> to vector<2x8xf32>
    %415 = vector.shape_cast %414 : vector<2x8xf32> to vector<2x8x1xf32>
    %416 = tpu.reciprocal %415 {approx = true} : vector<2x8x1xf32> -> vector<2x8x1xf32>
    %417 = vector.broadcast %416 : vector<2x8x1xf32> to vector<2x8x8xf32>
    %418 = arith.mulf %413, %417 : vector<2x8x8xf32>
    %419 = arith.truncf %418 : vector<2x8x8xf32> to vector<2x8x8xbf16>
    "tpu.trace_start"() <{level = 10 : i32, message = "bqk,bkd->bqd"}> : () -> ()
    %cst_141 = arith.constant dense<0.000000e+00> : vector<2x8x8xf32>
    %420 = tpu.matmul %419, %405, %cst_141 {dimension_numbers = #tpu.dot_dimension_numbers<[2], [1], [1], [2], [0, 0, 0, 1, 1, 2], [0], [0]>} : vector<2x8x8xbf16>, vector<2x8x8xbf16>, vector<2x8x8xf32> -> vector<2x8x8xf32>
    "tpu.trace_stop"() : () -> ()
    %c0_142 = arith.constant 0 : index
    %c0_143 = arith.constant 0 : index
    %c16 = arith.constant 16 : index
    %421 = vector.load %arg25[%c0_142, %c0_143, %c16] : memref<2x8x32xf32, #tpu.memory_space<vmem>>, vector<2x8x8xf32>
    tpu.vector_store %arg25[%c0_142, %c0_143, %c16], %420 {strides = array<i32>} : memref<2x8x32xf32, #tpu.memory_space<vmem>>, vector<2x8x8xf32>,
    %422 = vector.extract_strided_slice %347 {offsets = [0, 0, 24], sizes = [2, 8, 8], strides = [1, 1, 1]} : vector<2x8x32xf32> to vector<2x8x8xf32>
    %423 = arith.truncf %422 : vector<2x8x8xf32> to vector<2x8x8xbf16>
    %424 = vector.extract_strided_slice %348 {offsets = [0, 0, 24], sizes = [2, 8, 8], strides = [1, 1, 1]} : vector<2x8x32xf32> to vector<2x8x8xf32>
    %425 = arith.truncf %424 : vector<2x8x8xf32> to vector<2x8x8xbf16>
    %426 = vector.extract_strided_slice %349 {offsets = [0, 0, 24], sizes = [2, 8, 8], strides = [1, 1, 1]} : vector<2x8x32xf32> to vector<2x8x8xf32>
    %427 = arith.truncf %426 : vector<2x8x8xf32> to vector<2x8x8xbf16>
    "tpu.trace_start"() <{level = 10 : i32, message = "bqd,bkd->bqk"}> : () -> ()
    %cst_144 = arith.constant dense<0.000000e+00> : vector<2x8x8xf32>
    %428 = tpu.matmul %423, %425, %cst_144 {dimension_numbers = #tpu.dot_dimension_numbers<[2], [2], [1], [1], [0, 0, 0, 1, 1, 1], [0], [0]>} : vector<2x8x8xbf16>, vector<2x8x8xbf16>, vector<2x8x8xf32> -> vector<2x8x8xf32>
    "tpu.trace_stop"() : () -> ()
    %429 = vector.broadcast %355 : vector<2x1x8xf32> to vector<2x8x8xf32>
    %430 = arith.addf %428, %429 : vector<2x8x8xf32>
    %cst_145 = arith.constant dense<0xFF800000> : vector<2x8xf32>
    %431 = vector.multi_reduction <maximumf>, %430, %cst_145 [2] : vector<2x8x8xf32> to vector<2x8xf32>
    %432 = vector.shape_cast %431 : vector<2x8xf32> to vector<2x8x1xf32>
    %433 = vector.broadcast %432 : vector<2x8x1xf32> to vector<2x8x8xf32>
    %434 = arith.subf %430, %433 : vector<2x8x8xf32>
    %435 = math.exp %434 : vector<2x8x8xf32>
    %cst_146 = arith.constant dense<0.000000e+00> : vector<2x8xf32>
    %436 = vector.multi_reduction <add>, %435, %cst_146 [2] : vector<2x8x8xf32> to vector<2x8xf32>
    %437 = vector.shape_cast %436 : vector<2x8xf32> to vector<2x8x1xf32>
    %438 = tpu.reciprocal %437 {approx = true} : vector<2x8x1xf32> -> vector<2x8x1xf32>
    %439 = vector.broadcast %438 : vector<2x8x1xf32> to vector<2x8x8xf32>
    %440 = arith.mulf %435, %439 : vector<2x8x8xf32>
    %441 = arith.truncf %440 : vector<2x8x8xf32> to vector<2x8x8xbf16>
    "tpu.trace_start"() <{level = 10 : i32, message = "bqk,bkd->bqd"}> : () -> ()
    %cst_147 = arith.constant dense<0.000000e+00> : vector<2x8x8xf32>
    %442 = tpu.matmul %441, %427, %cst_147 {dimension_numbers = #tpu.dot_dimension_numbers<[2], [1], [1], [2], [0, 0, 0, 1, 1, 2], [0], [0]>} : vector<2x8x8xbf16>, vector<2x8x8xbf16>, vector<2x8x8xf32> -> vector<2x8x8xf32>
    "tpu.trace_stop"() : () -> ()
    %c0_148 = arith.constant 0 : index
    %c0_149 = arith.constant 0 : index
    %c24 = arith.constant 24 : index
    %443 = vector.load %arg25[%c0_148, %c0_149, %c24] : memref<2x8x32xf32, #tpu.memory_space<vmem>>, vector<2x8x8xf32>
    tpu.vector_store %arg25[%c0_148, %c0_149, %c24], %442 {strides = array<i32>} : memref<2x8x32xf32, #tpu.memory_space<vmem>>, vector<2x8x8xf32>,
    %c0_150 = arith.constant 0 : index
    %c0_151 = arith.constant 0 : index
    %c0_152 = arith.constant 0 : index
    %444 = vector.load %arg25[%c0_150, %c0_151, %c0_152] : memref<2x8x32xf32, #tpu.memory_space<vmem>>, vector<2x8x32xf32>
    %445 = vector.shape_cast %444 : vector<2x8x32xf32> to vector<16x32xf32>
    %446 = arith.truncf %445 : vector<16x32xf32> to vector<16x32xbf16>
    %c0_153 = arith.constant 0 : index
    %c0_154 = arith.constant 0 : index
    %447 = vector.load %arg17[%c0_153, %c0_154] : memref<32x32xbf16, #tpu.memory_space<vmem>>, vector<32x32xbf16>
    %cst_155 = arith.constant dense<0.000000e+00> : vector<16x32xf32>
    %448 = tpu.matmul %446, %447, %cst_155 {dimension_numbers = #tpu.dot_dimension_numbers<[1], [0], [0], [1], [0, 0, 1, 1], [], []>} : vector<16x32xbf16>, vector<32x32xbf16>, vector<16x32xf32> -> vector<16x32xf32>
    %449 = arith.addf %316, %448 : vector<16x32xf32>
    %c0_156 = arith.constant 0 : index
    %c0_157 = arith.constant 0 : index
    %450 = vector.load %arg18[%c0_156, %c0_157] : memref<1x32xf32, #tpu.memory_space<vmem>>, vector<1x32xf32>
    %c0_158 = arith.constant 0 : index
    %c0_159 = arith.constant 0 : index
    %451 = vector.load %arg19[%c0_158, %c0_159] : memref<1x32xf32, #tpu.memory_space<vmem>>, vector<1x32xf32>
    %cst_160 = arith.constant dense<0.000000e+00> : vector<16xf32>
    %452 = vector.multi_reduction <add>, %449, %cst_160 [1] : vector<16x32xf32> to vector<16xf32>
    %453 = vector.shape_cast %452 : vector<16xf32> to vector<16x1xf32>
    %cst_161 = arith.constant 3.200000e+01 : f32
    %454 = vector.broadcast %cst_161 : f32 to vector<16x1xf32>
    %455 = arith.divf %453, %454 : vector<16x1xf32>
    %456 = vector.broadcast %455 : vector<16x1xf32> to vector<16x32xf32>
    %457 = arith.subf %449, %456 : vector<16x32xf32>
    %458 = arith.mulf %457, %457 : vector<16x32xf32>
    %cst_162 = arith.constant dense<0.000000e+00> : vector<16xf32>
    %459 = vector.multi_reduction <add>, %458, %cst_162 [1] : vector<16x32xf32> to vector<16xf32>
    %460 = vector.shape_cast %459 : vector<16xf32> to vector<16x1xf32>
    %cst_163 = arith.constant 3.200000e+01 : f32
    %461 = vector.broadcast %cst_163 : f32 to vector<16x1xf32>
    %462 = arith.divf %460, %461 : vector<16x1xf32>
    %463 = vector.broadcast %455 : vector<16x1xf32> to vector<16x32xf32>
    %464 = arith.subf %449, %463 : vector<16x32xf32>
    %cst_164 = arith.constant 9.99999974E-6 : f32
    %465 = vector.broadcast %cst_164 : f32 to vector<16x1xf32>
    %466 = arith.addf %462, %465 : vector<16x1xf32>
    %467 = math.rsqrt %466 : vector<16x1xf32>
    %468 = vector.broadcast %467 : vector<16x1xf32> to vector<16x32xf32>
    %469 = arith.mulf %464, %468 : vector<16x32xf32>
    %470 = vector.broadcast %450 : vector<1x32xf32> to vector<16x32xf32>
    %471 = arith.mulf %469, %470 : vector<16x32xf32>
    %472 = vector.broadcast %451 : vector<1x32xf32> to vector<16x32xf32>
    %473 = arith.addf %471, %472 : vector<16x32xf32>
    %474 = arith.truncf %473 : vector<16x32xf32> to vector<16x32xbf16>
    %c0_165 = arith.constant 0 : index
    %c0_166 = arith.constant 0 : index
    %475 = vector.load %arg20[%c0_165, %c0_166] : memref<32x64xbf16, #tpu.memory_space<vmem>>, vector<32x64xbf16>
    %cst_167 = arith.constant dense<0.000000e+00> : vector<16x64xf32>
    %476 = tpu.matmul %474, %475, %cst_167 {dimension_numbers = #tpu.dot_dimension_numbers<[1], [0], [0], [1], [0, 0, 1, 1], [], []>} : vector<16x32xbf16>, vector<32x64xbf16>, vector<16x64xf32> -> vector<16x64xf32>
    %c0_168 = arith.constant 0 : index
    %c0_169 = arith.constant 0 : index
    %477 = vector.load %arg21[%c0_168, %c0_169] : memref<1x64xf32, #tpu.memory_space<vmem>>, vector<1x64xf32>
    %478 = vector.broadcast %477 : vector<1x64xf32> to vector<16x64xf32>
    %479 = arith.addf %476, %478 : vector<16x64xf32>
    %cst_170 = arith.constant 0.000000e+00 : f32
    %480 = vector.broadcast %cst_170 : f32 to vector<16x64xf32>
    %481 = arith.maximumf %479, %480 : vector<16x64xf32>
    %482 = arith.truncf %481 : vector<16x64xf32> to vector<16x64xbf16>
    %c0_171 = arith.constant 0 : index
    %c0_172 = arith.constant 0 : index
    %483 = vector.load %arg22[%c0_171, %c0_172] : memref<64x32xbf16, #tpu.memory_space<vmem>>, vector<64x32xbf16>
    %cst_173 = arith.constant dense<0.000000e+00> : vector<16x32xf32>
    %484 = tpu.matmul %482, %483, %cst_173 {dimension_numbers = #tpu.dot_dimension_numbers<[1], [0], [0], [1], [0, 0, 1, 1], [], []>} : vector<16x64xbf16>, vector<64x32xbf16>, vector<16x32xf32> -> vector<16x32xf32>
    %c0_174 = arith.constant 0 : index
    %c0_175 = arith.constant 0 : index
    %485 = vector.load %arg23[%c0_174, %c0_175] : memref<1x32xf32, #tpu.memory_space<vmem>>, vector<1x32xf32>
    %486 = vector.broadcast %485 : vector<1x32xf32> to vector<16x32xf32>
    %487 = arith.addf %484, %486 : vector<16x32xf32>
    %488 = arith.addf %449, %487 : vector<16x32xf32>
    %489 = vector.shape_cast %488 : vector<16x32xf32> to vector<2x8x32xf32>
    %c0_176 = arith.constant 0 : index
    %c0_177 = arith.constant 0 : index
    %c0_178 = arith.constant 0 : index
    %490 = vector.load %arg24[%c0_176, %c0_177, %c0_178] : memref<2x8x32xf32, #tpu.memory_space<vmem>>, vector<2x8x32xf32>
    tpu.vector_store %arg24[%c0_176, %c0_177, %c0_178], %489 {strides = array<i32>} : memref<2x8x32xf32, #tpu.memory_space<vmem>>, vector<2x8x32xf32>,
    return
  }
  func.func @transform_0(%arg0: i32) -> (i32, i32, i32) {
    %c0_i32 = arith.constant 0 : i32
    %c0_i32_0 = arith.constant 0 : i32
    %c0_i32_1 = arith.constant 0 : i32
    return %arg0, %c0_i32, %c0_i32_0 : i32, i32, i32
  }
  func.func @transform_1(%arg0: i32) -> (i32, i32) {
    %c0_i32 = arith.constant 0 : i32
    %c0_i32_0 = arith.constant 0 : i32
    %c0_i32_1 = arith.constant 0 : i32
    return %c0_i32, %c0_i32_0 : i32, i32
  }
  func.func @transform_2(%arg0: i32) -> (i32, i32, i32) {
    %c0_i32 = arith.constant 0 : i32
    %c0_i32_0 = arith.constant 0 : i32
    %c0_i32_1 = arith.constant 0 : i32
    return %arg0, %c0_i32, %c0_i32_0 : i32, i32, i32
  }
  func.func @transform_3(%arg0: i32) -> (i32, i32) {
    %c0_i32 = arith.constant 0 : i32
    %c0_i32_0 = arith.constant 0 : i32
    %c0_i32_1 = arith.constant 0 : i32
    return %c0_i32, %c0_i32_0 : i32, i32
  }
  func.func @transform_4(%arg0: i32) -> (i32, i32) {
    %c0_i32 = arith.constant 0 : i32
    %c0_i32_0 = arith.constant 0 : i32
    %c0_i32_1 = arith.constant 0 : i32
    return %c0_i32, %c0_i32_0 : i32, i32
  }
  func.func @transform_5(%arg0: i32) -> (i32, i32) {
    %c0_i32 = arith.constant 0 : i32
    %c0_i32_0 = arith.constant 0 : i32
    %c0_i32_1 = arith.constant 0 : i32
    return %c0_i32, %c0_i32_0 : i32, i32
  }
  func.func @transform_6(%arg0: i32) -> (i32, i32) {
    %c0_i32 = arith.constant 0 : i32
    %c0_i32_0 = arith.constant 0 : i32
    %c0_i32_1 = arith.constant 0 : i32
    return %c0_i32, %c0_i32_0 : i32, i32
  }
  func.func @transform_7(%arg0: i32) -> (i32, i32) {
    %c0_i32 = arith.constant 0 : i32
    %c0_i32_0 = arith.constant 0 : i32
    %c0_i32_1 = arith.constant 0 : i32
    return %c0_i32, %c0_i32_0 : i32, i32
  }
  func.func @transform_8(%arg0: i32) -> (i32, i32) {
    %c0_i32 = arith.constant 0 : i32
    %c0_i32_0 = arith.constant 0 : i32
    %c0_i32_1 = arith.constant 0 : i32
    return %c0_i32, %c0_i32_0 : i32, i32
  }
  func.func @transform_9(%arg0: i32) -> (i32, i32) {
    %c0_i32 = arith.constant 0 : i32
    %c0_i32_0 = arith.constant 0 : i32
    %c0_i32_1 = arith.constant 0 : i32
    return %c0_i32, %c0_i32_0 : i32, i32
  }
  func.func @transform_10(%arg0: i32) -> (i32, i32) {
    %c0_i32 = arith.constant 0 : i32
    %c0_i32_0 = arith.constant 0 : i32
    %c0_i32_1 = arith.constant 0 : i32
    return %c0_i32, %c0_i32_0 : i32, i32
  }
  func.func @transform_11(%arg0: i32) -> (i32, i32) {
    %c0_i32 = arith.constant 0 : i32
    %c0_i32_0 = arith.constant 0 : i32
    %c0_i32_1 = arith.constant 0 : i32
    return %c0_i32, %c0_i32_0 : i32, i32
  }
  func.func @transform_12(%arg0: i32) -> (i32, i32) {
    %c0_i32 = arith.constant 0 : i32
    %c0_i32_0 = arith.constant 0 : i32
    %c0_i32_1 = arith.constant 0 : i32
    return %c0_i32, %c0_i32_0 : i32, i32
  }
  func.func @transform_13(%arg0: i32) -> (i32, i32) {
    %c0_i32 = arith.constant 0 : i32
    %c0_i32_0 = arith.constant 0 : i32
    %c0_i32_1 = arith.constant 0 : i32
    return %c0_i32, %c0_i32_0 : i32, i32
  }
  func.func @transform_14(%arg0: i32) -> (i32, i32) {
    %c0_i32 = arith.constant 0 : i32
    %c0_i32_0 = arith.constant 0 : i32
    %c0_i32_1 = arith.constant 0 : i32
    return %c0_i32, %c0_i32_0 : i32, i32
  }
  func.func @transform_15(%arg0: i32) -> (i32, i32) {
    %c0_i32 = arith.constant 0 : i32
    %c0_i32_0 = arith.constant 0 : i32
    %c0_i32_1 = arith.constant 0 : i32
    return %c0_i32, %c0_i32_0 : i32, i32
  }
  func.func @transform_16(%arg0: i32) -> (i32, i32) {
    %c0_i32 = arith.constant 0 : i32
    %c0_i32_0 = arith.constant 0 : i32
    %c0_i32_1 = arith.constant 0 : i32
    return %c0_i32, %c0_i32_0 : i32, i32
  }
  func.func @transform_17(%arg0: i32) -> (i32, i32) {
    %c0_i32 = arith.constant 0 : i32
    %c0_i32_0 = arith.constant 0 : i32
    %c0_i32_1 = arith.constant 0 : i32
    return %c0_i32, %c0_i32_0 : i32, i32
  }
  func.func @transform_18(%arg0: i32) -> (i32, i32) {
    %c0_i32 = arith.constant 0 : i32
    %c0_i32_0 = arith.constant 0 : i32
    %c0_i32_1 = arith.constant 0 : i32
    return %c0_i32, %c0_i32_0 : i32, i32
  }
  func.func @transform_19(%arg0: i32) -> (i32, i32) {
    %c0_i32 = arith.constant 0 : i32
    %c0_i32_0 = arith.constant 0 : i32
    %c0_i32_1 = arith.constant 0 : i32
    return %c0_i32, %c0_i32_0 : i32, i32
  }
  func.func @transform_20(%arg0: i32) -> (i32, i32) {
    %c0_i32 = arith.constant 0 : i32
    %c0_i32_0 = arith.constant 0 : i32
    %c0_i32_1 = arith.constant 0 : i32
    return %c0_i32, %c0_i32_0 : i32, i32
  }
  func.func @transform_21(%arg0: i32) -> (i32, i32) {
    %c0_i32 = arith.constant 0 : i32
    %c0_i32_0 = arith.constant 0 : i32
    %c0_i32_1 = arith.constant 0 : i32
    return %c0_i32, %c0_i32_0 : i32, i32
  }
  func.func @transform_22(%arg0: i32) -> (i32, i32) {
    %c0_i32 = arith.constant 0 : i32
    %c0_i32_0 = arith.constant 0 : i32
    %c0_i32_1 = arith.constant 0 : i32
    return %c0_i32, %c0_i32_0 : i32, i32
  }
  func.func @transform_23(%arg0: i32) -> (i32, i32, i32) {
    %c0_i32 = arith.constant 0 : i32
    %c0_i32_0 = arith.constant 0 : i32
    %c0_i32_1 = arith.constant 0 : i32
    return %arg0, %c0_i32, %c0_i32_0 : i32, i32, i32
  }
}

</mosaic_0001>

<llo_original>
// kernel: transformer_encoder.1
$region0: #{transformer_encoder.1}
  #allocation0 [shape = 'u32[]', space=smem, size = 0x4, offset = 0x4, fixed_abs, tag = 'smem constant byte address 0x4 - core index']
  #allocation1 [shape = 'u32[144,128]{1,0:T(1,128)}', space=vmem, size = 0x12000, scoped, tag = 'internal scratch']
  #allocation2 [shape = 'f32[2,8,32]{2,1,0:T(8,128)}', space=vmem, size = 0x2000, scoped, tag = 'scratch operand']
  %s0 = inlined_call_operand.vmem [shape: f32[2,8,32], index: 0, kind: input, shape index: {}]
  %s1 = inlined_call_operand.vmem [shape: f32[8,32], index: 1, kind: input, shape index: {}]
  %s2 = inlined_call_operand.vmem [shape: s32[2,1,8], index: 2, kind: input, shape index: {}]
  %s3 = inlined_call_operand.vmem [shape: f32[1,32], index: 3, kind: input, shape index: {}]
  %s4 = inlined_call_operand.vmem [shape: f32[1,32], index: 4, kind: input, shape index: {}]
  %s5 = inlined_call_operand.vmem [shape: f32[7,32], index: 5, kind: input, shape index: {}]
  %s6 = inlined_call_operand.vmem [shape: bf16[32,32], index: 6, kind: input, shape index: {}]
  %s7 = inlined_call_operand.vmem [shape: f32[1,32], index: 7, kind: input, shape index: {}]
  %s8 = inlined_call_operand.vmem [shape: f32[1,32], index: 8, kind: input, shape index: {}]
  %s9 = inlined_call_operand.vmem [shape: f32[1,32], index: 9, kind: input, shape index: {}]
  %s10 = inlined_call_operand.vmem [shape: f32[7,32], index: 10, kind: input, shape index: {}]
  %s11 = inlined_call_operand.vmem [shape: bf16[32,32], index: 11, kind: input, shape index: {}]
  %s12 = inlined_call_operand.vmem [shape: f32[1,32], index: 12, kind: input, shape index: {}]
  %s13 = inlined_call_operand.vmem [shape: f32[1,32], index: 13, kind: input, shape index: {}]
  %s14 = inlined_call_operand.vmem [shape: f32[1,32], index: 14, kind: input, shape index: {}]
  %s15 = inlined_call_operand.vmem [shape: bf16[32,96], index: 15, kind: input, shape index: {}]
  %s16 = inlined_call_operand.vmem [shape: bf16[32,32], index: 16, kind: input, shape index: {}]
  %s17 = inlined_call_operand.vmem [shape: f32[1,32], index: 17, kind: input, shape index: {}]
  %s18 = inlined_call_operand.vmem [shape: f32[1,32], index: 18, kind: input, shape index: {}]
  %s19 = inlined_call_operand.vmem [shape: bf16[32,64], index: 19, kind: input, shape index: {}]
  %s20 = inlined_call_operand.vmem [shape: f32[1,64], index: 20, kind: input, shape index: {}]
  %s21 = inlined_call_operand.vmem [shape: bf16[64,32], index: 21, kind: input, shape index: {}]
  %s22 = inlined_call_operand.vmem [shape: f32[1,32], index: 22, kind: input, shape index: {}]
  %s23 = inlined_call_operand.hbm [shape: f32[2,8,32], index: 23, kind: output, shape index: {}]
  %s24 = sld [smem:[#allocation0]]
  $region102: #{transformer_encoder.1} parent=0
    _
  %s26 = ssub.s32 1, %s24
  %s27 = scalar_select 0, %s26, %s24
  $region1: #{transformer_encoder.1} parent=0
    #allocation3 [shape = 'u8[8192]{0}', space=vmem, size = 0x2000, scoped, tag = 'output window, operand 0, single buffered']
    #allocation4 [shape = 's32[1]{0}', space=sflag, size = 0x4, scoped, tag = 'scoped memory for transformer_encoder.1']
    %28 = vsyncpa [#allocation4], 0
    // Predicated region
    $region2: #{transformer_encoder.1} parent=1 // pred_check
      _
    $region3: #{transformer_encoder.1} parent=1 // pred_check_branch
      %30 = sbr.rel (0) target = $region5
    $region4: #{transformer_encoder.1} parent=1 // pred_region
      _
    $region5: #{transformer_encoder.1} parent=1 // pred_fallthru
      _
    // Predicated region
    $region6: #{transformer_encoder.1} parent=1 // pred_check
      _
    $region7: #{transformer_encoder.1} parent=1 // pred_check_branch
      %32 = sbr.rel (0) target = $region9
    $region8: #{transformer_encoder.1} parent=1 // pred_region
      _
    $region9: #{transformer_encoder.1} parent=1 // pred_fallthru
      _
    // Predicated region
    $region10: #{transformer_encoder.1} parent=1 // pred_check
      _
    $region11: #{transformer_encoder.1} parent=1 // pred_check_branch
      %34 = sbr.rel (0) target = $region13
    $region12: #{transformer_encoder.1} parent=1 // pred_region
      _
    $region13: #{transformer_encoder.1} parent=1 // pred_fallthru
      _
    // Predicated region
    $region14: #{transformer_encoder.1} parent=1 // pred_check
      _
    $region15: #{transformer_encoder.1} parent=1 // pred_check_branch
      %36 = sbr.rel (0) target = $region17
    $region16: #{transformer_encoder.1} parent=1 // pred_region
      _
    $region17: #{transformer_encoder.1} parent=1 // pred_fallthru
      _
    // Predicated region
    $region18: #{transformer_encoder.1} parent=1 // pred_check
      _
    $region19: #{transformer_encoder.1} parent=1 // pred_check_branch
      %38 = sbr.rel (0) target = $region21
    $region20: #{transformer_encoder.1} parent=1 // pred_region
      _
    $region21: #{transformer_encoder.1} parent=1 // pred_fallthru
      _
    // Predicated region
    $region22: #{transformer_encoder.1} parent=1 // pred_check
      _
    $region23: #{transformer_encoder.1} parent=1 // pred_check_branch
      %40 = sbr.rel (0) target = $region25
    $region24: #{transformer_encoder.1} parent=1 // pred_region
      _
    $region25: #{transformer_encoder.1} parent=1 // pred_fallthru
      _
    // Predicated region
    $region26: #{transformer_encoder.1} parent=1 // pred_check
      _
    $region27: #{transformer_encoder.1} parent=1 // pred_check_branch
      %42 = sbr.rel (0) target = $region29
    $region28: #{transformer_encoder.1} parent=1 // pred_region
      _
    $region29: #{transformer_encoder.1} parent=1 // pred_fallthru
      _
    // Predicated region
    $region30: #{transformer_encoder.1} parent=1 // pred_check
      _
    $region31: #{transformer_encoder.1} parent=1 // pred_check_branch
      %44 = sbr.rel (0) target = $region33
    $region32: #{transformer_encoder.1} parent=1 // pred_region
      _
    $region33: #{transformer_encoder.1} parent=1 // pred_fallthru
      _
    // Predicated region
    $region34: #{transformer_encoder.1} parent=1 // pred_check
      _
    $region35: #{transformer_encoder.1} parent=1 // pred_check_branch
      %46 = sbr.rel (0) target = $region37
    $region36: #{transformer_encoder.1} parent=1 // pred_region
      _
    $region37: #{transformer_encoder.1} parent=1 // pred_fallthru
      _
    // Predicated region
    $region38: #{transformer_encoder.1} parent=1 // pred_check
      _
    $region39: #{transformer_encoder.1} parent=1 // pred_check_branch
      %48 = sbr.rel (0) target = $region41
    $region40: #{transformer_encoder.1} parent=1 // pred_region
      _
    $region41: #{transformer_encoder.1} parent=1 // pred_fallthru
      _
    // Predicated region
    $region42: #{transformer_encoder.1} parent=1 // pred_check
      _
    $region43: #{transformer_encoder.1} parent=1 // pred_check_branch
      %50 = sbr.rel (0) target = $region45
    $region44: #{transformer_encoder.1} parent=1 // pred_region
      _
    $region45: #{transformer_encoder.1} parent=1 // pred_fallthru
      _
    // Predicated region
    $region46: #{transformer_encoder.1} parent=1 // pred_check
      _
    $region47: #{transformer_encoder.1} parent=1 // pred_check_branch
      %52 = sbr.rel (0) target = $region49
    $region48: #{transformer_encoder.1} parent=1 // pred_region
      _
    $region49: #{transformer_encoder.1} parent=1 // pred_fallthru
      _
    // Predicated region
    $region50: #{transformer_encoder.1} parent=1 // pred_check
      _
    $region51: #{transformer_encoder.1} parent=1 // pred_check_branch
      %54 = sbr.rel (0) target = $region53
    $region52: #{transformer_encoder.1} parent=1 // pred_region
      _
    $region53: #{transformer_encoder.1} parent=1 // pred_fallthru
      _
    // Predicated region
    $region54: #{transformer_encoder.1} parent=1 // pred_check
      _
    $region55: #{transformer_encoder.1} parent=1 // pred_check_branch
      %56 = sbr.rel (0) target = $region57
    $region56: #{transformer_encoder.1} parent=1 // pred_region
      _
    $region57: #{transformer_encoder.1} parent=1 // pred_fallthru
      _
    // Predicated region
    $region58: #{transformer_encoder.1} parent=1 // pred_check
      _
    $region59: #{transformer_encoder.1} parent=1 // pred_check_branch
      %58 = sbr.rel (0) target = $region61
    $region60: #{transformer_encoder.1} parent=1 // pred_region
      _
    $region61: #{transformer_encoder.1} parent=1 // pred_fallthru
      _
    // Predicated region
    $region62: #{transformer_encoder.1} parent=1 // pred_check
      _
    $region63: #{transformer_encoder.1} parent=1 // pred_check_branch
      %60 = sbr.rel (0) target = $region65
    $region64: #{transformer_encoder.1} parent=1 // pred_region
      _
    $region65: #{transformer_encoder.1} parent=1 // pred_fallthru
      _
    // Predicated region
    $region66: #{transformer_encoder.1} parent=1 // pred_check
      _
    $region67: #{transformer_encoder.1} parent=1 // pred_check_branch
      %62 = sbr.rel (0) target = $region69
    $region68: #{transformer_encoder.1} parent=1 // pred_region
      _
    $region69: #{transformer_encoder.1} parent=1 // pred_fallthru
      _
    // Predicated region
    $region70: #{transformer_encoder.1} parent=1 // pred_check
      _
    $region71: #{transformer_encoder.1} parent=1 // pred_check_branch
      %64 = sbr.rel (0) target = $region73
    $region72: #{transformer_encoder.1} parent=1 // pred_region
      _
    $region73: #{transformer_encoder.1} parent=1 // pred_fallthru
      _
    // Predicated region
    $region74: #{transformer_encoder.1} parent=1 // pred_check
      _
    $region75: #{transformer_encoder.1} parent=1 // pred_check_branch
      %66 = sbr.rel (0) target = $region77
    $region76: #{transformer_encoder.1} parent=1 // pred_region
      _
    $region77: #{transformer_encoder.1} parent=1 // pred_fallthru
      _
    // Predicated region
    $region78: #{transformer_encoder.1} parent=1 // pred_check
      _
    $region79: #{transformer_encoder.1} parent=1 // pred_check_branch
      %68 = sbr.rel (0) target = $region81
    $region80: #{transformer_encoder.1} parent=1 // pred_region
      _
    $region81: #{transformer_encoder.1} parent=1 // pred_fallthru
      _
    // Predicated region
    $region82: #{transformer_encoder.1} parent=1 // pred_check
      _
    $region83: #{transformer_encoder.1} parent=1 // pred_check_branch
      %70 = sbr.rel (0) target = $region85
    $region84: #{transformer_encoder.1} parent=1 // pred_region
      _
    $region85: #{transformer_encoder.1} parent=1 // pred_fallthru
      _
    // Predicated region
    $region86: #{transformer_encoder.1} parent=1 // pred_check
      _
    $region87: #{transformer_encoder.1} parent=1 // pred_check_branch
      %72 = sbr.rel (0) target = $region89
    $region88: #{transformer_encoder.1} parent=1 // pred_region
      _
    $region89: #{transformer_encoder.1} parent=1 // pred_fallthru
      _
    // Predicated region
    $region90: #{transformer_encoder.1} parent=1 // pred_check
      _
    $region91: #{transformer_encoder.1} parent=1 // pred_check_branch
      %74 = sbr.rel (0) target = $region93
    $region92: #{transformer_encoder.1} parent=1 // pred_region
      _
    $region93: #{transformer_encoder.1} parent=1 // pred_fallthru
      _
    %v76 = vld [vmem:[%s0] sm:$0xff]
    %v77 = vld [vmem:[%s0 + $0x8] sm:$0xff]
    %v78 = vld [vmem:[%s1] sm:$0xff]
    %v79 = vadd.f32 %v76, %v78
    %v80 = vadd.f32 %v77, %v78
    %v81 = vlaneseq
    %v82 = vshrl.u32 %v81, 7
    %v83 = vadd.s32 %v82, 8
    %vm84 = vcmp.lt.s32.totalorder %v82, 0
    %v85 = vsub.s32 0, %v82
    %v86 = vsel %vm84, %v85, %v82
    %v87 = vshrl.u32 %v86, 3
    %v88 = vand.u32 %v86, 7
    %v89 = vsub.s32 0, %v88
    %v90 = vsel %vm84, %v89, %v88
    %vm91 = vcmp.lt.s32.totalorder %v83, 0
    %v92 = vsub.s32 0, %v83
    %v93 = vsel %vm91, %v92, %v83
    %v94 = vshrl.u32 %v93, 3
    %v95 = vand.u32 %v93, 7
    %v96 = vsub.s32 0, %v95
    %v97 = vsel %vm91, %v96, %v95
    %vm98 = vcmp.ne.s32.totalorder %v90, 0
    %vm99 = vcmp.ne.s32.totalorder %v97, 0
    %vm100 = vcmp.lt.s32.totalorder %v90, 0
    %vm101 = vcmp.lt.s32.totalorder %v97, 0
    %vm102 = vmand %vm100, %vm98
    %vm103 = vmand %vm101, %vm99
    %v104 = vadd.s32 %v90, 8
    %v105 = vadd.s32 %v97, 8
    %v106 = vsel %vm102, %v104, %v90
    %v107 = vsel %vm103, %v105, %v97
    %v108 = vld [vmem:[%s3] sm:$0x1]
    %v109 = vld [vmem:[%s4] sm:$0x1]
    %vm110 = vcmask 261120
    %v111 = vsel %vm110, %v79, 0.0
    %112 = vadd.xlane.f32.xlu0 %v111
    %v113 = vpop.xlane.xlu0 %112
    %v114 = vsel %vm110, %v80, 0.0
    %115 = vadd.xlane.f32.xlu0 %v114
    %v116 = vpop.xlane.xlu0 %115
    %v117 = vrcp.pop 32.0
    %v118 = vmul.f32 %v113, %v117
    %v119 = vmul.f32 %v116, %v117
    %v120 = vsub.f32 %v79, %v118
    %v121 = vsub.f32 %v80, %v119
    %v122 = vmul.f32 %v120, %v120
    %v123 = vmul.f32 %v121, %v121
    %v124 = vsel %vm110, %v122, 0.0
    %125 = vadd.xlane.f32.xlu0 %v124
    %v126 = vpop.xlane.xlu0 %125
    %v127 = vsel %vm110, %v123, 0.0
    %128 = vadd.xlane.f32.xlu0 %v127
    %v129 = vpop.xlane.xlu0 %128
    %v130 = vmul.f32 %v126, %v117
    %v131 = vmul.f32 %v129, %v117
    %v132 = vadd.f32 %v130, 1e-05
    %v133 = vadd.f32 %v131, 1e-05
    %v134 = vrsqrt.pop %v132
    %v135 = vrsqrt.pop %v133
    %v136 = vmul.f32 %v120, %v134
    %v137 = vmul.f32 %v121, %v135
    %v139 = vlaneseq
    %v140 = vshrl.u32 %v139, 7
    %v141 = vsub.s32 0, %v140
    %v142 = vrot.slane %v108, %v141
    %v144 = vmul.f32 %v136, %v142
    %v145 = vmul.f32 %v137, %v142
    %v147 = vlaneseq
    %v148 = vshrl.u32 %v147, 7
    %v149 = vsub.s32 0, %v148
    %v150 = vrot.slane %v109, %v149
    %v152 = vadd.f32 %v144, %v150
    %v153 = vadd.f32 %v145, %v150
    %v154 = vld [vmem:[%s5] sm:$0x7f]
    %v155 = vrot.slane %v152, 5
    %v156 = vrot.slane %v153, 5
    %vm157 = vcmp.lt.s32.totalorder %v82, 3
    %v158 = vsel %vm157, %v155, %v156
    %v159 = vsel %vm157, %v156, %v155
    %v160 = vadd.s32 %v106, 4294967293
    %v161 = vadd.s32 %v107, 4294967293
    %vm162 = vcmp.ge.s32.totalorder %v160, 0
    %vm163 = vcmp.ge.s32.totalorder %v161, 0
    %vm164 = vcmp.lt.s32.totalorder %v160, 8
    %vm165 = vcmp.lt.s32.totalorder %v161, 8
    %vm166 = vmand %vm162, %vm164
    %vm167 = vmand %vm163, %vm165
    %v168 = vsel %vm166, 1, 0
    %v169 = vsel %vm167, 1, 0
    %vm170 = vcmp.eq.s32.totalorder %v168, 1
    %vm171 = vcmp.eq.s32.totalorder %v169, 1
    %v172 = vsel %vm170, %v159, 0.0
    %v173 = vsel %vm171, %v158, 0.0
    %v174 = vlaneseq
    %v175 = vshrl.u32 %v174, 7
    %v176 = vsub.s32 0, %v175
    %v177 = vrot.slane %v154, %v176
    %v178 = vmul.f32 %v172, %v177
    %v179 = vmul.f32 %v173, %v177
    %v180 = vadd.f32 %v178, 0.0
    %v181 = vadd.f32 %v179, 0.0
    %v182 = vrot.slane %v152, 6
    %v183 = vrot.slane %v153, 6
    %vm184 = vcmp.lt.s32.totalorder %v82, 2
    %v185 = vsel %vm184, %v182, %v183
    %v186 = vsel %vm184, %v183, %v182
    %v187 = vadd.s32 %v106, 4294967294
    %v188 = vadd.s32 %v107, 4294967294
    %vm189 = vcmp.ge.s32.totalorder %v187, 0
    %vm190 = vcmp.ge.s32.totalorder %v188, 0
    %vm191 = vcmp.lt.s32.totalorder %v187, 8
    %vm192 = vcmp.lt.s32.totalorder %v188, 8
    %vm193 = vmand %vm189, %vm191
    %vm194 = vmand %vm190, %vm192
    %v195 = vsel %vm193, 1, 0
    %v196 = vsel %vm194, 1, 0
    %vm197 = vcmp.eq.s32.totalorder %v195, 1
    %vm198 = vcmp.eq.s32.totalorder %v196, 1
    %v199 = vsel %vm197, %v186, 0.0
    %v200 = vsel %vm198, %v185, 0.0
    %v201 = vlaneseq
    %v202 = vshrl.u32 %v201, 7
    %v203 = vsub.s32 1, %v202
    %v204 = vrot.slane %v154, %v203
    %v205 = vmul.f32 %v199, %v204
    %v206 = vmul.f32 %v200, %v204
    %v207 = vadd.f32 %v180, %v205
    %v208 = vadd.f32 %v181, %v206
    %v209 = vrot.slane %v152, 7
    %v210 = vrot.slane %v153, 7
    %vm211 = vcmp.lt.s32.totalorder %v82, 1
    %v212 = vsel %vm211, %v209, %v210
    %v213 = vsel %vm211, %v210, %v209
    %v214 = vadd.s32 %v106, 4294967295
    %v215 = vadd.s32 %v107, 4294967295
    %vm216 = vcmp.ge.s32.totalorder %v214, 0
    %vm217 = vcmp.ge.s32.totalorder %v215, 0
    %vm218 = vcmp.lt.s32.totalorder %v214, 8
    %vm219 = vcmp.lt.s32.totalorder %v215, 8
    %vm220 = vmand %vm216, %vm218
    %vm221 = vmand %vm217, %vm219
    %v222 = vsel %vm220, 1, 0
    %v223 = vsel %vm221, 1, 0
    %vm224 = vcmp.eq.s32.totalorder %v222, 1
    %vm225 = vcmp.eq.s32.totalorder %v223, 1
    %v226 = vsel %vm224, %v213, 0.0
    %v227 = vsel %vm225, %v212, 0.0
    %v228 = vlaneseq
    %v229 = vshrl.u32 %v228, 7
    %v230 = vsub.s32 2, %v229
    %v231 = vrot.slane %v154, %v230
    %v232 = vmul.f32 %v226, %v231
    %v233 = vmul.f32 %v227, %v231
    %v234 = vadd.f32 %v207, %v232
    %v235 = vadd.f32 %v208, %v233
    %v236 = vlaneseq
    %v237 = vshrl.u32 %v236, 7
    %v238 = vsub.s32 3, %v237
    %v239 = vrot.slane %v154, %v238
    %v240 = vmul.f32 %v152, %v239
    %v241 = vmul.f32 %v153, %v239
    %v242 = vadd.f32 %v234, %v240
    %v243 = vadd.f32 %v235, %v241
    %v244 = vrot.slane %v152, 1
    %v245 = vrot.slane %v153, 1
    %vm246 = vcmp.lt.s32.totalorder %v82, 7
    %v247 = vsel %vm246, %v244, %v245
    %v248 = vsel %vm246, %v245, %v244
    %v249 = vadd.s32 %v106, 1
    %v250 = vadd.s32 %v107, 1
    %vm251 = vcmp.ge.s32.totalorder %v249, 0
    %vm252 = vcmp.ge.s32.totalorder %v250, 0
    %vm253 = vcmp.lt.s32.totalorder %v249, 8
    %vm254 = vcmp.lt.s32.totalorder %v250, 8
    %vm255 = vmand %vm251, %vm253
    %vm256 = vmand %vm252, %vm254
    %v257 = vsel %vm255, 1, 0
    %v258 = vsel %vm256, 1, 0
    %vm259 = vcmp.eq.s32.totalorder %v257, 1
    %vm260 = vcmp.eq.s32.totalorder %v258, 1
    %v261 = vsel %vm259, %v247, 0.0
    %v262 = vsel %vm260, %v248, 0.0
    %v263 = vlaneseq
    %v264 = vshrl.u32 %v263, 7
    %v265 = vsub.s32 4, %v264
    %v266 = vrot.slane %v154, %v265
    %v267 = vmul.f32 %v261, %v266
    %v268 = vmul.f32 %v262, %v266
    %v269 = vadd.f32 %v242, %v267
    %v270 = vadd.f32 %v243, %v268
    %v271 = vrot.slane %v152, 2
    %v272 = vrot.slane %v153, 2
    %vm273 = vcmp.lt.s32.totalorder %v82, 6
    %v274 = vsel %vm273, %v271, %v272
    %v275 = vsel %vm273, %v272, %v271
    %v276 = vadd.s32 %v106, 2
    %v277 = vadd.s32 %v107, 2
    %vm278 = vcmp.ge.s32.totalorder %v276, 0
    %vm279 = vcmp.ge.s32.totalorder %v277, 0
    %vm280 = vcmp.lt.s32.totalorder %v276, 8
    %vm281 = vcmp.lt.s32.totalorder %v277, 8
    %vm282 = vmand %vm278, %vm280
    %vm283 = vmand %vm279, %vm281
    %v284 = vsel %vm282, 1, 0
    %v285 = vsel %vm283, 1, 0
    %vm286 = vcmp.eq.s32.totalorder %v284, 1
    %vm287 = vcmp.eq.s32.totalorder %v285, 1
    %v288 = vsel %vm286, %v274, 0.0
    %v289 = vsel %vm287, %v275, 0.0
    %v290 = vlaneseq
    %v291 = vshrl.u32 %v290, 7
    %v292 = vsub.s32 5, %v291
    %v293 = vrot.slane %v154, %v292
    %v294 = vmul.f32 %v288, %v293
    %v295 = vmul.f32 %v289, %v293
    %v296 = vadd.f32 %v269, %v294
    %v297 = vadd.f32 %v270, %v295
    %v298 = vrot.slane %v152, 3
    %v299 = vrot.slane %v153, 3
    %vm300 = vcmp.lt.s32.totalorder %v82, 5
    %v301 = vsel %vm300, %v298, %v299
    %v302 = vsel %vm300, %v299, %v298
    %v303 = vadd.s32 %v106, 3
    %v304 = vadd.s32 %v107, 3
    %vm305 = vcmp.ge.s32.totalorder %v303, 0
    %vm306 = vcmp.ge.s32.totalorder %v304, 0
    %vm307 = vcmp.lt.s32.totalorder %v303, 8
    %vm308 = vcmp.lt.s32.totalorder %v304, 8
    %vm309 = vmand %vm305, %vm307
    %vm310 = vmand %vm306, %vm308
    %v311 = vsel %vm309, 1, 0
    %v312 = vsel %vm310, 1, 0
    %vm313 = vcmp.eq.s32.totalorder %v311, 1
    %vm314 = vcmp.eq.s32.totalorder %v312, 1
    %v315 = vsel %vm313, %v301, 0.0
    %v316 = vsel %vm314, %v302, 0.0
    %v317 = vlaneseq
    %v318 = vshrl.u32 %v317, 7
    %v319 = vsub.s32 6, %v318
    %v320 = vrot.slane %v154, %v319
    %v321 = vmul.f32 %v315, %v320
    %v322 = vmul.f32 %v316, %v320
    %v323 = vadd.f32 %v296, %v321
    %v324 = vadd.f32 %v297, %v322
    %v325 = vpack.c.bf16 %v324, %v323
    %v326 = vld [vmem:[%s6] sm:$0xf]
    %v327 = vld [vmem:[%s6 + $0x4] sm:$0xf]
    %v328 = vld [vmem:[%s6 + $0x8] sm:$0xf]
    %v329 = vld [vmem:[%s6 + $0xc] sm:$0xf]
    %v330 = vld [vmem:[%s7] sm:$0x1]
    %v332 = vlaneseq
    %v333 = vshrl.u32 %v332, 7
    %v334 = vsub.s32 0, %v333
    %v335 = vrot.slane %v330, %v334
    %v341 = vunpack.c.l.b16 %v326
    %v342 = vunpack.c.l.b16 %v327
    %v343 = vunpack.c.l.b16 %v328
    %v344 = vunpack.c.l.b16 %v329
    %v345 = vpack.c.b16 %v342, %v341
    %v346 = vpack.c.b16 %v344, %v343
    %v350 = vsel %vm110, %v325, 0
    %352 = vmatprep.subr.bf16.mxu0 0
    %353 = vmatpush1.bf16.msra.mxu0 %v345
    %354 = vmatprep.subr.bf16.mxu0 0
    %355 = vmatpush1.bf16.msra.mxu0 %v346
    %356 = vmatprep.subr.bf16.mxu0 0
    %357 = vmatpush1.bf16.msra.mxu0 0
    %358 = vmatprep.subr.bf16.mxu0 0
    %359 = vmatpush1.bf16.msra.mxu0 0
    %360 = vmatprep.subr.bf16.mxu0 0
    %361 = vmatpush1.bf16.msra.mxu0 0
    %362 = vmatprep.subr.bf16.mxu0 0
    %363 = vmatpush1.bf16.msra.mxu0 0
    %364 = vmatprep.subr.bf16.mxu0 0
    %365 = vmatpush1.bf16.msra.mxu0 0
    %366 = vmatprep.subr.bf16.mxu0 0
    %367 = vmatpush1.bf16.msra.mxu0 0
    %368 = vmatprep.subr.bf16.mxu0 0
    %369 = vmatpush1.bf16.msra.mxu0 0
    %370 = vmatprep.subr.bf16.mxu0 0
    %371 = vmatpush1.bf16.msra.mxu0 0
    %372 = vmatprep.subr.bf16.mxu0 0
    %373 = vmatpush1.bf16.msra.mxu0 0
    %374 = vmatprep.subr.bf16.mxu0 0
    %375 = vmatpush1.bf16.msra.mxu0 0
    %376 = vmatprep.subr.bf16.mxu0 0
    %377 = vmatpush1.bf16.msra.mxu0 0
    %378 = vmatprep.subr.bf16.mxu0 0
    %379 = vmatpush1.bf16.msra.mxu0 0
    %380 = vmatprep.subr.bf16.mxu0 0
    %381 = vmatpush1.bf16.msra.mxu0 0
    %382 = vmatprep.subr.bf16.mxu0 0
    %383 = vmatpush1.bf16.msra.mxu0 0
    %384 = vmatprep.mubr.bf16.mxu0 0
    %385 = vmatmul.mubr.bf16.gmra.mrb[0].mxu0 %v350
    %v386 = vpop.f32.mrb[0].mxu0
    %v387 = vadd.f32 %v335, %v386
    %v388 = vpop.f32.mrb[0].mxu0
    %v389 = vpop.f32.mrb[0].mxu0
    %v390 = vadd.f32 %v335, %v389
    %v391 = vpop.f32.mrb[0].mxu0
    %392 = vdwg.mxu0
    %v393 = vmax.f32 %v387, 0.0
    %v394 = vmax.f32 %v390, 0.0
    %v395 = vadd.f32 %v79, %v393
    %v396 = vadd.f32 %v80, %v394
    %v397 = vld [vmem:[%s8] sm:$0x1]
    %v398 = vld [vmem:[%s9] sm:$0x1]
    %v399 = vsel %vm110, %v395, 0.0
    %400 = vadd.xlane.f32.xlu0 %v399
    %v401 = vpop.xlane.xlu0 %400
    %v402 = vsel %vm110, %v396, 0.0
    %403 = vadd.xlane.f32.xlu0 %v402
    %v404 = vpop.xlane.xlu0 %403
    %v405 = vmul.f32 %v401, %v117
    %v406 = vmul.f32 %v404, %v117
    %v407 = vsub.f32 %v395, %v405
    %v408 = vsub.f32 %v396, %v406
    %v409 = vmul.f32 %v407, %v407
    %v410 = vmul.f32 %v408, %v408
    %v411 = vsel %vm110, %v409, 0.0
    %412 = vadd.xlane.f32.xlu0 %v411
    %v413 = vpop.xlane.xlu0 %412
    %v414 = vsel %vm110, %v410, 0.0
    %415 = vadd.xlane.f32.xlu0 %v414
    %v416 = vpop.xlane.xlu0 %415
    %v417 = vmul.f32 %v413, %v117
    %v418 = vmul.f32 %v416, %v117
    %v419 = vadd.f32 %v417, 1e-05
    %v420 = vadd.f32 %v418, 1e-05
    %v421 = vrsqrt.pop %v419
    %v422 = vrsqrt.pop %v420
    %v423 = vmul.f32 %v407, %v421
    %v424 = vmul.f32 %v408, %v422
    %v426 = vlaneseq
    %v427 = vshrl.u32 %v426, 7
    %v428 = vsub.s32 0, %v427
    %v429 = vrot.slane %v397, %v428
    %v431 = vmul.f32 %v423, %v429
    %v432 = vmul.f32 %v424, %v429
    %v434 = vlaneseq
    %v435 = vshrl.u32 %v434, 7
    %v436 = vsub.s32 0, %v435
    %v437 = vrot.slane %v398, %v436
    %v439 = vadd.f32 %v431, %v437
    %v440 = vadd.f32 %v432, %v437
    %v441 = vld [vmem:[%s10] sm:$0x7f]
    %v442 = vrot.slane %v439, 5
    %v443 = vrot.slane %v440, 5
    %v444 = vsel %vm157, %v442, %v443
    %v445 = vsel %vm157, %v443, %v442
    %v446 = vsel %vm170, %v445, 0.0
    %v447 = vsel %vm171, %v444, 0.0
    %v448 = vlaneseq
    %v449 = vshrl.u32 %v448, 7
    %v450 = vsub.s32 0, %v449
    %v451 = vrot.slane %v441, %v450
    %v452 = vmul.f32 %v446, %v451
    %v453 = vmul.f32 %v447, %v451
    %v454 = vadd.f32 %v452, 0.0
    %v455 = vadd.f32 %v453, 0.0
    %v456 = vrot.slane %v439, 6
    %v457 = vrot.slane %v440, 6
    %v458 = vsel %vm184, %v456, %v457
    %v459 = vsel %vm184, %v457, %v456
    %v460 = vsel %vm197, %v459, 0.0
    %v461 = vsel %vm198, %v458, 0.0
    %v462 = vlaneseq
    %v463 = vshrl.u32 %v462, 7
    %v464 = vsub.s32 1, %v463
    %v465 = vrot.slane %v441, %v464
    %v466 = vmul.f32 %v460, %v465
    %v467 = vmul.f32 %v461, %v465
    %v468 = vadd.f32 %v454, %v466
    %v469 = vadd.f32 %v455, %v467
    %v470 = vrot.slane %v439, 7
    %v471 = vrot.slane %v440, 7
    %v472 = vsel %vm211, %v470, %v471
    %v473 = vsel %vm211, %v471, %v470
    %v474 = vsel %vm224, %v473, 0.0
    %v475 = vsel %vm225, %v472, 0.0
    %v476 = vlaneseq
    %v477 = vshrl.u32 %v476, 7
    %v478 = vsub.s32 2, %v477
    %v479 = vrot.slane %v441, %v478
    %v480 = vmul.f32 %v474, %v479
    %v481 = vmul.f32 %v475, %v479
    %v482 = vadd.f32 %v468, %v480
    %v483 = vadd.f32 %v469, %v481
    %v484 = vlaneseq
    %v485 = vshrl.u32 %v484, 7
    %v486 = vsub.s32 3, %v485
    %v487 = vrot.slane %v441, %v486
    %v488 = vmul.f32 %v439, %v487
    %v489 = vmul.f32 %v440, %v487
    %v490 = vadd.f32 %v482, %v488
    %v491 = vadd.f32 %v483, %v489
    %v492 = vrot.slane %v439, 1
    %v493 = vrot.slane %v440, 1
    %v494 = vsel %vm246, %v492, %v493
    %v495 = vsel %vm246, %v493, %v492
    %v496 = vsel %vm259, %v494, 0.0
    %v497 = vsel %vm260, %v495, 0.0
    %v498 = vlaneseq
    %v499 = vshrl.u32 %v498, 7
    %v500 = vsub.s32 4, %v499
    %v501 = vrot.slane %v441, %v500
    %v502 = vmul.f32 %v496, %v501
    %v503 = vmul.f32 %v497, %v501
    %v504 = vadd.f32 %v490, %v502
    %v505 = vadd.f32 %v491, %v503
    %v506 = vrot.slane %v439, 2
    %v507 = vrot.slane %v440, 2
    %v508 = vsel %vm273, %v506, %v507
    %v509 = vsel %vm273, %v507, %v506
    %v510 = vsel %vm286, %v508, 0.0
    %v511 = vsel %vm287, %v509, 0.0
    %v512 = vlaneseq
    %v513 = vshrl.u32 %v512, 7
    %v514 = vsub.s32 5, %v513
    %v515 = vrot.slane %v441, %v514
    %v516 = vmul.f32 %v510, %v515
    %v517 = vmul.f32 %v511, %v515
    %v518 = vadd.f32 %v504, %v516
    %v519 = vadd.f32 %v505, %v517
    %v520 = vrot.slane %v439, 3
    %v521 = vrot.slane %v440, 3
    %v522 = vsel %vm300, %v520, %v521
    %v523 = vsel %vm300, %v521, %v520
    %v524 = vsel %vm313, %v522, 0.0
    %v525 = vsel %vm314, %v523, 0.0
    %v526 = vlaneseq
    %v527 = vshrl.u32 %v526, 7
    %v528 = vsub.s32 6, %v527
    %v529 = vrot.slane %v441, %v528
    %v530 = vmul.f32 %v524, %v529
    %v531 = vmul.f32 %v525, %v529
    %v532 = vadd.f32 %v518, %v530
    %v533 = vadd.f32 %v519, %v531
    %v534 = vpack.c.bf16 %v533, %v532
    %v535 = vld [vmem:[%s11] sm:$0xf]
    %v536 = vld [vmem:[%s11 + $0x4] sm:$0xf]
    %v537 = vld [vmem:[%s11 + $0x8] sm:$0xf]
    %v538 = vld [vmem:[%s11 + $0xc] sm:$0xf]
    %v539 = vld [vmem:[%s12] sm:$0x1]
    %v541 = vlaneseq
    %v542 = vshrl.u32 %v541, 7
    %v543 = vsub.s32 0, %v542
    %v544 = vrot.slane %v539, %v543
    %v550 = vunpack.c.l.b16 %v535
    %v551 = vunpack.c.l.b16 %v536
    %v552 = vunpack.c.l.b16 %v537
    %v553 = vunpack.c.l.b16 %v538
    %v554 = vpack.c.b16 %v551, %v550
    %v555 = vpack.c.b16 %v553, %v552
    %v559 = vsel %vm110, %v534, 0
    %561 = vmatprep.subr.bf16.mxu0 0
    %562 = vmatpush1.bf16.msra.mxu0 %v554
    %563 = vmatprep.subr.bf16.mxu0 0
    %564 = vmatpush1.bf16.msra.mxu0 %v555
    %565 = vmatprep.subr.bf16.mxu0 0
    %566 = vmatpush1.bf16.msra.mxu0 0
    %567 = vmatprep.subr.bf16.mxu0 0
    %568 = vmatpush1.bf16.msra.mxu0 0
    %569 = vmatprep.subr.bf16.mxu0 0
    %570 = vmatpush1.bf16.msra.mxu0 0
    %571 = vmatprep.subr.bf16.mxu0 0
    %572 = vmatpush1.bf16.msra.mxu0 0
    %573 = vmatprep.subr.bf16.mxu0 0
    %574 = vmatpush1.bf16.msra.mxu0 0
    %575 = vmatprep.subr.bf16.mxu0 0
    %576 = vmatpush1.bf16.msra.mxu0 0
    %577 = vmatprep.subr.bf16.mxu0 0
    %578 = vmatpush1.bf16.msra.mxu0 0
    %579 = vmatprep.subr.bf16.mxu0 0
    %580 = vmatpush1.bf16.msra.mxu0 0
    %581 = vmatprep.subr.bf16.mxu0 0
    %582 = vmatpush1.bf16.msra.mxu0 0
    %583 = vmatprep.subr.bf16.mxu0 0
    %584 = vmatpush1.bf16.msra.mxu0 0
    %585 = vmatprep.subr.bf16.mxu0 0
    %586 = vmatpush1.bf16.msra.mxu0 0
    %587 = vmatprep.subr.bf16.mxu0 0
    %588 = vmatpush1.bf16.msra.mxu0 0
    %589 = vmatprep.subr.bf16.mxu0 0
    %590 = vmatpush1.bf16.msra.mxu0 0
    %591 = vmatprep.subr.bf16.mxu0 0
    %592 = vmatpush1.bf16.msra.mxu0 0
    %593 = vmatprep.mubr.bf16.mxu0 0
    %594 = vmatmul.mubr.bf16.gmra.mrb[0].mxu0 %v559
    %v595 = vpop.f32.mrb[0].mxu0
    %v596 = vadd.f32 %v544, %v595
    %v597 = vpop.f32.mrb[0].mxu0
    %v598 = vpop.f32.mrb[0].mxu0
    %v599 = vadd.f32 %v544, %v598
    %v600 = vpop.f32.mrb[0].mxu0
    %601 = vdwg.mxu0
    %v602 = vmax.f32 %v596, 0.0
    %v603 = vmax.f32 %v599, 0.0
    %v604 = vadd.f32 %v395, %v602
    %v605 = vadd.f32 %v396, %v603
    %v606 = vld [vmem:[%s13] sm:$0x1]
    %v607 = vld [vmem:[%s14] sm:$0x1]
    %v608 = vsel %vm110, %v604, 0.0
    %609 = vadd.xlane.f32.xlu0 %v608
    %v610 = vpop.xlane.xlu0 %609
    %v611 = vsel %vm110, %v605, 0.0
    %612 = vadd.xlane.f32.xlu0 %v611
    %v613 = vpop.xlane.xlu0 %612
    %v614 = vmul.f32 %v610, %v117
    %v615 = vmul.f32 %v613, %v117
    %v616 = vsub.f32 %v604, %v614
    %v617 = vsub.f32 %v605, %v615
    %v618 = vmul.f32 %v616, %v616
    %v619 = vmul.f32 %v617, %v617
    %v620 = vsel %vm110, %v618, 0.0
    %621 = vadd.xlane.f32.xlu0 %v620
    %v622 = vpop.xlane.xlu0 %621
    %v623 = vsel %vm110, %v619, 0.0
    %624 = vadd.xlane.f32.xlu0 %v623
    %v625 = vpop.xlane.xlu0 %624
    %v626 = vmul.f32 %v622, %v117
    %v627 = vmul.f32 %v625, %v117
    %v628 = vadd.f32 %v626, 1e-05
    %v629 = vadd.f32 %v627, 1e-05
    %v630 = vrsqrt.pop %v628
    %v631 = vrsqrt.pop %v629
    %v632 = vmul.f32 %v616, %v630
    %v633 = vmul.f32 %v617, %v631
    %v635 = vlaneseq
    %v636 = vshrl.u32 %v635, 7
    %v637 = vsub.s32 0, %v636
    %v638 = vrot.slane %v606, %v637
    %v640 = vmul.f32 %v632, %v638
    %v641 = vmul.f32 %v633, %v638
    %v643 = vlaneseq
    %v644 = vshrl.u32 %v643, 7
    %v645 = vsub.s32 0, %v644
    %v646 = vrot.slane %v607, %v645
    %v648 = vadd.f32 %v640, %v646
    %v649 = vadd.f32 %v641, %v646
    %v650 = vpack.c.bf16 %v649, %v648
    %v651 = vld [vmem:[%s15] sm:$0xf]
    %v652 = vld [vmem:[%s15 + $0x4] sm:$0xf]
    %v653 = vld [vmem:[%s15 + $0x8] sm:$0xf]
    %v654 = vld [vmem:[%s15 + $0xc] sm:$0xf]
    %v659 = vunpack.c.l.b16 %v651
    %v660 = vunpack.c.l.b16 %v652
    %v661 = vunpack.c.l.b16 %v653
    %v662 = vunpack.c.l.b16 %v654
    %v663 = vpack.c.b16 %v660, %v659
    %v664 = vpack.c.b16 %v662, %v661
    %v668 = vsel %vm110, %v650, 0
    %670 = vmatprep.subr.bf16.mxu0 0
    %671 = vmatpush1.bf16.msra.mxu0 %v663
    %672 = vmatprep.subr.bf16.mxu0 0
    %673 = vmatpush1.bf16.msra.mxu0 %v664
    %674 = vmatprep.subr.bf16.mxu0 0
    %675 = vmatpush1.bf16.msra.mxu0 0
    %676 = vmatprep.subr.bf16.mxu0 0
    %677 = vmatpush1.bf16.msra.mxu0 0
    %678 = vmatprep.subr.bf16.mxu0 0
    %679 = vmatpush1.bf16.msra.mxu0 0
    %680 = vmatprep.subr.bf16.mxu0 0
    %681 = vmatpush1.bf16.msra.mxu0 0
    %682 = vmatprep.subr.bf16.mxu0 0
    %683 = vmatpush1.bf16.msra.mxu0 0
    %684 = vmatprep.subr.bf16.mxu0 0
    %685 = vmatpush1.bf16.msra.mxu0 0
    %686 = vmatprep.subr.bf16.mxu0 0
    %687 = vmatpush1.bf16.msra.mxu0 0
    %688 = vmatprep.subr.bf16.mxu0 0
    %689 = vmatpush1.bf16.msra.mxu0 0
    %690 = vmatprep.subr.bf16.mxu0 0
    %691 = vmatpush1.bf16.msra.mxu0 0
    %692 = vmatprep.subr.bf16.mxu0 0
    %693 = vmatpush1.bf16.msra.mxu0 0
    %694 = vmatprep.subr.bf16.mxu0 0
    %695 = vmatpush1.bf16.msra.mxu0 0
    %696 = vmatprep.subr.bf16.mxu0 0
    %697 = vmatpush1.bf16.msra.mxu0 0
    %698 = vmatprep.subr.bf16.mxu0 0
    %699 = vmatpush1.bf16.msra.mxu0 0
    %700 = vmatprep.subr.bf16.mxu0 0
    %701 = vmatpush1.bf16.msra.mxu0 0
    %702 = vmatprep.mubr.bf16.mxu0 0
    %703 = vmatmul.mubr.bf16.gmra.mrb[0].mxu0 %v668
    %v704 = vpop.f32.mrb[0].mxu0
    %v705 = vadd.f32 0.0, %v704
    %v706 = vpop.f32.mrb[0].mxu0
    %v707 = vpop.f32.mrb[0].mxu0
    %v708 = vadd.f32 0.0, %v707
    %v709 = vpop.f32.mrb[0].mxu0
    %710 = vdwg.mxu0
    %v711 = vmul.f32 %v705, 0.35355338
    %v712 = vmul.f32 %v708, 0.35355338
    %v713 = vld [vmem:[%s2] sm:$0x1]
    %v714 = vld [vmem:[%s2 + $0x1] sm:$0x1]
    %vm715 = vcmp.eq.s32.totalorder %v713, 0
    %vm716 = vcmp.eq.s32.totalorder %v714, 0
    %v717 = vsel %vm715, -1e+09, 0.0
    %v718 = vsel %vm716, -1e+09, 0.0
    %v719 = vpack.c.bf16 %v711, %v711
    %v720 = vpack.c.bf16 %v712, %v712
    %v721 = vpack.c.bf16 %v705, %v705
    %v722 = vpack.c.bf16 %v708, %v708
    %v725 = vlaneseq
    %v726 = vshrl.u32 %v725, 7
    %v727 = vsub.s32 0, %v726
    %v728 = vrot.slane %v717, %v727
    %v729 = vlaneseq
    %v730 = vshrl.u32 %v729, 7
    %v731 = vsub.s32 0, %v730
    %v732 = vrot.slane %v718, %v731
    %736 = vrot.lane.b32.xlu0 %v721, 96
    %v737 = vpop.permute.xlu0 %736
    %vm738 = vcmask 64512
    %v740 = vsel %vm738, %v719, 0
    %v743 = vsel %vm738, %v737, 0
    %745 = vmatprep.subr.bf16.mxu0 0
    %746 = vmatpush1.bf16.xpose.msra.mxu0 %v743
    %747 = vmatprep.subr.bf16.mxu0 0
    %748 = vmatpush1.bf16.xpose.msra.mxu0 0
    %749 = vmatprep.subr.bf16.mxu0 0
    %750 = vmatpush1.bf16.xpose.msra.mxu0 0
    %751 = vmatprep.subr.bf16.mxu0 0
    %752 = vmatpush1.bf16.xpose.msra.mxu0 0
    %753 = vmatprep.subr.bf16.mxu0 0
    %754 = vmatpush1.bf16.xpose.msra.mxu0 0
    %755 = vmatprep.subr.bf16.mxu0 0
    %756 = vmatpush1.bf16.xpose.msra.mxu0 0
    %757 = vmatprep.subr.bf16.mxu0 0
    %758 = vmatpush1.bf16.xpose.msra.mxu0 0
    %759 = vmatprep.subr.bf16.mxu0 0
    %760 = vmatpush1.bf16.xpose.msra.mxu0 0
    %761 = vmatprep.subr.bf16.mxu0 0
    %762 = vmatpush1.bf16.xpose.msra.mxu0 0
    %763 = vmatprep.subr.bf16.mxu0 0
    %764 = vmatpush1.bf16.xpose.msra.mxu0 0
    %765 = vmatprep.subr.bf16.mxu0 0
    %766 = vmatpush1.bf16.xpose.msra.mxu0 0
    %767 = vmatprep.subr.bf16.mxu0 0
    %768 = vmatpush1.bf16.xpose.msra.mxu0 0
    %769 = vmatprep.subr.bf16.mxu0 0
    %770 = vmatpush1.bf16.xpose.msra.mxu0 0
    %771 = vmatprep.subr.bf16.mxu0 0
    %772 = vmatpush1.bf16.xpose.msra.mxu0 0
    %773 = vmatprep.subr.bf16.mxu0 0
    %774 = vmatpush1.bf16.xpose.msra.mxu0 0
    %775 = vmatprep.subr.bf16.mxu0 0
    %776 = vmatpush1.bf16.xpose.msra.mxu0 0
    %777 = vmatprep.mubr.bf16.mxu0 0
    %778 = vmatmul.mubr.bf16.gmra.mrb[0].mxu0 %v740
    %v779 = vpop.f32.mrb[0].mxu0
    %v780 = vadd.f32 %v728, %v779
    %v781 = vpop.f32.mrb[0].mxu0
    %v782 = vpop.f32.mrb[0].mxu0
    %v783 = vpop.f32.mrb[0].mxu0
    %784 = vdwg.mxu0
    %786 = vrot.lane.b32.xlu0 %v722, 96
    %v787 = vpop.permute.xlu0 %786
    %v789 = vsel %vm738, %v720, 0
    %v792 = vsel %vm738, %v787, 0
    %794 = vmatprep.subr.bf16.mxu0 0
    %795 = vmatpush1.bf16.xpose.msra.mxu0 %v792
    %796 = vmatprep.subr.bf16.mxu0 0
    %797 = vmatpush1.bf16.xpose.msra.mxu0 0
    %798 = vmatprep.subr.bf16.mxu0 0
    %799 = vmatpush1.bf16.xpose.msra.mxu0 0
    %800 = vmatprep.subr.bf16.mxu0 0
    %801 = vmatpush1.bf16.xpose.msra.mxu0 0
    %802 = vmatprep.subr.bf16.mxu0 0
    %803 = vmatpush1.bf16.xpose.msra.mxu0 0
    %804 = vmatprep.subr.bf16.mxu0 0
    %805 = vmatpush1.bf16.xpose.msra.mxu0 0
    %806 = vmatprep.subr.bf16.mxu0 0
    %807 = vmatpush1.bf16.xpose.msra.mxu0 0
    %808 = vmatprep.subr.bf16.mxu0 0
    %809 = vmatpush1.bf16.xpose.msra.mxu0 0
    %810 = vmatprep.subr.bf16.mxu0 0
    %811 = vmatpush1.bf16.xpose.msra.mxu0 0
    %812 = vmatprep.subr.bf16.mxu0 0
    %813 = vmatpush1.bf16.xpose.msra.mxu0 0
    %814 = vmatprep.subr.bf16.mxu0 0
    %815 = vmatpush1.bf16.xpose.msra.mxu0 0
    %816 = vmatprep.subr.bf16.mxu0 0
    %817 = vmatpush1.bf16.xpose.msra.mxu0 0
    %818 = vmatprep.subr.bf16.mxu0 0
    %819 = vmatpush1.bf16.xpose.msra.mxu0 0
    %820 = vmatprep.subr.bf16.mxu0 0
    %821 = vmatpush1.bf16.xpose.msra.mxu0 0
    %822 = vmatprep.subr.bf16.mxu0 0
    %823 = vmatpush1.bf16.xpose.msra.mxu0 0
    %824 = vmatprep.subr.bf16.mxu0 0
    %825 = vmatpush1.bf16.xpose.msra.mxu0 0
    %826 = vmatprep.mubr.bf16.mxu0 0
    %827 = vmatmul.mubr.bf16.gmra.mrb[0].mxu0 %v789
    %v828 = vpop.f32.mrb[0].mxu0
    %v829 = vadd.f32 %v732, %v828
    %v830 = vpop.f32.mrb[0].mxu0
    %v831 = vpop.f32.mrb[0].mxu0
    %v832 = vpop.f32.mrb[0].mxu0
    %833 = vdwg.mxu0
    %v834 = vsel %vm738, %v780, -inf
    %835 = vmax.xlane.f32.xlu0 %v834
    %v836 = vpop.xlane.xlu0 %835
    %v837 = vsel %vm738, %v829, -inf
    %838 = vmax.xlane.f32.xlu0 %v837
    %v839 = vpop.xlane.xlu0 %838
    %v840 = vsub.f32 %v780, %v836
    %v841 = vsub.f32 %v829, %v839
    %v842 = vmul.f32 %v840, 1.442695
    %v843 = vpow.pop %v842
    %v844 = vmul.f32 %v841, 1.442695
    %v845 = vpow.pop %v844
    %v846 = vsel %vm738, %v843, 0.0
    %847 = vadd.xlane.f32.xlu0 %v846
    %v848 = vpop.xlane.xlu0 %847
    %v849 = vsel %vm738, %v845, 0.0
    %850 = vadd.xlane.f32.xlu0 %v849
    %v851 = vpop.xlane.xlu0 %850
    %v852 = vrcp.pop %v848
    %v853 = vrcp.pop %v851
    %v854 = vmul.f32 %v843, %v852
    %v855 = vmul.f32 %v845, %v853
    %v856 = vpack.c.bf16 %v854, %v854
    %v857 = vpack.c.bf16 %v855, %v855
    %858 = vrot.lane.b32.xlu0 %v721, 64
    %v859 = vpop.permute.xlu0 %858
    %v861 = vsel %vm738, %v856, 0
    %vm863 = vcmask 1043456
    %v865 = vsel %vm863, %v859, 0
    %867 = vmatprep.subr.bf16.mxu0 0
    %868 = vmatpush1.bf16.msra.mxu0 %v865
    %869 = vmatprep.subr.bf16.mxu0 0
    %870 = vmatpush1.bf16.msra.mxu0 0
    %871 = vmatprep.subr.bf16.mxu0 0
    %872 = vmatpush1.bf16.msra.mxu0 0
    %873 = vmatprep.subr.bf16.mxu0 0
    %874 = vmatpush1.bf16.msra.mxu0 0
    %875 = vmatprep.subr.bf16.mxu0 0
    %876 = vmatpush1.bf16.msra.mxu0 0
    %877 = vmatprep.subr.bf16.mxu0 0
    %878 = vmatpush1.bf16.msra.mxu0 0
    %879 = vmatprep.subr.bf16.mxu0 0
    %880 = vmatpush1.bf16.msra.mxu0 0
    %881 = vmatprep.subr.bf16.mxu0 0
    %882 = vmatpush1.bf16.msra.mxu0 0
    %883 = vmatprep.subr.bf16.mxu0 0
    %884 = vmatpush1.bf16.msra.mxu0 0
    %885 = vmatprep.subr.bf16.mxu0 0
    %886 = vmatpush1.bf16.msra.mxu0 0
    %887 = vmatprep.subr.bf16.mxu0 0
    %888 = vmatpush1.bf16.msra.mxu0 0
    %889 = vmatprep.subr.bf16.mxu0 0
    %890 = vmatpush1.bf16.msra.mxu0 0
    %891 = vmatprep.subr.bf16.mxu0 0
    %892 = vmatpush1.bf16.msra.mxu0 0
    %893 = vmatprep.subr.bf16.mxu0 0
    %894 = vmatpush1.bf16.msra.mxu0 0
    %895 = vmatprep.subr.bf16.mxu0 0
    %896 = vmatpush1.bf16.msra.mxu0 0
    %897 = vmatprep.subr.bf16.mxu0 0
    %898 = vmatpush1.bf16.msra.mxu0 0
    %899 = vmatprep.mubr.bf16.mxu0 0
    %900 = vmatmul.mubr.bf16.gmra.mrb[0].mxu0 %v861
    %v901 = vpop.f32.mrb[0].mxu0
    %v902 = vadd.f32 0.0, %v901
    %v903 = vpop.f32.mrb[0].mxu0
    %v904 = vpop.f32.mrb[0].mxu0
    %v905 = vpop.f32.mrb[0].mxu0
    %906 = vdwg.mxu0
    %907 = vrot.lane.b32.xlu0 %v722, 64
    %v908 = vpop.permute.xlu0 %907
    %v910 = vsel %vm738, %v857, 0
    %v913 = vsel %vm863, %v908, 0
    %915 = vmatprep.subr.bf16.mxu0 0
    %916 = vmatpush1.bf16.msra.mxu0 %v913
    %917 = vmatprep.subr.bf16.mxu0 0
    %918 = vmatpush1.bf16.msra.mxu0 0
    %919 = vmatprep.subr.bf16.mxu0 0
    %920 = vmatpush1.bf16.msra.mxu0 0
    %921 = vmatprep.subr.bf16.mxu0 0
    %922 = vmatpush1.bf16.msra.mxu0 0
    %923 = vmatprep.subr.bf16.mxu0 0
    %924 = vmatpush1.bf16.msra.mxu0 0
    %925 = vmatprep.subr.bf16.mxu0 0
    %926 = vmatpush1.bf16.msra.mxu0 0
    %927 = vmatprep.subr.bf16.mxu0 0
    %928 = vmatpush1.bf16.msra.mxu0 0
    %929 = vmatprep.subr.bf16.mxu0 0
    %930 = vmatpush1.bf16.msra.mxu0 0
    %931 = vmatprep.subr.bf16.mxu0 0
    %932 = vmatpush1.bf16.msra.mxu0 0
    %933 = vmatprep.subr.bf16.mxu0 0
    %934 = vmatpush1.bf16.msra.mxu0 0
    %935 = vmatprep.subr.bf16.mxu0 0
    %936 = vmatpush1.bf16.msra.mxu0 0
    %937 = vmatprep.subr.bf16.mxu0 0
    %938 = vmatpush1.bf16.msra.mxu0 0
    %939 = vmatprep.subr.bf16.mxu0 0
    %940 = vmatpush1.bf16.msra.mxu0 0
    %941 = vmatprep.subr.bf16.mxu0 0
    %942 = vmatpush1.bf16.msra.mxu0 0
    %943 = vmatprep.subr.bf16.mxu0 0
    %944 = vmatpush1.bf16.msra.mxu0 0
    %945 = vmatprep.subr.bf16.mxu0 0
    %946 = vmatpush1.bf16.msra.mxu0 0
    %947 = vmatprep.mubr.bf16.mxu0 0
    %948 = vmatmul.mubr.bf16.gmra.mrb[0].mxu0 %v910
    %v949 = vpop.f32.mrb[0].mxu0
    %v950 = vadd.f32 0.0, %v949
    %v951 = vpop.f32.mrb[0].mxu0
    %v952 = vpop.f32.mrb[0].mxu0
    %v953 = vpop.f32.mrb[0].mxu0
    %954 = vdwg.mxu0
    %955 = vst.msk [vmem:[#allocation2] sm:$0xff] %vm738, %v902
    %956 = vst.msk [vmem:[#allocation2 + $0x8] sm:$0xff] %vm738, %v950
    %958 = vrot.lane.b32.xlu0 %v719, 120
    %v959 = vpop.permute.xlu0 %958
    %960 = vrot.lane.b32.xlu0 %v721, 88
    %v961 = vpop.permute.xlu0 %960
    %v963 = vsel %vm738, %v959, 0
    %v966 = vsel %vm738, %v961, 0
    %968 = vmatprep.subr.bf16.mxu0 0
    %969 = vmatpush1.bf16.xpose.msra.mxu0 %v966
    %970 = vmatprep.subr.bf16.mxu0 0
    %971 = vmatpush1.bf16.xpose.msra.mxu0 0
    %972 = vmatprep.subr.bf16.mxu0 0
    %973 = vmatpush1.bf16.xpose.msra.mxu0 0
    %974 = vmatprep.subr.bf16.mxu0 0
    %975 = vmatpush1.bf16.xpose.msra.mxu0 0
    %976 = vmatprep.subr.bf16.mxu0 0
    %977 = vmatpush1.bf16.xpose.msra.mxu0 0
    %978 = vmatprep.subr.bf16.mxu0 0
    %979 = vmatpush1.bf16.xpose.msra.mxu0 0
    %980 = vmatprep.subr.bf16.mxu0 0
    %981 = vmatpush1.bf16.xpose.msra.mxu0 0
    %982 = vmatprep.subr.bf16.mxu0 0
    %983 = vmatpush1.bf16.xpose.msra.mxu0 0
    %984 = vmatprep.subr.bf16.mxu0 0
    %985 = vmatpush1.bf16.xpose.msra.mxu0 0
    %986 = vmatprep.subr.bf16.mxu0 0
    %987 = vmatpush1.bf16.xpose.msra.mxu0 0
    %988 = vmatprep.subr.bf16.mxu0 0
    %989 = vmatpush1.bf16.xpose.msra.mxu0 0
    %990 = vmatprep.subr.bf16.mxu0 0
    %991 = vmatpush1.bf16.xpose.msra.mxu0 0
    %992 = vmatprep.subr.bf16.mxu0 0
    %993 = vmatpush1.bf16.xpose.msra.mxu0 0
    %994 = vmatprep.subr.bf16.mxu0 0
    %995 = vmatpush1.bf16.xpose.msra.mxu0 0
    %996 = vmatprep.subr.bf16.mxu0 0
    %997 = vmatpush1.bf16.xpose.msra.mxu0 0
    %998 = vmatprep.subr.bf16.mxu0 0
    %999 = vmatpush1.bf16.xpose.msra.mxu0 0
    %1000 = vmatprep.mubr.bf16.mxu0 0
    %1001 = vmatmul.mubr.bf16.gmra.mrb[0].mxu0 %v963
    %v1002 = vpop.f32.mrb[0].mxu0
    %v1003 = vadd.f32 %v728, %v1002
    %v1004 = vpop.f32.mrb[0].mxu0
    %v1005 = vpop.f32.mrb[0].mxu0
    %v1006 = vpop.f32.mrb[0].mxu0
    %1007 = vdwg.mxu0
    %1009 = vrot.lane.b32.xlu0 %v720, 120
    %v1010 = vpop.permute.xlu0 %1009
    %1011 = vrot.lane.b32.xlu0 %v722, 88
    %v1012 = vpop.permute.xlu0 %1011
    %v1014 = vsel %vm738, %v1010, 0
    %v1017 = vsel %vm738, %v1012, 0
    %1019 = vmatprep.subr.bf16.mxu0 0
    %1020 = vmatpush1.bf16.xpose.msra.mxu0 %v1017
    %1021 = vmatprep.subr.bf16.mxu0 0
    %1022 = vmatpush1.bf16.xpose.msra.mxu0 0
    %1023 = vmatprep.subr.bf16.mxu0 0
    %1024 = vmatpush1.bf16.xpose.msra.mxu0 0
    %1025 = vmatprep.subr.bf16.mxu0 0
    %1026 = vmatpush1.bf16.xpose.msra.mxu0 0
    %1027 = vmatprep.subr.bf16.mxu0 0
    %1028 = vmatpush1.bf16.xpose.msra.mxu0 0
    %1029 = vmatprep.subr.bf16.mxu0 0
    %1030 = vmatpush1.bf16.xpose.msra.mxu0 0
    %1031 = vmatprep.subr.bf16.mxu0 0
    %1032 = vmatpush1.bf16.xpose.msra.mxu0 0
    %1033 = vmatprep.subr.bf16.mxu0 0
    %1034 = vmatpush1.bf16.xpose.msra.mxu0 0
    %1035 = vmatprep.subr.bf16.mxu0 0
    %1036 = vmatpush1.bf16.xpose.msra.mxu0 0
    %1037 = vmatprep.subr.bf16.mxu0 0
    %1038 = vmatpush1.bf16.xpose.msra.mxu0 0
    %1039 = vmatprep.subr.bf16.mxu0 0
    %1040 = vmatpush1.bf16.xpose.msra.mxu0 0
    %1041 = vmatprep.subr.bf16.mxu0 0
    %1042 = vmatpush1.bf16.xpose.msra.mxu0 0
    %1043 = vmatprep.subr.bf16.mxu0 0
    %1044 = vmatpush1.bf16.xpose.msra.mxu0 0
    %1045 = vmatprep.subr.bf16.mxu0 0
    %1046 = vmatpush1.bf16.xpose.msra.mxu0 0
    %1047 = vmatprep.subr.bf16.mxu0 0
    %1048 = vmatpush1.bf16.xpose.msra.mxu0 0
    %1049 = vmatprep.subr.bf16.mxu0 0
    %1050 = vmatpush1.bf16.xpose.msra.mxu0 0
    %1051 = vmatprep.mubr.bf16.mxu0 0
    %1052 = vmatmul.mubr.bf16.gmra.mrb[0].mxu0 %v1014
    %v1053 = vpop.f32.mrb[0].mxu0
    %v1054 = vadd.f32 %v732, %v1053
    %v1055 = vpop.f32.mrb[0].mxu0
    %v1056 = vpop.f32.mrb[0].mxu0
    %v1057 = vpop.f32.mrb[0].mxu0
    %1058 = vdwg.mxu0
    %v1059 = vsel %vm738, %v1003, -inf
    %1060 = vmax.xlane.f32.xlu0 %v1059
    %v1061 = vpop.xlane.xlu0 %1060
    %v1062 = vsel %vm738, %v1054, -inf
    %1063 = vmax.xlane.f32.xlu0 %v1062
    %v1064 = vpop.xlane.xlu0 %1063
    %v1065 = vsub.f32 %v1003, %v1061
    %v1066 = vsub.f32 %v1054, %v1064
    %v1067 = vmul.f32 %v1065, 1.442695
    %v1068 = vpow.pop %v1067
    %v1069 = vmul.f32 %v1066, 1.442695
    %v1070 = vpow.pop %v1069
    %v1071 = vsel %vm738, %v1068, 0.0
    %1072 = vadd.xlane.f32.xlu0 %v1071
    %v1073 = vpop.xlane.xlu0 %1072
    %v1074 = vsel %vm738, %v1070, 0.0
    %1075 = vadd.xlane.f32.xlu0 %v1074
    %v1076 = vpop.xlane.xlu0 %1075
    %v1077 = vrcp.pop %v1073
    %v1078 = vrcp.pop %v1076
    %v1079 = vmul.f32 %v1068, %v1077
    %v1080 = vmul.f32 %v1070, %v1078
    %v1081 = vpack.c.bf16 %v1079, %v1079
    %v1082 = vpack.c.bf16 %v1080, %v1080
    %1083 = vrot.lane.b32.xlu0 %v721, 56
    %v1084 = vpop.permute.xlu0 %1083
    %v1086 = vsel %vm738, %v1081, 0
    %v1089 = vsel %vm863, %v1084, 0
    %1091 = vmatprep.subr.bf16.mxu0 0
    %1092 = vmatpush1.bf16.msra.mxu0 %v1089
    %1093 = vmatprep.subr.bf16.mxu0 0
    %1094 = vmatpush1.bf16.msra.mxu0 0
    %1095 = vmatprep.subr.bf16.mxu0 0
    %1096 = vmatpush1.bf16.msra.mxu0 0
    %1097 = vmatprep.subr.bf16.mxu0 0
    %1098 = vmatpush1.bf16.msra.mxu0 0
    %1099 = vmatprep.subr.bf16.mxu0 0
    %1100 = vmatpush1.bf16.msra.mxu0 0
    %1101 = vmatprep.subr.bf16.mxu0 0
    %1102 = vmatpush1.bf16.msra.mxu0 0
    %1103 = vmatprep.subr.bf16.mxu0 0
    %1104 = vmatpush1.bf16.msra.mxu0 0
    %1105 = vmatprep.subr.bf16.mxu0 0
    %1106 = vmatpush1.bf16.msra.mxu0 0
    %1107 = vmatprep.subr.bf16.mxu0 0
    %1108 = vmatpush1.bf16.msra.mxu0 0
    %1109 = vmatprep.subr.bf16.mxu0 0
    %1110 = vmatpush1.bf16.msra.mxu0 0
    %1111 = vmatprep.subr.bf16.mxu0 0
    %1112 = vmatpush1.bf16.msra.mxu0 0
    %1113 = vmatprep.subr.bf16.mxu0 0
    %1114 = vmatpush1.bf16.msra.mxu0 0
    %1115 = vmatprep.subr.bf16.mxu0 0
    %1116 = vmatpush1.bf16.msra.mxu0 0
    %1117 = vmatprep.subr.bf16.mxu0 0
    %1118 = vmatpush1.bf16.msra.mxu0 0
    %1119 = vmatprep.subr.bf16.mxu0 0
    %1120 = vmatpush1.bf16.msra.mxu0 0
    %1121 = vmatprep.subr.bf16.mxu0 0
    %1122 = vmatpush1.bf16.msra.mxu0 0
    %1123 = vmatprep.mubr.bf16.mxu0 0
    %1124 = vmatmul.mubr.bf16.gmra.mrb[0].mxu0 %v1086
    %v1125 = vpop.f32.mrb[0].mxu0
    %v1126 = vadd.f32 0.0, %v1125
    %v1127 = vpop.f32.mrb[0].mxu0
    %v1128 = vpop.f32.mrb[0].mxu0
    %v1129 = vpop.f32.mrb[0].mxu0
    %1130 = vdwg.mxu0
    %1131 = vrot.lane.b32.xlu0 %v722, 56
    %v1132 = vpop.permute.xlu0 %1131
    %v1134 = vsel %vm738, %v1082, 0
    %v1137 = vsel %vm863, %v1132, 0
    %1139 = vmatprep.subr.bf16.mxu0 0
    %1140 = vmatpush1.bf16.msra.mxu0 %v1137
    %1141 = vmatprep.subr.bf16.mxu0 0
    %1142 = vmatpush1.bf16.msra.mxu0 0
    %1143 = vmatprep.subr.bf16.mxu0 0
    %1144 = vmatpush1.bf16.msra.mxu0 0
    %1145 = vmatprep.subr.bf16.mxu0 0
    %1146 = vmatpush1.bf16.msra.mxu0 0
    %1147 = vmatprep.subr.bf16.mxu0 0
    %1148 = vmatpush1.bf16.msra.mxu0 0
    %1149 = vmatprep.subr.bf16.mxu0 0
    %1150 = vmatpush1.bf16.msra.mxu0 0
    %1151 = vmatprep.subr.bf16.mxu0 0
    %1152 = vmatpush1.bf16.msra.mxu0 0
    %1153 = vmatprep.subr.bf16.mxu0 0
    %1154 = vmatpush1.bf16.msra.mxu0 0
    %1155 = vmatprep.subr.bf16.mxu0 0
    %1156 = vmatpush1.bf16.msra.mxu0 0
    %1157 = vmatprep.subr.bf16.mxu0 0
    %1158 = vmatpush1.bf16.msra.mxu0 0
    %1159 = vmatprep.subr.bf16.mxu0 0
    %1160 = vmatpush1.bf16.msra.mxu0 0
    %1161 = vmatprep.subr.bf16.mxu0 0
    %1162 = vmatpush1.bf16.msra.mxu0 0
    %1163 = vmatprep.subr.bf16.mxu0 0
    %1164 = vmatpush1.bf16.msra.mxu0 0
    %1165 = vmatprep.subr.bf16.mxu0 0
    %1166 = vmatpush1.bf16.msra.mxu0 0
    %1167 = vmatprep.subr.bf16.mxu0 0
    %1168 = vmatpush1.bf16.msra.mxu0 0
    %1169 = vmatprep.subr.bf16.mxu0 0
    %1170 = vmatpush1.bf16.msra.mxu0 0
    %1171 = vmatprep.mubr.bf16.mxu0 0
    %1172 = vmatmul.mubr.bf16.gmra.mrb[0].mxu0 %v1134
    %v1173 = vpop.f32.mrb[0].mxu0
    %v1174 = vadd.f32 0.0, %v1173
    %v1175 = vpop.f32.mrb[0].mxu0
    %v1176 = vpop.f32.mrb[0].mxu0
    %v1177 = vpop.f32.mrb[0].mxu0
    %1178 = vdwg.mxu0
    %1181 = vrot.lane.b32.xlu0 %v1126, 8
    %v1182 = vpop.permute.xlu0 %1181
    %1183 = vrot.lane.b32.xlu0 %v1174, 8
    %v1184 = vpop.permute.xlu0 %1183
    %vm1187 = vcmask 130112
    %1188 = vst.msk [vmem:[#allocation2] sm:$0xff] %vm1187, %v1182
    %1189 = vst.msk [vmem:[#allocation2 + $0x8] sm:$0xff] %vm1187, %v1184
    %1190 = vrot.lane.b32.xlu0 %v719, 112
    %v1191 = vpop.permute.xlu0 %1190
    %1192 = vrot.lane.b32.xlu0 %v721, 80
    %v1193 = vpop.permute.xlu0 %1192
    %v1195 = vsel %vm738, %v1191, 0
    %v1198 = vsel %vm738, %v1193, 0
    %1200 = vmatprep.subr.bf16.mxu0 0
    %1201 = vmatpush1.bf16.xpose.msra.mxu0 %v1198
    %1202 = vmatprep.subr.bf16.mxu0 0
    %1203 = vmatpush1.bf16.xpose.msra.mxu0 0
    %1204 = vmatprep.subr.bf16.mxu0 0
    %1205 = vmatpush1.bf16.xpose.msra.mxu0 0
    %1206 = vmatprep.subr.bf16.mxu0 0
    %1207 = vmatpush1.bf16.xpose.msra.mxu0 0
    %1208 = vmatprep.subr.bf16.mxu0 0
    %1209 = vmatpush1.bf16.xpose.msra.mxu0 0
    %1210 = vmatprep.subr.bf16.mxu0 0
    %1211 = vmatpush1.bf16.xpose.msra.mxu0 0
    %1212 = vmatprep.subr.bf16.mxu0 0
    %1213 = vmatpush1.bf16.xpose.msra.mxu0 0
    %1214 = vmatprep.subr.bf16.mxu0 0
    %1215 = vmatpush1.bf16.xpose.msra.mxu0 0
    %1216 = vmatprep.subr.bf16.mxu0 0
    %1217 = vmatpush1.bf16.xpose.msra.mxu0 0
    %1218 = vmatprep.subr.bf16.mxu0 0
    %1219 = vmatpush1.bf16.xpose.msra.mxu0 0
    %1220 = vmatprep.subr.bf16.mxu0 0
    %1221 = vmatpush1.bf16.xpose.msra.mxu0 0
    %1222 = vmatprep.subr.bf16.mxu0 0
    %1223 = vmatpush1.bf16.xpose.msra.mxu0 0
    %1224 = vmatprep.subr.bf16.mxu0 0
    %1225 = vmatpush1.bf16.xpose.msra.mxu0 0
    %1226 = vmatprep.subr.bf16.mxu0 0
    %1227 = vmatpush1.bf16.xpose.msra.mxu0 0
    %1228 = vmatprep.subr.bf16.mxu0 0
    %1229 = vmatpush1.bf16.xpose.msra.mxu0 0
    %1230 = vmatprep.subr.bf16.mxu0 0
    %1231 = vmatpush1.bf16.xpose.msra.mxu0 0
    %1232 = vmatprep.mubr.bf16.mxu0 0
    %1233 = vmatmul.mubr.bf16.gmra.mrb[0].mxu0 %v1195
    %v1234 = vpop.f32.mrb[0].mxu0
    %v1235 = vadd.f32 %v728, %v1234
    %v1236 = vpop.f32.mrb[0].mxu0
    %v1237 = vpop.f32.mrb[0].mxu0
    %v1238 = vpop.f32.mrb[0].mxu0
    %1239 = vdwg.mxu0
    %1240 = vrot.lane.b32.xlu0 %v720, 112
    %v1241 = vpop.permute.xlu0 %1240
    %1242 = vrot.lane.b32.xlu0 %v722, 80
    %v1243 = vpop.permute.xlu0 %1242
    %v1245 = vsel %vm738, %v1241, 0
    %v1248 = vsel %vm738, %v1243, 0
    %1250 = vmatprep.subr.bf16.mxu0 0
    %1251 = vmatpush1.bf16.xpose.msra.mxu0 %v1248
    %1252 = vmatprep.subr.bf16.mxu0 0
    %1253 = vmatpush1.bf16.xpose.msra.mxu0 0
    %1254 = vmatprep.subr.bf16.mxu0 0
    %1255 = vmatpush1.bf16.xpose.msra.mxu0 0
    %1256 = vmatprep.subr.bf16.mxu0 0
    %1257 = vmatpush1.bf16.xpose.msra.mxu0 0
    %1258 = vmatprep.subr.bf16.mxu0 0
    %1259 = vmatpush1.bf16.xpose.msra.mxu0 0
    %1260 = vmatprep.subr.bf16.mxu0 0
    %1261 = vmatpush1.bf16.xpose.msra.mxu0 0
    %1262 = vmatprep.subr.bf16.mxu0 0
    %1263 = vmatpush1.bf16.xpose.msra.mxu0 0
    %1264 = vmatprep.subr.bf16.mxu0 0
    %1265 = vmatpush1.bf16.xpose.msra.mxu0 0
    %1266 = vmatprep.subr.bf16.mxu0 0
    %1267 = vmatpush1.bf16.xpose.msra.mxu0 0
    %1268 = vmatprep.subr.bf16.mxu0 0
    %1269 = vmatpush1.bf16.xpose.msra.mxu0 0
    %1270 = vmatprep.subr.bf16.mxu0 0
    %1271 = vmatpush1.bf16.xpose.msra.mxu0 0
    %1272 = vmatprep.subr.bf16.mxu0 0
    %1273 = vmatpush1.bf16.xpose.msra.mxu0 0
    %1274 = vmatprep.subr.bf16.mxu0 0
    %1275 = vmatpush1.bf16.xpose.msra.mxu0 0
    %1276 = vmatprep.subr.bf16.mxu0 0
    %1277 = vmatpush1.bf16.xpose.msra.mxu0 0
    %1278 = vmatprep.subr.bf16.mxu0 0
    %1279 = vmatpush1.bf16.xpose.msra.mxu0 0
    %1280 = vmatprep.subr.bf16.mxu0 0
    %1281 = vmatpush1.bf16.xpose.msra.mxu0 0
    %1282 = vmatprep.mubr.bf16.mxu0 0
    %1283 = vmatmul.mubr.bf16.gmra.mrb[0].mxu0 %v1245
    %v1284 = vpop.f32.mrb[0].mxu0
    %v1285 = vadd.f32 %v732, %v1284
    %v1286 = vpop.f32.mrb[0].mxu0
    %v1287 = vpop.f32.mrb[0].mxu0
    %v1288 = vpop.f32.mrb[0].mxu0
    %1289 = vdwg.mxu0
    %v1290 = vsel %vm738, %v1235, -inf
    %1291 = vmax.xlane.f32.xlu0 %v1290
    %v1292 = vpop.xlane.xlu0 %1291
    %v1293 = vsel %vm738, %v1285, -inf
    %1294 = vmax.xlane.f32.xlu0 %v1293
    %v1295 = vpop.xlane.xlu0 %1294
    %v1296 = vsub.f32 %v1235, %v1292
    %v1297 = vsub.f32 %v1285, %v1295
    %v1298 = vmul.f32 %v1296, 1.442695
    %v1299 = vpow.pop %v1298
    %v1300 = vmul.f32 %v1297, 1.442695
    %v1301 = vpow.pop %v1300
    %v1302 = vsel %vm738, %v1299, 0.0
    %1303 = vadd.xlane.f32.xlu0 %v1302
    %v1304 = vpop.xlane.xlu0 %1303
    %v1305 = vsel %vm738, %v1301, 0.0
    %1306 = vadd.xlane.f32.xlu0 %v1305
    %v1307 = vpop.xlane.xlu0 %1306
    %v1308 = vrcp.pop %v1304
    %v1309 = vrcp.pop %v1307
    %v1310 = vmul.f32 %v1299, %v1308
    %v1311 = vmul.f32 %v1301, %v1309
    %v1312 = vpack.c.bf16 %v1310, %v1310
    %v1313 = vpack.c.bf16 %v1311, %v1311
    %1314 = vrot.lane.b32.xlu0 %v721, 48
    %v1315 = vpop.permute.xlu0 %1314
    %v1317 = vsel %vm738, %v1312, 0
    %v1320 = vsel %vm863, %v1315, 0
    %1322 = vmatprep.subr.bf16.mxu0 0
    %1323 = vmatpush1.bf16.msra.mxu0 %v1320
    %1324 = vmatprep.subr.bf16.mxu0 0
    %1325 = vmatpush1.bf16.msra.mxu0 0
    %1326 = vmatprep.subr.bf16.mxu0 0
    %1327 = vmatpush1.bf16.msra.mxu0 0
    %1328 = vmatprep.subr.bf16.mxu0 0
    %1329 = vmatpush1.bf16.msra.mxu0 0
    %1330 = vmatprep.subr.bf16.mxu0 0
    %1331 = vmatpush1.bf16.msra.mxu0 0
    %1332 = vmatprep.subr.bf16.mxu0 0
    %1333 = vmatpush1.bf16.msra.mxu0 0
    %1334 = vmatprep.subr.bf16.mxu0 0
    %1335 = vmatpush1.bf16.msra.mxu0 0
    %1336 = vmatprep.subr.bf16.mxu0 0
    %1337 = vmatpush1.bf16.msra.mxu0 0
    %1338 = vmatprep.subr.bf16.mxu0 0
    %1339 = vmatpush1.bf16.msra.mxu0 0
    %1340 = vmatprep.subr.bf16.mxu0 0
    %1341 = vmatpush1.bf16.msra.mxu0 0
    %1342 = vmatprep.subr.bf16.mxu0 0
    %1343 = vmatpush1.bf16.msra.mxu0 0
    %1344 = vmatprep.subr.bf16.mxu0 0
    %1345 = vmatpush1.bf16.msra.mxu0 0
    %1346 = vmatprep.subr.bf16.mxu0 0
    %1347 = vmatpush1.bf16.msra.mxu0 0
    %1348 = vmatprep.subr.bf16.mxu0 0
    %1349 = vmatpush1.bf16.msra.mxu0 0
    %1350 = vmatprep.subr.bf16.mxu0 0
    %1351 = vmatpush1.bf16.msra.mxu0 0
    %1352 = vmatprep.subr.bf16.mxu0 0
    %1353 = vmatpush1.bf16.msra.mxu0 0
    %1354 = vmatprep.mubr.bf16.mxu0 0
    %1355 = vmatmul.mubr.bf16.gmra.mrb[0].mxu0 %v1317
    %v1356 = vpop.f32.mrb[0].mxu0
    %v1357 = vadd.f32 0.0, %v1356
    %v1358 = vpop.f32.mrb[0].mxu0
    %v1359 = vpop.f32.mrb[0].mxu0
    %v1360 = vpop.f32.mrb[0].mxu0
    %1361 = vdwg.mxu0
    %1362 = vrot.lane.b32.xlu0 %v722, 48
    %v1363 = vpop.permute.xlu0 %1362
    %v1365 = vsel %vm738, %v1313, 0
    %v1368 = vsel %vm863, %v1363, 0
    %1370 = vmatprep.subr.bf16.mxu0 0
    %1371 = vmatpush1.bf16.msra.mxu0 %v1368
    %1372 = vmatprep.subr.bf16.mxu0 0
    %1373 = vmatpush1.bf16.msra.mxu0 0
    %1374 = vmatprep.subr.bf16.mxu0 0
    %1375 = vmatpush1.bf16.msra.mxu0 0
    %1376 = vmatprep.subr.bf16.mxu0 0
    %1377 = vmatpush1.bf16.msra.mxu0 0
    %1378 = vmatprep.subr.bf16.mxu0 0
    %1379 = vmatpush1.bf16.msra.mxu0 0
    %1380 = vmatprep.subr.bf16.mxu0 0
    %1381 = vmatpush1.bf16.msra.mxu0 0
    %1382 = vmatprep.subr.bf16.mxu0 0
    %1383 = vmatpush1.bf16.msra.mxu0 0
    %1384 = vmatprep.subr.bf16.mxu0 0
    %1385 = vmatpush1.bf16.msra.mxu0 0
    %1386 = vmatprep.subr.bf16.mxu0 0
    %1387 = vmatpush1.bf16.msra.mxu0 0
    %1388 = vmatprep.subr.bf16.mxu0 0
    %1389 = vmatpush1.bf16.msra.mxu0 0
    %1390 = vmatprep.subr.bf16.mxu0 0
    %1391 = vmatpush1.bf16.msra.mxu0 0
    %1392 = vmatprep.subr.bf16.mxu0 0
    %1393 = vmatpush1.bf16.msra.mxu0 0
    %1394 = vmatprep.subr.bf16.mxu0 0
    %1395 = vmatpush1.bf16.msra.mxu0 0
    %1396 = vmatprep.subr.bf16.mxu0 0
    %1397 = vmatpush1.bf16.msra.mxu0 0
    %1398 = vmatprep.subr.bf16.mxu0 0
    %1399 = vmatpush1.bf16.msra.mxu0 0
    %1400 = vmatprep.subr.bf16.mxu0 0
    %1401 = vmatpush1.bf16.msra.mxu0 0
    %1402 = vmatprep.mubr.bf16.mxu0 0
    %1403 = vmatmul.mubr.bf16.gmra.mrb[0].mxu0 %v1365
    %v1404 = vpop.f32.mrb[0].mxu0
    %v1405 = vadd.f32 0.0, %v1404
    %v1406 = vpop.f32.mrb[0].mxu0
    %v1407 = vpop.f32.mrb[0].mxu0
    %v1408 = vpop.f32.mrb[0].mxu0
    %1409 = vdwg.mxu0
    %1412 = vrot.lane.b32.xlu0 %v1357, 16
    %v1413 = vpop.permute.xlu0 %1412
    %1414 = vrot.lane.b32.xlu0 %v1405, 16
    %v1415 = vpop.permute.xlu0 %1414
    %vm1418 = vcmask 195712
    %1419 = vst.msk [vmem:[#allocation2] sm:$0xff] %vm1418, %v1413
    %1420 = vst.msk [vmem:[#allocation2 + $0x8] sm:$0xff] %vm1418, %v1415
    %1421 = vrot.lane.b32.xlu0 %v719, 104
    %v1422 = vpop.permute.xlu0 %1421
    %1423 = vrot.lane.b32.xlu0 %v721, 72
    %v1424 = vpop.permute.xlu0 %1423
    %v1426 = vsel %vm738, %v1422, 0
    %v1429 = vsel %vm738, %v1424, 0
    %1431 = vmatprep.subr.bf16.mxu0 0
    %1432 = vmatpush1.bf16.xpose.msra.mxu0 %v1429
    %1433 = vmatprep.subr.bf16.mxu0 0
    %1434 = vmatpush1.bf16.xpose.msra.mxu0 0
    %1435 = vmatprep.subr.bf16.mxu0 0
    %1436 = vmatpush1.bf16.xpose.msra.mxu0 0
    %1437 = vmatprep.subr.bf16.mxu0 0
    %1438 = vmatpush1.bf16.xpose.msra.mxu0 0
    %1439 = vmatprep.subr.bf16.mxu0 0
    %1440 = vmatpush1.bf16.xpose.msra.mxu0 0
    %1441 = vmatprep.subr.bf16.mxu0 0
    %1442 = vmatpush1.bf16.xpose.msra.mxu0 0
    %1443 = vmatprep.subr.bf16.mxu0 0
    %1444 = vmatpush1.bf16.xpose.msra.mxu0 0
    %1445 = vmatprep.subr.bf16.mxu0 0
    %1446 = vmatpush1.bf16.xpose.msra.mxu0 0
    %1447 = vmatprep.subr.bf16.mxu0 0
    %1448 = vmatpush1.bf16.xpose.msra.mxu0 0
    %1449 = vmatprep.subr.bf16.mxu0 0
    %1450 = vmatpush1.bf16.xpose.msra.mxu0 0
    %1451 = vmatprep.subr.bf16.mxu0 0
    %1452 = vmatpush1.bf16.xpose.msra.mxu0 0
    %1453 = vmatprep.subr.bf16.mxu0 0
    %1454 = vmatpush1.bf16.xpose.msra.mxu0 0
    %1455 = vmatprep.subr.bf16.mxu0 0
    %1456 = vmatpush1.bf16.xpose.msra.mxu0 0
    %1457 = vmatprep.subr.bf16.mxu0 0
    %1458 = vmatpush1.bf16.xpose.msra.mxu0 0
    %1459 = vmatprep.subr.bf16.mxu0 0
    %1460 = vmatpush1.bf16.xpose.msra.mxu0 0
    %1461 = vmatprep.subr.bf16.mxu0 0
    %1462 = vmatpush1.bf16.xpose.msra.mxu0 0
    %1463 = vmatprep.mubr.bf16.mxu0 0
    %1464 = vmatmul.mubr.bf16.gmra.mrb[0].mxu0 %v1426
    %v1465 = vpop.f32.mrb[0].mxu0
    %v1466 = vadd.f32 %v728, %v1465
    %v1467 = vpop.f32.mrb[0].mxu0
    %v1468 = vpop.f32.mrb[0].mxu0
    %v1469 = vpop.f32.mrb[0].mxu0
    %1470 = vdwg.mxu0
    %1471 = vrot.lane.b32.xlu0 %v720, 104
    %v1472 = vpop.permute.xlu0 %1471
    %1473 = vrot.lane.b32.xlu0 %v722, 72
    %v1474 = vpop.permute.xlu0 %1473
    %v1476 = vsel %vm738, %v1472, 0
    %v1479 = vsel %vm738, %v1474, 0
    %1481 = vmatprep.subr.bf16.mxu0 0
    %1482 = vmatpush1.bf16.xpose.msra.mxu0 %v1479
    %1483 = vmatprep.subr.bf16.mxu0 0
    %1484 = vmatpush1.bf16.xpose.msra.mxu0 0
    %1485 = vmatprep.subr.bf16.mxu0 0
    %1486 = vmatpush1.bf16.xpose.msra.mxu0 0
    %1487 = vmatprep.subr.bf16.mxu0 0
    %1488 = vmatpush1.bf16.xpose.msra.mxu0 0
    %1489 = vmatprep.subr.bf16.mxu0 0
    %1490 = vmatpush1.bf16.xpose.msra.mxu0 0
    %1491 = vmatprep.subr.bf16.mxu0 0
    %1492 = vmatpush1.bf16.xpose.msra.mxu0 0
    %1493 = vmatprep.subr.bf16.mxu0 0
    %1494 = vmatpush1.bf16.xpose.msra.mxu0 0
    %1495 = vmatprep.subr.bf16.mxu0 0
    %1496 = vmatpush1.bf16.xpose.msra.mxu0 0
    %1497 = vmatprep.subr.bf16.mxu0 0
    %1498 = vmatpush1.bf16.xpose.msra.mxu0 0
    %1499 = vmatprep.subr.bf16.mxu0 0
    %1500 = vmatpush1.bf16.xpose.msra.mxu0 0
    %1501 = vmatprep.subr.bf16.mxu0 0
    %1502 = vmatpush1.bf16.xpose.msra.mxu0 0
    %1503 = vmatprep.subr.bf16.mxu0 0
    %1504 = vmatpush1.bf16.xpose.msra.mxu0 0
    %1505 = vmatprep.subr.bf16.mxu0 0
    %1506 = vmatpush1.bf16.xpose.msra.mxu0 0
    %1507 = vmatprep.subr.bf16.mxu0 0
    %1508 = vmatpush1.bf16.xpose.msra.mxu0 0
    %1509 = vmatprep.subr.bf16.mxu0 0
    %1510 = vmatpush1.bf16.xpose.msra.mxu0 0
    %1511 = vmatprep.subr.bf16.mxu0 0
    %1512 = vmatpush1.bf16.xpose.msra.mxu0 0
    %1513 = vmatprep.mubr.bf16.mxu0 0
    %1514 = vmatmul.mubr.bf16.gmra.mrb[0].mxu0 %v1476
    %v1515 = vpop.f32.mrb[0].mxu0
    %v1516 = vadd.f32 %v732, %v1515
    %v1517 = vpop.f32.mrb[0].mxu0
    %v1518 = vpop.f32.mrb[0].mxu0
    %v1519 = vpop.f32.mrb[0].mxu0
    %1520 = vdwg.mxu0
    %v1521 = vsel %vm738, %v1466, -inf
    %1522 = vmax.xlane.f32.xlu0 %v1521
    %v1523 = vpop.xlane.xlu0 %1522
    %v1524 = vsel %vm738, %v1516, -inf
    %1525 = vmax.xlane.f32.xlu0 %v1524
    %v1526 = vpop.xlane.xlu0 %1525
    %v1527 = vsub.f32 %v1466, %v1523
    %v1528 = vsub.f32 %v1516, %v1526
    %v1529 = vmul.f32 %v1527, 1.442695
    %v1530 = vpow.pop %v1529
    %v1531 = vmul.f32 %v1528, 1.442695
    %v1532 = vpow.pop %v1531
    %v1533 = vsel %vm738, %v1530, 0.0
    %1534 = vadd.xlane.f32.xlu0 %v1533
    %v1535 = vpop.xlane.xlu0 %1534
    %v1536 = vsel %vm738, %v1532, 0.0
    %1537 = vadd.xlane.f32.xlu0 %v1536
    %v1538 = vpop.xlane.xlu0 %1537
    %v1539 = vrcp.pop %v1535
    %v1540 = vrcp.pop %v1538
    %v1541 = vmul.f32 %v1530, %v1539
    %v1542 = vmul.f32 %v1532, %v1540
    %v1543 = vpack.c.bf16 %v1541, %v1541
    %v1544 = vpack.c.bf16 %v1542, %v1542
    %1545 = vrot.lane.b32.xlu0 %v721, 40
    %v1546 = vpop.permute.xlu0 %1545
    %v1548 = vsel %vm738, %v1543, 0
    %v1551 = vsel %vm863, %v1546, 0
    %1553 = vmatprep.subr.bf16.mxu0 0
    %1554 = vmatpush1.bf16.msra.mxu0 %v1551
    %1555 = vmatprep.subr.bf16.mxu0 0
    %1556 = vmatpush1.bf16.msra.mxu0 0
    %1557 = vmatprep.subr.bf16.mxu0 0
    %1558 = vmatpush1.bf16.msra.mxu0 0
    %1559 = vmatprep.subr.bf16.mxu0 0
    %1560 = vmatpush1.bf16.msra.mxu0 0
    %1561 = vmatprep.subr.bf16.mxu0 0
    %1562 = vmatpush1.bf16.msra.mxu0 0
    %1563 = vmatprep.subr.bf16.mxu0 0
    %1564 = vmatpush1.bf16.msra.mxu0 0
    %1565 = vmatprep.subr.bf16.mxu0 0
    %1566 = vmatpush1.bf16.msra.mxu0 0
    %1567 = vmatprep.subr.bf16.mxu0 0
    %1568 = vmatpush1.bf16.msra.mxu0 0
    %1569 = vmatprep.subr.bf16.mxu0 0
    %1570 = vmatpush1.bf16.msra.mxu0 0
    %1571 = vmatprep.subr.bf16.mxu0 0
    %1572 = vmatpush1.bf16.msra.mxu0 0
    %1573 = vmatprep.subr.bf16.mxu0 0
    %1574 = vmatpush1.bf16.msra.mxu0 0
    %1575 = vmatprep.subr.bf16.mxu0 0
    %1576 = vmatpush1.bf16.msra.mxu0 0
    %1577 = vmatprep.subr.bf16.mxu0 0
    %1578 = vmatpush1.bf16.msra.mxu0 0
    %1579 = vmatprep.subr.bf16.mxu0 0
    %1580 = vmatpush1.bf16.msra.mxu0 0
    %1581 = vmatprep.subr.bf16.mxu0 0
    %1582 = vmatpush1.bf16.msra.mxu0 0
    %1583 = vmatprep.subr.bf16.mxu0 0
    %1584 = vmatpush1.bf16.msra.mxu0 0
    %1585 = vmatprep.mubr.bf16.mxu0 0
    %1586 = vmatmul.mubr.bf16.gmra.mrb[0].mxu0 %v1548
    %v1587 = vpop.f32.mrb[0].mxu0
    %v1588 = vadd.f32 0.0, %v1587
    %v1589 = vpop.f32.mrb[0].mxu0
    %v1590 = vpop.f32.mrb[0].mxu0
    %v1591 = vpop.f32.mrb[0].mxu0
    %1592 = vdwg.mxu0
    %1593 = vrot.lane.b32.xlu0 %v722, 40
    %v1594 = vpop.permute.xlu0 %1593
    %v1596 = vsel %vm738, %v1544, 0
    %v1599 = vsel %vm863, %v1594, 0
    %1601 = vmatprep.subr.bf16.mxu0 0
    %1602 = vmatpush1.bf16.msra.mxu0 %v1599
    %1603 = vmatprep.subr.bf16.mxu0 0
    %1604 = vmatpush1.bf16.msra.mxu0 0
    %1605 = vmatprep.subr.bf16.mxu0 0
    %1606 = vmatpush1.bf16.msra.mxu0 0
    %1607 = vmatprep.subr.bf16.mxu0 0
    %1608 = vmatpush1.bf16.msra.mxu0 0
    %1609 = vmatprep.subr.bf16.mxu0 0
    %1610 = vmatpush1.bf16.msra.mxu0 0
    %1611 = vmatprep.subr.bf16.mxu0 0
    %1612 = vmatpush1.bf16.msra.mxu0 0
    %1613 = vmatprep.subr.bf16.mxu0 0
    %1614 = vmatpush1.bf16.msra.mxu0 0
    %1615 = vmatprep.subr.bf16.mxu0 0
    %1616 = vmatpush1.bf16.msra.mxu0 0
    %1617 = vmatprep.subr.bf16.mxu0 0
    %1618 = vmatpush1.bf16.msra.mxu0 0
    %1619 = vmatprep.subr.bf16.mxu0 0
    %1620 = vmatpush1.bf16.msra.mxu0 0
    %1621 = vmatprep.subr.bf16.mxu0 0
    %1622 = vmatpush1.bf16.msra.mxu0 0
    %1623 = vmatprep.subr.bf16.mxu0 0
    %1624 = vmatpush1.bf16.msra.mxu0 0
    %1625 = vmatprep.subr.bf16.mxu0 0
    %1626 = vmatpush1.bf16.msra.mxu0 0
    %1627 = vmatprep.subr.bf16.mxu0 0
    %1628 = vmatpush1.bf16.msra.mxu0 0
    %1629 = vmatprep.subr.bf16.mxu0 0
    %1630 = vmatpush1.bf16.msra.mxu0 0
    %1631 = vmatprep.subr.bf16.mxu0 0
    %1632 = vmatpush1.bf16.msra.mxu0 0
    %1633 = vmatprep.mubr.bf16.mxu0 0
    %1634 = vmatmul.mubr.bf16.gmra.mrb[0].mxu0 %v1596
    %v1635 = vpop.f32.mrb[0].mxu0
    %v1636 = vadd.f32 0.0, %v1635
    %v1637 = vpop.f32.mrb[0].mxu0
    %v1638 = vpop.f32.mrb[0].mxu0
    %v1639 = vpop.f32.mrb[0].mxu0
    %1640 = vdwg.mxu0
    %1643 = vrot.lane.b32.xlu0 %v1588, 24
    %v1644 = vpop.permute.xlu0 %1643
    %1645 = vrot.lane.b32.xlu0 %v1636, 24
    %v1646 = vpop.permute.xlu0 %1645
    %vm1649 = vcmask 261312
    %1650 = vst.msk [vmem:[#allocation2] sm:$0xff] %vm1649, %v1644
    %1651 = vst.msk [vmem:[#allocation2 + $0x8] sm:$0xff] %vm1649, %v1646
    %v1652 = vld [vmem:[#allocation2] sm:$0xff]
    %v1653 = vld [vmem:[#allocation2 + $0x8] sm:$0xff]
    %v1654 = vpack.c.bf16 %v1653, %v1652
    %v1655 = vld [vmem:[%s16] sm:$0xf]
    %v1656 = vld [vmem:[%s16 + $0x4] sm:$0xf]
    %v1657 = vld [vmem:[%s16 + $0x8] sm:$0xf]
    %v1658 = vld [vmem:[%s16 + $0xc] sm:$0xf]
    %v1663 = vunpack.c.l.b16 %v1655
    %v1664 = vunpack.c.l.b16 %v1656
    %v1665 = vunpack.c.l.b16 %v1657
    %v1666 = vunpack.c.l.b16 %v1658
    %v1667 = vpack.c.b16 %v1664, %v1663
    %v1668 = vpack.c.b16 %v1666, %v1665
    %v1672 = vsel %vm110, %v1654, 0
    %1674 = vmatprep.subr.bf16.mxu0 0
    %1675 = vmatpush1.bf16.msra.mxu0 %v1667
    %1676 = vmatprep.subr.bf16.mxu0 0
    %1677 = vmatpush1.bf16.msra.mxu0 %v1668
    %1678 = vmatprep.subr.bf16.mxu0 0
    %1679 = vmatpush1.bf16.msra.mxu0 0
    %1680 = vmatprep.subr.bf16.mxu0 0
    %1681 = vmatpush1.bf16.msra.mxu0 0
    %1682 = vmatprep.subr.bf16.mxu0 0
    %1683 = vmatpush1.bf16.msra.mxu0 0
    %1684 = vmatprep.subr.bf16.mxu0 0
    %1685 = vmatpush1.bf16.msra.mxu0 0
    %1686 = vmatprep.subr.bf16.mxu0 0
    %1687 = vmatpush1.bf16.msra.mxu0 0
    %1688 = vmatprep.subr.bf16.mxu0 0
    %1689 = vmatpush1.bf16.msra.mxu0 0
    %1690 = vmatprep.subr.bf16.mxu0 0
    %1691 = vmatpush1.bf16.msra.mxu0 0
    %1692 = vmatprep.subr.bf16.mxu0 0
    %1693 = vmatpush1.bf16.msra.mxu0 0
    %1694 = vmatprep.subr.bf16.mxu0 0
    %1695 = vmatpush1.bf16.msra.mxu0 0
    %1696 = vmatprep.subr.bf16.mxu0 0
    %1697 = vmatpush1.bf16.msra.mxu0 0
    %1698 = vmatprep.subr.bf16.mxu0 0
    %1699 = vmatpush1.bf16.msra.mxu0 0
    %1700 = vmatprep.subr.bf16.mxu0 0
    %1701 = vmatpush1.bf16.msra.mxu0 0
    %1702 = vmatprep.subr.bf16.mxu0 0
    %1703 = vmatpush1.bf16.msra.mxu0 0
    %1704 = vmatprep.subr.bf16.mxu0 0
    %1705 = vmatpush1.bf16.msra.mxu0 0
    %1706 = vmatprep.mubr.bf16.mxu0 0
    %1707 = vmatmul.mubr.bf16.gmra.mrb[0].mxu0 %v1672
    %v1708 = vpop.f32.mrb[0].mxu0
    %v1709 = vadd.f32 0.0, %v1708
    %v1710 = vpop.f32.mrb[0].mxu0
    %v1711 = vpop.f32.mrb[0].mxu0
    %v1712 = vadd.f32 0.0, %v1711
    %v1713 = vpop.f32.mrb[0].mxu0
    %1714 = vdwg.mxu0
    %v1715 = vadd.f32 %v604, %v1709
    %v1716 = vadd.f32 %v605, %v1712
    %v1717 = vld [vmem:[%s17] sm:$0x1]
    %v1718 = vld [vmem:[%s18] sm:$0x1]
    %v1719 = vsel %vm110, %v1715, 0.0
    %1720 = vadd.xlane.f32.xlu0 %v1719
    %v1721 = vpop.xlane.xlu0 %1720
    %v1722 = vsel %vm110, %v1716, 0.0
    %1723 = vadd.xlane.f32.xlu0 %v1722
    %v1724 = vpop.xlane.xlu0 %1723
    %v1725 = vmul.f32 %v1721, %v117
    %v1726 = vmul.f32 %v1724, %v117
    %v1727 = vsub.f32 %v1715, %v1725
    %v1728 = vsub.f32 %v1716, %v1726
    %v1729 = vmul.f32 %v1727, %v1727
    %v1730 = vmul.f32 %v1728, %v1728
    %v1731 = vsel %vm110, %v1729, 0.0
    %1732 = vadd.xlane.f32.xlu0 %v1731
    %v1733 = vpop.xlane.xlu0 %1732
    %v1734 = vsel %vm110, %v1730, 0.0
    %1735 = vadd.xlane.f32.xlu0 %v1734
    %v1736 = vpop.xlane.xlu0 %1735
    %v1737 = vmul.f32 %v1733, %v117
    %v1738 = vmul.f32 %v1736, %v117
    %v1739 = vadd.f32 %v1737, 1e-05
    %v1740 = vadd.f32 %v1738, 1e-05
    %v1741 = vrsqrt.pop %v1739
    %v1742 = vrsqrt.pop %v1740
    %v1743 = vmul.f32 %v1727, %v1741
    %v1744 = vmul.f32 %v1728, %v1742
    %v1746 = vlaneseq
    %v1747 = vshrl.u32 %v1746, 7
    %v1748 = vsub.s32 0, %v1747
    %v1749 = vrot.slane %v1717, %v1748
    %v1751 = vmul.f32 %v1743, %v1749
    %v1752 = vmul.f32 %v1744, %v1749
    %v1754 = vlaneseq
    %v1755 = vshrl.u32 %v1754, 7
    %v1756 = vsub.s32 0, %v1755
    %v1757 = vrot.slane %v1718, %v1756
    %v1759 = vadd.f32 %v1751, %v1757
    %v1760 = vadd.f32 %v1752, %v1757
    %v1761 = vpack.c.bf16 %v1760, %v1759
    %v1762 = vld [vmem:[%s19] sm:$0xf]
    %v1763 = vld [vmem:[%s19 + $0x4] sm:$0xf]
    %v1764 = vld [vmem:[%s19 + $0x8] sm:$0xf]
    %v1765 = vld [vmem:[%s19 + $0xc] sm:$0xf]
    %v1766 = vld [vmem:[%s20] sm:$0x1]
    %v1768 = vlaneseq
    %v1769 = vshrl.u32 %v1768, 7
    %v1770 = vsub.s32 0, %v1769
    %v1771 = vrot.slane %v1766, %v1770
    %v1777 = vunpack.c.l.b16 %v1762
    %v1778 = vunpack.c.l.b16 %v1763
    %v1779 = vunpack.c.l.b16 %v1764
    %v1780 = vunpack.c.l.b16 %v1765
    %v1781 = vpack.c.b16 %v1778, %v1777
    %v1782 = vpack.c.b16 %v1780, %v1779
    %v1786 = vsel %vm110, %v1761, 0
    %1788 = vmatprep.subr.bf16.mxu0 0
    %1789 = vmatpush1.bf16.msra.mxu0 %v1781
    %1790 = vmatprep.subr.bf16.mxu0 0
    %1791 = vmatpush1.bf16.msra.mxu0 %v1782
    %1792 = vmatprep.subr.bf16.mxu0 0
    %1793 = vmatpush1.bf16.msra.mxu0 0
    %1794 = vmatprep.subr.bf16.mxu0 0
    %1795 = vmatpush1.bf16.msra.mxu0 0
    %1796 = vmatprep.subr.bf16.mxu0 0
    %1797 = vmatpush1.bf16.msra.mxu0 0
    %1798 = vmatprep.subr.bf16.mxu0 0
    %1799 = vmatpush1.bf16.msra.mxu0 0
    %1800 = vmatprep.subr.bf16.mxu0 0
    %1801 = vmatpush1.bf16.msra.mxu0 0
    %1802 = vmatprep.subr.bf16.mxu0 0
    %1803 = vmatpush1.bf16.msra.mxu0 0
    %1804 = vmatprep.subr.bf16.mxu0 0
    %1805 = vmatpush1.bf16.msra.mxu0 0
    %1806 = vmatprep.subr.bf16.mxu0 0
    %1807 = vmatpush1.bf16.msra.mxu0 0
    %1808 = vmatprep.subr.bf16.mxu0 0
    %1809 = vmatpush1.bf16.msra.mxu0 0
    %1810 = vmatprep.subr.bf16.mxu0 0
    %1811 = vmatpush1.bf16.msra.mxu0 0
    %1812 = vmatprep.subr.bf16.mxu0 0
    %1813 = vmatpush1.bf16.msra.mxu0 0
    %1814 = vmatprep.subr.bf16.mxu0 0
    %1815 = vmatpush1.bf16.msra.mxu0 0
    %1816 = vmatprep.subr.bf16.mxu0 0
    %1817 = vmatpush1.bf16.msra.mxu0 0
    %1818 = vmatprep.subr.bf16.mxu0 0
    %1819 = vmatpush1.bf16.msra.mxu0 0
    %1820 = vmatprep.mubr.bf16.mxu0 0
    %1821 = vmatmul.mubr.bf16.gmra.mrb[0].mxu0 %v1786
    %v1822 = vpop.f32.mrb[0].mxu0
    %v1823 = vadd.f32 %v1771, %v1822
    %v1824 = vpop.f32.mrb[0].mxu0
    %v1825 = vpop.f32.mrb[0].mxu0
    %v1826 = vadd.f32 %v1771, %v1825
    %v1827 = vpop.f32.mrb[0].mxu0
    %1828 = vdwg.mxu0
    %v1829 = vmax.f32 %v1823, 0.0
    %v1830 = vmax.f32 %v1826, 0.0
    %v1831 = vpack.c.bf16 %v1830, %v1829
    %v1832 = vld [vmem:[%s21] sm:$0xf]
    %v1833 = vld [vmem:[%s21 + $0x4] sm:$0xf]
    %v1834 = vld [vmem:[%s21 + $0x8] sm:$0xf]
    %v1835 = vld [vmem:[%s21 + $0xc] sm:$0xf]
    %v1836 = vld [vmem:[%s21 + $0x10] sm:$0xf]
    %v1837 = vld [vmem:[%s21 + $0x14] sm:$0xf]
    %v1838 = vld [vmem:[%s21 + $0x18] sm:$0xf]
    %v1839 = vld [vmem:[%s21 + $0x1c] sm:$0xf]
    %v1840 = vld [vmem:[%s22] sm:$0x1]
    %v1842 = vlaneseq
    %v1843 = vshrl.u32 %v1842, 7
    %v1844 = vsub.s32 0, %v1843
    %v1845 = vrot.slane %v1840, %v1844
    %v1855 = vunpack.c.l.b16 %v1832
    %v1856 = vunpack.c.l.b16 %v1833
    %v1857 = vunpack.c.l.b16 %v1834
    %v1858 = vunpack.c.l.b16 %v1835
    %v1859 = vunpack.c.l.b16 %v1836
    %v1860 = vunpack.c.l.b16 %v1837
    %v1861 = vunpack.c.l.b16 %v1838
    %v1862 = vunpack.c.l.b16 %v1839
    %v1863 = vpack.c.b16 %v1856, %v1855
    %v1864 = vpack.c.b16 %v1858, %v1857
    %v1865 = vpack.c.b16 %v1860, %v1859
    %v1866 = vpack.c.b16 %v1862, %v1861
    %vm1871 = vcmask 523264
    %v1873 = vsel %vm1871, %v1831, 0
    %1875 = vmatprep.subr.bf16.mxu0 0
    %1876 = vmatpush1.bf16.msra.mxu0 %v1863
    %1877 = vmatprep.subr.bf16.mxu0 0
    %1878 = vmatpush1.bf16.msra.mxu0 %v1864
    %1879 = vmatprep.subr.bf16.mxu0 0
    %1880 = vmatpush1.bf16.msra.mxu0 %v1865
    %1881 = vmatprep.subr.bf16.mxu0 0
    %1882 = vmatpush1.bf16.msra.mxu0 %v1866
    %1883 = vmatprep.subr.bf16.mxu0 0
    %1884 = vmatpush1.bf16.msra.mxu0 0
    %1885 = vmatprep.subr.bf16.mxu0 0
    %1886 = vmatpush1.bf16.msra.mxu0 0
    %1887 = vmatprep.subr.bf16.mxu0 0
    %1888 = vmatpush1.bf16.msra.mxu0 0
    %1889 = vmatprep.subr.bf16.mxu0 0
    %1890 = vmatpush1.bf16.msra.mxu0 0
    %1891 = vmatprep.subr.bf16.mxu0 0
    %1892 = vmatpush1.bf16.msra.mxu0 0
    %1893 = vmatprep.subr.bf16.mxu0 0
    %1894 = vmatpush1.bf16.msra.mxu0 0
    %1895 = vmatprep.subr.bf16.mxu0 0
    %1896 = vmatpush1.bf16.msra.mxu0 0
    %1897 = vmatprep.subr.bf16.mxu0 0
    %1898 = vmatpush1.bf16.msra.mxu0 0
    %1899 = vmatprep.subr.bf16.mxu0 0
    %1900 = vmatpush1.bf16.msra.mxu0 0
    %1901 = vmatprep.subr.bf16.mxu0 0
    %1902 = vmatpush1.bf16.msra.mxu0 0
    %1903 = vmatprep.subr.bf16.mxu0 0
    %1904 = vmatpush1.bf16.msra.mxu0 0
    %1905 = vmatprep.subr.bf16.mxu0 0
    %1906 = vmatpush1.bf16.msra.mxu0 0
    %1907 = vmatprep.mubr.bf16.mxu0 0
    %1908 = vmatmul.mubr.bf16.gmra.mrb[0].mxu0 %v1873
    %v1909 = vpop.f32.mrb[0].mxu0
    %v1910 = vadd.f32 %v1845, %v1909
    %v1911 = vpop.f32.mrb[0].mxu0
    %v1912 = vpop.f32.mrb[0].mxu0
    %v1913 = vadd.f32 %v1845, %v1912
    %v1914 = vpop.f32.mrb[0].mxu0
    %1915 = vdwg.mxu0
    %v1916 = vadd.f32 %v1715, %v1910
    %v1917 = vadd.f32 %v1716, %v1913
    %1918 = vst.msk [vmem:[#allocation3] sm:$0xff] %vm110, %v1916
    %1919 = vst.msk [vmem:[#allocation3 + $0x8] sm:$0xff] %vm110, %v1917
    // Predicated region
    $region94: #{transformer_encoder.1} parent=1 // pred_check
      _
    $region95: #{transformer_encoder.1} parent=1 // pred_check_branch
      %1921 = sbr.rel (0) target = $region97
    $region96: #{transformer_encoder.1} parent=1 // pred_region
      %s1923 = ssub.s32 256, 256
      %1924 = vsyncadd [#allocation4], %s1923
      %s1925 = sshll.u32 [#allocation3], 4
      %s1926 = int_to_ptr.vmem [resolvable:$true] %s1925
      %1931 = dma.vmem_to_hbm [thread:$0]  %s1926, 256, %s23, [#allocation4], 128, 128, 8
    $region97: #{transformer_encoder.1} parent=1 // pred_fallthru
      _
    // Predicated region
    $region98: #{transformer_encoder.1} parent=1 // pred_check
      _
    $region99: #{transformer_encoder.1} parent=1 // pred_check_branch
      %1933 = sbr.rel (0) target = $region101
    $region100: #{transformer_encoder.1} parent=1 // pred_region
      %1934 = dma.done [#allocation4], 256
    $region101: #{transformer_encoder.1} parent=1 // pred_fallthru
      _
    %1935 = vsyncpa [#allocation4], 1

</llo_original>
